<compile_context>
chip_gen: v7x
topology: tpu7x:2x2x1
jax: 0.10.0
libtpu: 0.0.40
codegen_flags: <defaults>
</compile_context>

<pallas_src>
import functools

import jax
import jax.numpy as jnp
from jax import lax
from jax.experimental import pallas as pl
from jax.experimental.pallas import tpu as pltpu

Z_EMB_DIMS = [13, 4, 8, 6, 6, 8, 2, 4]      # z_embedding_dim
EF_EMB_DIMS = [6, 3, 3, 8]                  # edge_features_embedding_dim
Z_COLS_USED = (0, 2, 3, 4, 5, 6)            # columns used in forward()
MAX_Z_DIM = max(Z_EMB_DIMS)                 # 13
MAX_EF_DIM = max(EF_EMB_DIMS)               # 8
NZ = len(Z_COLS_USED)                       # 6
NEF = len(EF_EMB_DIMS)                      # 4
PADZ = 16                                   # per-table class pad (bf16 sublane pack)
PADE = 16


def _mol2graph_kernel(z_ref, pos_ref, ei_ref, efeat_ref, ztab_ref, etab_ref,
                      emb1_ref, ef_ref, *, ef_dim, rbound_upper, n_chunks):
    n_t = z_ref.shape[-1]          # flattened nodes per block
    ch = ei_ref.shape[-1]          # edge-chunk width

    # ---- fused node-embedding lookup: ONE compare + ONE cast + ONE MXU dot.
    # Each table owns a disjoint 16-row band of the contraction dim; the iota
    # runs 0..15 inside each band, so an out-of-range class id just yields a
    # zero row (no bleed into a neighbouring table).
    z6 = z_ref[0]                                                   # (6, Nt) i32
    sub_iota = lax.broadcasted_iota(jnp.int32, (NZ, PADZ, n_t), 1)
    ohT = (sub_iota == z6[:, None, :]).astype(ztab_ref.dtype)
    ohT = ohT.reshape(NZ * PADZ, n_t)                               # (96, Nt)
    emb1_ref[0] = jnp.dot(ztab_ref[...], ohT,
                          preferred_element_type=jnp.float32)       # (H, Nt)

    pos_t = pos_ref[0]                                              # (3, Nt) f32

    # ---- RBF constants, hoisted out of the chunk loop; centers kept as an
    # (F, 1) column so the (F, CH) broadcast happens inside the subtract.
    delta = rbound_upper / max(ef_dim - 1, 1)
    gamma = 0.5 / (delta * delta)
    centers = lax.broadcasted_iota(jnp.int32, (ef_dim, 1), 0).astype(
        jnp.float32) * delta                                        # (F, 1)

    # ---- per-edge-chunk work: bounds the O(Nt*CH) incidence temporary.
    @pl.loop(0, n_chunks)
    def _(c):
        # fused edge-categorical embedding lookup (one compare, one MXU dot)
        ef4 = efeat_ref[0, c, :, :]                                 # (4, CH) i32
        e_iota = lax.broadcasted_iota(jnp.int32, (NEF, PADE, ch), 1)
        eohT = (e_iota == ef4[:, None, :]).astype(etab_ref.dtype)
        eohT = eohT.reshape(NEF * PADE, ch)                         # (64, CH)
        ef_emb = jnp.dot(etab_ref[...], eohT,
                         preferred_element_type=jnp.float32)        # (F, CH)

        # edge vectors via a signed-incidence matmul (lane dim = CH)
        ei2 = ei_ref[0, c, :, :]                                    # (2, CH) i32
        node_iota = lax.broadcasted_iota(jnp.int32, (n_t, ch), 0)
        incT = ((node_iota == ei2[0:1]).astype(jnp.float32)
                - (node_iota == ei2[1:2]).astype(jnp.float32))      # (Nt, CH) +/-1
        ev = jnp.dot(pos_t, incT,
                     preferred_element_type=jnp.float32)            # (3, CH)
        sq = ev * ev
        el = jnp.sqrt(sq[0:1] + sq[1:2] + sq[2:3])                  # (1, CH)

        # Gaussian-smearing RBF over [0, rbound_upper]
        # TODO(synk): rbf_class_mapping[rbf] is not defined in the provided
        # source; a deterministic Gaussian smearing is used as a stand-in.
        diff = el - centers                                         # (F, CH)
        ef_ref[0, c, :, :] = jnp.exp(-gamma * diff * diff) + ef_emb


def _choose_block_b(N, E, max_nt=2048, max_et=4096, min_lanes=512):
    """Smallest molecules-per-block whose flattened node/edge widths are
    128-aligned (unmasked vst) and >= ~512 lanes (amortizes the ~0.35 us
    per-grid-step overhead). Kept small: total incidence work grows linearly
    with the block size."""
    best_aligned = None
    first_wide = None
    largest = 1
    bt = 1
    while bt * N <= max_nt and bt * E <= max_et:
        nt, et = bt * N, bt * E
        largest = bt
        aligned = (nt % 128 == 0) and (et % 128 == 0)
        wide = (nt >= min_lanes) and (et >= min_lanes)
        if aligned and wide:
            return bt
        if aligned:
            best_aligned = bt
        if wide and first_wide is None:
            first_wide = bt
        bt += 1
    if best_aligned is not None:
        return best_aligned
    if first_wide is not None:
        return first_wide
    return largest


def _choose_chunk(et, target=512):
    """Largest divisor of `et` that is <= target, preferring 128-aligned."""
    if et <= target:
        return et
    best, best_aligned = 1, None
    for c in range(1, target + 1):
        if et % c == 0:
            best = c
            if c % 128 == 0:
                best_aligned = c
    return best_aligned if best_aligned is not None else best


def sparse_mol2graph(z, pos, edge_index, edge_features, z_tables, e_tables,
                     *, ef_dim, rbound_upper, block_b=None):
    """z (B,N,8) int, pos (B,N,3) f32, edge_index (B,2,E) int,
    edge_features (B,E,4) int, z_tables (8,MAX_Z_DIM,H), e_tables (4,MAX_EF_DIM,F).
    Returns emb1 (B,N,H) f32 and ef (B,E,F) f32 (module layout)."""
    B, N = z.shape[0], z.shape[1]
    E = edge_index.shape[-1]
    H = z_tables.shape[-1]
    F = ef_dim
    f32 = jnp.float32

    Bt = block_b if block_b is not None else _choose_block_b(N, E)
    # Pad the batch so it divides into blocks AND there are >= 2 grid steps
    # (the "parallel" batch axis can then shard across v7x's 2 TensorCores).
    G = max(2, -(-B // Bt))
    B_pad = G * Bt
    Nt, Et = Bt * N, Bt * E
    CH = _choose_chunk(Et)
    C = Et // CH

    z = z.astype(jnp.int32)
    edge_index = edge_index.astype(jnp.int32)
    edge_features = edge_features.astype(jnp.int32)
    pos = pos.astype(f32)
    if B_pad != B:
        pad = B_pad - B
        z = jnp.concatenate([z, jnp.zeros((pad, N, z.shape[-1]), jnp.int32)], 0)
        pos = jnp.concatenate([pos, jnp.zeros((pad, N, 3), f32)], 0)
        edge_index = jnp.concatenate(
            [edge_index, jnp.zeros((pad, 2, E), jnp.int32)], 0)
        edge_features = jnp.concatenate(
            [edge_features, jnp.zeros((pad, E, NEF), jnp.int32)], 0)

    # ---- feature-major ("transposed") inputs: long axis on the lane dimension
    z6 = z[..., list(Z_COLS_USED)]                                  # (B_pad, N, 6)
    z_t = z6.reshape(G, Bt, N, NZ).transpose(0, 3, 1, 2).reshape(G, NZ, Nt)
    pos_t = pos.reshape(G, Bt, N, 3).transpose(0, 3, 1, 2).reshape(G, 3, Nt)

    # block-local node ids: molecule m of a block owns rows [m*N, (m+1)*N)
    offs = ((jnp.arange(B_pad, dtype=jnp.int32) % Bt) * N)[:, None, None]
    ei_t = (edge_index + offs).reshape(G, Bt, 2, E).transpose(0, 2, 1, 3)
    ei_t = ei_t.reshape(G, 2, Et)
    ei_c = ei_t.reshape(G, 2, C, CH).transpose(0, 2, 1, 3)          # (G, C, 2, CH)
    ef_t = edge_features.reshape(G, Bt, E, NEF).transpose(0, 3, 1, 2)
    ef_t = ef_t.reshape(G, NEF, Et)
    ef_c = ef_t.reshape(G, NEF, C, CH).transpose(0, 2, 1, 3)        # (G, C, 4, CH)

    # ---- fused, zero-padded, transposed embedding tables (native dtype:
    # bf16 tables -> bf16 MXU fast path, f32 tables stay exact)
    ztab = jnp.zeros((NZ * PADZ, H), z_tables.dtype)
    for j, col in enumerate(Z_COLS_USED):
        d = Z_EMB_DIMS[col]
        ztab = ztab.at[j * PADZ:j * PADZ + d].set(z_tables[col, :d])
    ztabT = ztab.T                                                  # (H, 96)

    etab = jnp.zeros((NEF * PADE, F), e_tables.dtype)
    for j in range(NEF):
        d = EF_EMB_DIMS[j]
        etab = etab.at[j * PADE:j * PADE + d].set(e_tables[j, :d])
    etabT = etab.T                                                  # (F, 64)

    kernel = functools.partial(_mol2graph_kernel, ef_dim=F,
                               rbound_upper=float(rbound_upper), n_chunks=C)

    cost = pl.CostEstimate(
        flops=int(G * (2 * H * NZ * PADZ * Nt
                       + 2 * F * NEF * PADE * Et
                       + 2 * 3 * Nt * Et)),
        transcendentals=int(G * (F * Et + Et)),
        bytes_accessed=int(4 * (z_t.size + pos_t.size + ei_c.size + ef_c.size
                                + G * H * Nt + G * F * Et)
                           + 2 * (ztabT.size + etabT.size)),
    )

    emb1_t, ef_out = pl.pallas_call(
        kernel,
        out_shape=(
            jax.ShapeDtypeStruct((G, H, Nt), f32),
            jax.ShapeDtypeStruct((G, C, F, CH), f32),
        ),
        grid=(G,),
        in_specs=[
            pl.BlockSpec((1, NZ, Nt), lambda g: (g, 0, 0)),          # z (feature-major)
            pl.BlockSpec((1, 3, Nt), lambda g: (g, 0, 0)),           # pos
            pl.BlockSpec((1, C, 2, CH), lambda g: (g, 0, 0, 0)),     # edge_index (chunked)
            pl.BlockSpec((1, C, NEF, CH), lambda g: (g, 0, 0, 0)),   # edge_features (chunked)
            pl.BlockSpec((H, NZ * PADZ), lambda g: (0, 0)),          # fused z table^T
            pl.BlockSpec((F, NEF * PADE), lambda g: (0, 0)),         # fused ef table^T
        ],
        out_specs=[
            pl.BlockSpec((1, H, Nt), lambda g: (g, 0, 0)),
            pl.BlockSpec((1, C, F, CH), lambda g: (g, 0, 0, 0)),
        ],
        compiler_params=pltpu.CompilerParams(
            dimension_semantics=("parallel",),          # batch axis -> 2 TCs on v7x
            vmem_limit_bytes=48 * 1024 * 1024),         # safe on v5e/v6e/v7x
        cost_estimate=cost,
    )(z_t, pos_t, ei_c, ef_c, ztabT, etabT)

    # ---- layout plumbing back to the module's (B, N, H) / (B, E, F) layouts.
    # (Consumers that accept feature-major blocks should use emb1_t / ef_out
    #  directly and skip this extra HBM round trip.)
    emb1 = emb1_t.reshape(G, H, Bt, N).transpose(0, 2, 3, 1)
    emb1 = emb1.reshape(B_pad, N, H)[:B]
    ef = ef_out.transpose(0, 1, 3, 2).reshape(G, Bt, E, F)
    ef = ef.reshape(B_pad, E, F)[:B]
    return emb1, ef


def _reference(z, pos, edge_index, edge_features, z_tables, e_tables,
               ef_dim, rbound_upper):
    emb1 = z_tables[0][z[..., 0]].astype(jnp.float32)
    for i in (2, 3, 4, 5, 6):
        emb1 = emb1 + z_tables[i][z[..., i]].astype(jnp.float32)
    posu = jnp.take_along_axis(pos, edge_index[:, 0, :, None], axis=1)
    posv = jnp.take_along_axis(pos, edge_index[:, 1, :, None], axis=1)
    ev = posu - posv
    el = jnp.linalg.norm(ev, axis=-1, keepdims=True)
    delta = rbound_upper / max(ef_dim - 1, 1)
    gamma = 0.5 / (delta * delta)
    centers = jnp.arange(ef_dim, dtype=jnp.float32) * delta
    ef = jnp.exp(-gamma * (el - centers) ** 2)
    for i in range(4):
        ef = ef + e_tables[i][edge_features[..., i]].astype(jnp.float32)
    return emb1, ef


if __name__ == "__main__":
    B, N, E = 4, 32, 64          # batch, atoms, edges
    H, F = 32, 16                # z_hidden_dim, ef_dim
    RBOUND = 5.0                 # rbound_upper

    key = jax.random.PRNGKey(0)
    keys = jax.random.split(key, 16)

    # ----- deterministic inputs
    z = jnp.stack(
        [jax.random.randint(keys[i], (B, N), 0, d, dtype=jnp.int32)
         for i, d in enumerate(Z_EMB_DIMS)], axis=-1)                      # (B, N, 8)
    pos = 2.0 * jax.random.normal(keys[8], (B, N, 3), dtype=jnp.float32)   # (B, N, 3)
    edge_index = jax.random.randint(keys[9], (B, 2, E), 0, N,
                                    dtype=jnp.int32)                       # (B, 2, E)
    edge_features = jnp.stack(
        [jax.random.randint(keys[10 + i], (B, E), 0, d, dtype=jnp.int32)
         for i, d in enumerate(EF_EMB_DIMS)], axis=-1)                     # (B, E, 4)

    # ----- deterministic parameters: stacked, zero-padded embedding tables
    # (bf16 -> the kernel's embedding matmuls take the bf16 MXU path with f32
    #  accumulation; the reference indexes the same bf16 values)
    pkeys = jax.random.split(keys[14], 12)
    z_tables = jnp.zeros((8, MAX_Z_DIM, H), jnp.float32)
    for i, d in enumerate(Z_EMB_DIMS):
        z_tables = z_tables.at[i, :d, :].set(
            jax.random.normal(pkeys[i], (d, H), dtype=jnp.float32))
    e_tables = jnp.zeros((4, MAX_EF_DIM, F), jnp.float32)
    for i, d in enumerate(EF_EMB_DIMS):
        e_tables = e_tables.at[i, :d, :].set(
            jax.random.normal(pkeys[8 + i], (d, F), dtype=jnp.float32))
    z_tables = z_tables.astype(jnp.bfloat16)
    e_tables = e_tables.astype(jnp.bfloat16)

    emb1, ef = sparse_mol2graph(z, pos, edge_index, edge_features,
                                z_tables, e_tables,
                                ef_dim=F, rbound_upper=RBOUND)
    jax.block_until_ready((emb1, ef))

    emb1_ref, ef_ref = _reference(z, pos, edge_index, edge_features,
                                  z_tables, e_tables, F, RBOUND)
    assert emb1.shape == (B, N, H) and ef.shape == (B, E, F)
    assert jnp.allclose(emb1, emb1_ref, atol=1e-4, rtol=1e-4)
    assert jnp.allclose(ef, ef_ref, atol=1e-4, rtol=1e-4)

    print("KERNEL_OK")
</pallas_src>

<mosaic_0001>
module attributes {stable_mosaic.version = 11 : i64} {
  func.func @_mol2graph_kernel(%arg0: i32, %arg1: memref<1x6x512xi32, #tpu.memory_space<vmem>>, %arg2: memref<1x3x512xf32, #tpu.memory_space<vmem>>, %arg3: memref<1x2x2x512xi32, #tpu.memory_space<vmem>>, %arg4: memref<1x2x4x512xi32, #tpu.memory_space<vmem>>, %arg5: memref<32x96xbf16, #tpu.memory_space<vmem>>, %arg6: memref<16x64xbf16, #tpu.memory_space<vmem>>, %arg7: memref<1x32x512xf32, #tpu.memory_space<vmem>>, %arg8: memref<1x2x16x512xf32, #tpu.memory_space<vmem>>) attributes {dimension_semantics = [#tpu.dimension_semantics<parallel>], iteration_bounds = array<i64: 2>, scalar_prefetch = 0 : i64, scratch_operands = 0 : i64, tpu.core_type = #tpu.core_type<tc>, window_params = [{transform_indices = @transform_0, window_bounds = array<i64: 1, 6, 512>}, {transform_indices = @transform_1, window_bounds = array<i64: 1, 3, 512>}, {transform_indices = @transform_2, window_bounds = array<i64: 1, 2, 2, 512>}, {transform_indices = @transform_3, window_bounds = array<i64: 1, 2, 4, 512>}, {pipeline_mode = #tpu.pipeline_mode<synchronous>, transform_indices = @transform_4, window_bounds = array<i64: 32, 96>}, {pipeline_mode = #tpu.pipeline_mode<synchronous>, transform_indices = @transform_5, window_bounds = array<i64: 16, 64>}, {transform_indices = @transform_6, window_bounds = array<i64: 1, 32, 512>}, {transform_indices = @transform_7, window_bounds = array<i64: 1, 2, 16, 512>}]} {
    %c0 = arith.constant 0 : index
    %c0_0 = arith.constant 0 : index
    %c0_1 = arith.constant 0 : index
    %0 = vector.load %arg1[%c0, %c0_0, %c0_1] : memref<1x6x512xi32, #tpu.memory_space<vmem>>, vector<1x6x512xi32>
    %1 = vector.shape_cast %0 : vector<1x6x512xi32> to vector<6x512xi32>
    %2 = tpu.iota {dimensions = array<i32: 1>} : vector<6x16x512xi32>
    %3 = vector.shape_cast %1 : vector<6x512xi32> to vector<6x1x512xi32>
    %4 = vector.broadcast %3 : vector<6x1x512xi32> to vector<6x16x512xi32>
    %5 = arith.cmpi eq, %2, %4 : vector<6x16x512xi32>
    %6 = arith.extui %5 : vector<6x16x512xi1> to vector<6x16x512xi32>
    %7 = arith.sitofp %6 : vector<6x16x512xi32> to vector<6x16x512xf32>
    %8 = arith.truncf %7 : vector<6x16x512xf32> to vector<6x16x512xbf16>
    %9 = vector.shape_cast %8 : vector<6x16x512xbf16> to vector<96x512xbf16>
    %c0_2 = arith.constant 0 : index
    %c0_3 = arith.constant 0 : index
    %10 = vector.load %arg5[%c0_2, %c0_3] : memref<32x96xbf16, #tpu.memory_space<vmem>>, vector<32x96xbf16>
    %cst = arith.constant dense<0.000000e+00> : vector<32x512xf32>
    %11 = tpu.matmul %10, %9, %cst {dimension_numbers = #tpu.dot_dimension_numbers<[1], [0], [0], [1], [0, 0, 1, 1], [], []>} : vector<32x96xbf16>, vector<96x512xbf16>, vector<32x512xf32> -> vector<32x512xf32>
    %c0_4 = arith.constant 0 : index
    %c0_5 = arith.constant 0 : index
    %c0_6 = arith.constant 0 : index
    %12 = vector.load %arg7[%c0_4, %c0_5, %c0_6] : memref<1x32x512xf32, #tpu.memory_space<vmem>>, vector<1x32x512xf32>
    %13 = vector.shape_cast %12 : vector<1x32x512xf32> to vector<32x512xf32>
    %14 = vector.shape_cast %11 : vector<32x512xf32> to vector<1x32x512xf32>
    tpu.vector_store %arg7[%c0_4, %c0_5, %c0_6], %14 {strides = array<i32>} : memref<1x32x512xf32, #tpu.memory_space<vmem>>, vector<1x32x512xf32>,
    %c0_7 = arith.constant 0 : index
    %c0_8 = arith.constant 0 : index
    %c0_9 = arith.constant 0 : index
    %15 = vector.load %arg2[%c0_7, %c0_8, %c0_9] : memref<1x3x512xf32, #tpu.memory_space<vmem>>, vector<1x3x512xf32>
    %16 = vector.shape_cast %15 : vector<1x3x512xf32> to vector<3x512xf32>
    %17 = tpu.iota {dimensions = array<i32: 0>} : vector<16x1xi32>
    %18 = arith.sitofp %17 : vector<16x1xi32> to vector<16x1xf32>
    %cst_10 = arith.constant 0.333333343 : f32
    %19 = vector.broadcast %cst_10 : f32 to vector<16x1xf32>
    %20 = arith.mulf %18, %19 : vector<16x1xf32>
    %c0_i32 = arith.constant 0 : i32
    %c2_i32 = arith.constant 2 : i32
    %21 = arith.addi %c0_i32, %c2_i32 : i32
    %c1_i32 = arith.constant 1 : i32
    scf.for %arg9 = %c0_i32 to %21 step %c1_i32  : i32 {
      %c1_i32_12 = arith.constant 1 : i32
      %22 = arith.muli %arg9, %c1_i32_12 : i32
      %c0_i32_13 = arith.constant 0 : i32
      %23 = arith.addi %c0_i32_13, %22 : i32
      %c0_14 = arith.constant 0 : index
      %24 = arith.index_cast %23 : i32 to index
      %c0_15 = arith.constant 0 : index
      %c0_16 = arith.constant 0 : index
      %25 = vector.load %arg4[%c0_14, %24, %c0_15, %c0_16] : memref<1x2x4x512xi32, #tpu.memory_space<vmem>>, vector<1x1x4x512xi32>
      %26 = vector.shape_cast %25 : vector<1x1x4x512xi32> to vector<4x512xi32>
      %27 = tpu.iota {dimensions = array<i32: 1>} : vector<4x16x512xi32>
      %28 = vector.shape_cast %26 : vector<4x512xi32> to vector<4x1x512xi32>
      %29 = vector.broadcast %28 : vector<4x1x512xi32> to vector<4x16x512xi32>
      %30 = arith.cmpi eq, %27, %29 : vector<4x16x512xi32>
      %31 = arith.extui %30 : vector<4x16x512xi1> to vector<4x16x512xi32>
      %32 = arith.sitofp %31 : vector<4x16x512xi32> to vector<4x16x512xf32>
      %33 = arith.truncf %32 : vector<4x16x512xf32> to vector<4x16x512xbf16>
      %34 = vector.shape_cast %33 : vector<4x16x512xbf16> to vector<64x512xbf16>
      %c0_17 = arith.constant 0 : index
      %c0_18 = arith.constant 0 : index
      %35 = vector.load %arg6[%c0_17, %c0_18] : memref<16x64xbf16, #tpu.memory_space<vmem>>, vector<16x64xbf16>
      %cst_19 = arith.constant dense<0.000000e+00> : vector<16x512xf32>
      %36 = tpu.matmul %35, %34, %cst_19 {dimension_numbers = #tpu.dot_dimension_numbers<[1], [0], [0], [1], [0, 0, 1, 1], [], []>} : vector<16x64xbf16>, vector<64x512xbf16>, vector<16x512xf32> -> vector<16x512xf32>
      %c0_20 = arith.constant 0 : index
      %37 = arith.index_cast %23 : i32 to index
      %c0_21 = arith.constant 0 : index
      %c0_22 = arith.constant 0 : index
      %38 = vector.load %arg3[%c0_20, %37, %c0_21, %c0_22] : memref<1x2x2x512xi32, #tpu.memory_space<vmem>>, vector<1x1x2x512xi32>
      %39 = vector.shape_cast %38 : vector<1x1x2x512xi32> to vector<2x512xi32>
      %40 = tpu.iota {dimensions = array<i32: 0>} : vector<512x512xi32>
      %41 = vector.extract_strided_slice %39 {offsets = [0, 0], sizes = [1, 512], strides = [1, 1]} : vector<2x512xi32> to vector<1x512xi32>
      %42 = vector.broadcast %41 : vector<1x512xi32> to vector<512x512xi32>
      %43 = arith.cmpi eq, %40, %42 : vector<512x512xi32>
      %44 = arith.extui %43 : vector<512x512xi1> to vector<512x512xi32>
      %45 = arith.sitofp %44 : vector<512x512xi32> to vector<512x512xf32>
      %46 = vector.extract_strided_slice %39 {offsets = [1, 0], sizes = [1, 512], strides = [1, 1]} : vector<2x512xi32> to vector<1x512xi32>
      %47 = vector.broadcast %46 : vector<1x512xi32> to vector<512x512xi32>
      %48 = arith.cmpi eq, %40, %47 : vector<512x512xi32>
      %49 = arith.extui %48 : vector<512x512xi1> to vector<512x512xi32>
      %50 = arith.sitofp %49 : vector<512x512xi32> to vector<512x512xf32>
      %51 = arith.subf %45, %50 : vector<512x512xf32>
      %cst_23 = arith.constant dense<0.000000e+00> : vector<3x512xf32>
      %52 = tpu.matmul %16, %51, %cst_23 {dimension_numbers = #tpu.dot_dimension_numbers<[1], [0], [0], [1], [0, 0, 1, 1], [], []>} : vector<3x512xf32>, vector<512x512xf32>, vector<3x512xf32> -> vector<3x512xf32>
      %53 = arith.mulf %52, %52 : vector<3x512xf32>
      %54 = vector.extract_strided_slice %53 {offsets = [0, 0], sizes = [1, 512], strides = [1, 1]} : vector<3x512xf32> to vector<1x512xf32>
      %55 = vector.extract_strided_slice %53 {offsets = [1, 0], sizes = [1, 512], strides = [1, 1]} : vector<3x512xf32> to vector<1x512xf32>
      %56 = arith.addf %54, %55 : vector<1x512xf32>
      %57 = vector.extract_strided_slice %53 {offsets = [2, 0], sizes = [1, 512], strides = [1, 1]} : vector<3x512xf32> to vector<1x512xf32>
      %58 = arith.addf %56, %57 : vector<1x512xf32>
      %59 = math.sqrt %58 : vector<1x512xf32>
      %60 = vector.broadcast %59 : vector<1x512xf32> to vector<16x512xf32>
      %61 = vector.broadcast %20 : vector<16x1xf32> to vector<16x512xf32>
      %62 = arith.subf %60, %61 : vector<16x512xf32>
      %cst_24 = arith.constant -4.500000e+00 : f32
      %63 = vector.broadcast %cst_24 : f32 to vector<16x512xf32>
      %64 = arith.mulf %63, %62 : vector<16x512xf32>
      %65 = arith.mulf %64, %62 : vector<16x512xf32>
      %66 = math.exp %65 : vector<16x512xf32>
      %67 = arith.addf %66, %36 : vector<16x512xf32>
      %c0_25 = arith.constant 0 : index
      %68 = arith.index_cast %23 : i32 to index
      %c0_26 = arith.constant 0 : index
      %c0_27 = arith.constant 0 : index
      %69 = vector.load %arg8[%c0_25, %68, %c0_26, %c0_27] : memref<1x2x16x512xf32, #tpu.memory_space<vmem>>, vector<1x1x16x512xf32>
      %70 = vector.shape_cast %69 : vector<1x1x16x512xf32> to vector<16x512xf32>
      %71 = vector.shape_cast %67 : vector<16x512xf32> to vector<1x1x16x512xf32>
      tpu.vector_store %arg8[%c0_25, %68, %c0_26, %c0_27], %71 {strides = array<i32>} : memref<1x2x16x512xf32, #tpu.memory_space<vmem>>, vector<1x1x16x512xf32>,
    }
    %c2_i32_11 = arith.constant 2 : i32
    return
  }
  func.func @transform_0(%arg0: i32) -> (i32, i32, i32) {
    %c0_i32 = arith.constant 0 : i32
    %c0_i32_0 = arith.constant 0 : i32
    %c0_i32_1 = arith.constant 0 : i32
    return %arg0, %c0_i32, %c0_i32_0 : i32, i32, i32
  }
  func.func @transform_1(%arg0: i32) -> (i32, i32, i32) {
    %c0_i32 = arith.constant 0 : i32
    %c0_i32_0 = arith.constant 0 : i32
    %c0_i32_1 = arith.constant 0 : i32
    return %arg0, %c0_i32, %c0_i32_0 : i32, i32, i32
  }
  func.func @transform_2(%arg0: i32) -> (i32, i32, i32, i32) {
    %c0_i32 = arith.constant 0 : i32
    %c0_i32_0 = arith.constant 0 : i32
    %c0_i32_1 = arith.constant 0 : i32
    %c0_i32_2 = arith.constant 0 : i32
    return %arg0, %c0_i32, %c0_i32_0, %c0_i32_1 : i32, i32, i32, i32
  }
  func.func @transform_3(%arg0: i32) -> (i32, i32, i32, i32) {
    %c0_i32 = arith.constant 0 : i32
    %c0_i32_0 = arith.constant 0 : i32
    %c0_i32_1 = arith.constant 0 : i32
    %c0_i32_2 = arith.constant 0 : i32
    return %arg0, %c0_i32, %c0_i32_0, %c0_i32_1 : i32, i32, i32, i32
  }
  func.func @transform_4(%arg0: i32) -> (i32, i32) {
    %c0_i32 = arith.constant 0 : i32
    %c0_i32_0 = arith.constant 0 : i32
    %c0_i32_1 = arith.constant 0 : i32
    return %c0_i32, %c0_i32_0 : i32, i32
  }
  func.func @transform_5(%arg0: i32) -> (i32, i32) {
    %c0_i32 = arith.constant 0 : i32
    %c0_i32_0 = arith.constant 0 : i32
    %c0_i32_1 = arith.constant 0 : i32
    return %c0_i32, %c0_i32_0 : i32, i32
  }
  func.func @transform_6(%arg0: i32) -> (i32, i32, i32) {
    %c0_i32 = arith.constant 0 : i32
    %c0_i32_0 = arith.constant 0 : i32
    %c0_i32_1 = arith.constant 0 : i32
    return %arg0, %c0_i32, %c0_i32_0 : i32, i32, i32
  }
  func.func @transform_7(%arg0: i32) -> (i32, i32, i32, i32) {
    %c0_i32 = arith.constant 0 : i32
    %c0_i32_0 = arith.constant 0 : i32
    %c0_i32_1 = arith.constant 0 : i32
    %c0_i32_2 = arith.constant 0 : i32
    return %arg0, %c0_i32, %c0_i32_0, %c0_i32_1 : i32, i32, i32, i32
  }
}

</mosaic_0001>

<llo_original>
// kernel: tpu_custom_call.1
$region0: #{tpu_custom_call.1}
  #allocation0 [shape = 'u32[]', space=smem, size = 0x4, offset = 0x4, fixed_abs, tag = 'smem constant byte address 0x4 - core index']
  #allocation1 [shape = 'u32[144,128]{1,0:T(1,128)}', space=vmem, size = 0x12000, scoped, tag = 'internal scratch']
  %s0 = inlined_call_operand.vmem [shape: s32[2,6,512], index: 0, kind: input, shape index: {}]
  %s1 = inlined_call_operand.vmem [shape: f32[2,3,512], index: 1, kind: input, shape index: {}]
  %s2 = inlined_call_operand.vmem [shape: s32[2,2,2,512], index: 2, kind: input, shape index: {}]
  %s3 = inlined_call_operand.vmem [shape: s32[2,2,4,512], index: 3, kind: input, shape index: {}]
  %s4 = inlined_call_operand.vmem [shape: bf16[32,96], index: 4, kind: input, shape index: {}]
  %s5 = inlined_call_operand.vmem [shape: bf16[16,64], index: 5, kind: input, shape index: {}]
  %s6 = inlined_call_operand.hbm [shape: f32[2,32,512], index: 6, kind: output, shape index: {0}]
  %s7 = inlined_call_operand.hbm [shape: f32[2,2,16,512], index: 7, kind: output, shape index: {1}]
  %8 = xla_tuple %s6, %s7
  %s9 = sld [smem:[#allocation0]]
  $region72: #{tpu_custom_call.1} parent=0
    _
  %s11 = ssub.s32 1, %s9
  %s12 = scalar_select 0, %s11, %s9
  $region1: #{tpu_custom_call.1} parent=0
    #allocation2 [shape = 'u8[131072]{0}', space=vmem, size = 0x20000, scoped, tag = 'output window, operand 0']
    #allocation3 [shape = 's32[2]{0}', space=sflag, size = 0x8, scoped, tag = 'scoped memory for tpu_custom_call.1']
    #allocation4 [shape = 'u8[131072]{0}', space=vmem, size = 0x20000, scoped, tag = 'output window, operand 1']
    #allocation5 [shape = 's32[2]{0}', space=sflag, size = 0x8, scoped, tag = 'scoped memory for tpu_custom_call.1']
    %13 = vsyncpa [#allocation3], 0
    %s14 = scalar_lea.sflag [#allocation3], 1
    %15 = vsyncpa %s14, 0
    %16 = vsyncpa [#allocation5], 0
    %s17 = scalar_lea.sflag [#allocation5], 1
    %18 = vsyncpa %s17, 0
    loop: start=0, step=1, limit=4
    $region2: #{tpu_custom_call.1} parent=1 // loop_pre_header
      _
    $region3: #{tpu_custom_call.1} parent=1 // loop_header
      %s20 = sphi 0, %s24
      %p21 = scmp.ge.s32.totalorder %s20, 4
      %s30 = sphi 0, %s32
      %s33 = sphi 0, %s30
      %s34 = sphi 0, %s33
      %s50 = sphi 0, %s34
      %s56 = sphi 0, %s58
      %s59 = sphi 0, %s56
      %s60 = sphi 0, %s59
      %s76 = sphi 0, %s60
      %s82 = sphi 0, %s84
      %s85 = sphi 0, %s82
      %s86 = sphi 0, %s85
      %s102 = sphi 0, %s86
      %s108 = sphi 0, %s110
      %s111 = sphi 0, %s108
      %s112 = sphi 0, %s111
      %s128 = sphi 0, %s112
      %s132 = sphi 0, %s132
      %s134 = sphi 0, %s132
      %s135 = sphi 0, %s134
      %s149 = sphi 0, %s135
      %s153 = sphi 0, %s153
      %s155 = sphi 0, %s153
      %s156 = sphi 0, %s155
      %s170 = sphi 0, %s156
      %s176 = sphi 0, %s178
      %s179 = sphi 0, %s176
      %s180 = sphi 0, %s179
      %s196 = sphi 0, %s180
      %s202 = sphi 0, %s204
      %s205 = sphi 0, %s202
      %s206 = sphi 0, %s205
      %s222 = sphi 0, %s206
    $region4: #{tpu_custom_call.1} parent=1 // loop_header_branch
      %23 = sbr.rel (%p21) target = $region8
    $region5: #{tpu_custom_call.1} parent=1 // loop_body
      %s25 = ssub.s32 %s20, 1
      %s26 = ssub.s32 %s20, 2
      %s27 = sadd.s32 %s20, 1
      %s28 = ssub.s32 %s20, %s27
      %p29 = scmp.eq.s32.totalorder %s28, 0
      %s31 = sadd.s32 %s30, 1
      %s32 = scalar_select %p29, %s30, %s31
      %p35 = pneg %p29
      %p36 = scmp.eq.s32.totalorder %s20, 1
      %p37 = por %p35, %p36
      %p38 = scmp.ne.s32.totalorder %s30, %s33
      %p39 = scmp.eq.s32.totalorder %s20, 0
      %p40 = por %p38, %p39
      %p41 = scmp.ne.s32.totalorder %s30, %s33
      %p42 = scmp.eq.s32.totalorder %s25, 1
      %p43 = por %p41, %p42
      %p44 = scmp.ne.s32.totalorder %s33, %s34
      %p45 = scmp.eq.s32.totalorder %s25, 0
      %p46 = por %p44, %p45
      %p47 = scmp.ne.s32.totalorder %s33, %s34
      %p48 = scmp.eq.s32.totalorder %s26, 1
      %p49 = por %p47, %p48
      %p51 = scmp.ne.s32.totalorder %s34, %s50
      %p52 = scmp.eq.s32.totalorder %s26, 0
      %p53 = por %p51, %p52
      %s54 = ssub.s32 %s20, %s27
      %p55 = scmp.eq.s32.totalorder %s54, 0
      %s57 = sadd.s32 %s56, 1
      %s58 = scalar_select %p55, %s56, %s57
      %p61 = pneg %p55
      %p62 = scmp.eq.s32.totalorder %s20, 1
      %p63 = por %p61, %p62
      %p64 = scmp.ne.s32.totalorder %s56, %s59
      %p65 = scmp.eq.s32.totalorder %s20, 0
      %p66 = por %p64, %p65
      %p67 = scmp.ne.s32.totalorder %s56, %s59
      %p68 = scmp.eq.s32.totalorder %s25, 1
      %p69 = por %p67, %p68
      %p70 = scmp.ne.s32.totalorder %s59, %s60
      %p71 = scmp.eq.s32.totalorder %s25, 0
      %p72 = por %p70, %p71
      %p73 = scmp.ne.s32.totalorder %s59, %s60
      %p74 = scmp.eq.s32.totalorder %s26, 1
      %p75 = por %p73, %p74
      %p77 = scmp.ne.s32.totalorder %s60, %s76
      %p78 = scmp.eq.s32.totalorder %s26, 0
      %p79 = por %p77, %p78
      %s80 = ssub.s32 %s20, %s27
      %p81 = scmp.eq.s32.totalorder %s80, 0
      %s83 = sadd.s32 %s82, 1
      %s84 = scalar_select %p81, %s82, %s83
      %p87 = pneg %p81
      %p88 = scmp.eq.s32.totalorder %s20, 1
      %p89 = por %p87, %p88
      %p90 = scmp.ne.s32.totalorder %s82, %s85
      %p91 = scmp.eq.s32.totalorder %s20, 0
      %p92 = por %p90, %p91
      %p93 = scmp.ne.s32.totalorder %s82, %s85
      %p94 = scmp.eq.s32.totalorder %s25, 1
      %p95 = por %p93, %p94
      %p96 = scmp.ne.s32.totalorder %s85, %s86
      %p97 = scmp.eq.s32.totalorder %s25, 0
      %p98 = por %p96, %p97
      %p99 = scmp.ne.s32.totalorder %s85, %s86
      %p100 = scmp.eq.s32.totalorder %s26, 1
      %p101 = por %p99, %p100
      %p103 = scmp.ne.s32.totalorder %s86, %s102
      %p104 = scmp.eq.s32.totalorder %s26, 0
      %p105 = por %p103, %p104
      %s106 = ssub.s32 %s20, %s27
      %p107 = scmp.eq.s32.totalorder %s106, 0
      %s109 = sadd.s32 %s108, 1
      %s110 = scalar_select %p107, %s108, %s109
      %p113 = pneg %p107
      %p114 = scmp.eq.s32.totalorder %s20, 1
      %p115 = por %p113, %p114
      %p116 = scmp.ne.s32.totalorder %s108, %s111
      %p117 = scmp.eq.s32.totalorder %s20, 0
      %p118 = por %p116, %p117
      %p119 = scmp.ne.s32.totalorder %s108, %s111
      %p120 = scmp.eq.s32.totalorder %s25, 1
      %p121 = por %p119, %p120
      %p122 = scmp.ne.s32.totalorder %s111, %s112
      %p123 = scmp.eq.s32.totalorder %s25, 0
      %p124 = por %p122, %p123
      %p125 = scmp.ne.s32.totalorder %s111, %s112
      %p126 = scmp.eq.s32.totalorder %s26, 1
      %p127 = por %p125, %p126
      %p129 = scmp.ne.s32.totalorder %s112, %s128
      %p130 = scmp.eq.s32.totalorder %s26, 0
      %p131 = por %p129, %p130
      %s133 = sadd.s32 %s132, 1
      %p136 = scmp.eq.s32.totalorder %s20, 1
      %p137 = scmp.ne.s32.totalorder %s132, %s134
      %p138 = scmp.eq.s32.totalorder %s20, 0
      %p139 = por %p137, %p138
      %p140 = scmp.ne.s32.totalorder %s132, %s134
      %p141 = scmp.eq.s32.totalorder %s25, 1
      %p142 = por %p140, %p141
      %p143 = scmp.ne.s32.totalorder %s134, %s135
      %p144 = scmp.eq.s32.totalorder %s25, 0
      %p145 = por %p143, %p144
      %p146 = scmp.ne.s32.totalorder %s134, %s135
      %p147 = scmp.eq.s32.totalorder %s26, 1
      %p148 = por %p146, %p147
      %p150 = scmp.ne.s32.totalorder %s135, %s149
      %p151 = scmp.eq.s32.totalorder %s26, 0
      %p152 = por %p150, %p151
      %s154 = sadd.s32 %s153, 1
      %p157 = scmp.eq.s32.totalorder %s20, 1
      %p158 = scmp.ne.s32.totalorder %s153, %s155
      %p159 = scmp.eq.s32.totalorder %s20, 0
      %p160 = por %p158, %p159
      %p161 = scmp.ne.s32.totalorder %s153, %s155
      %p162 = scmp.eq.s32.totalorder %s25, 1
      %p163 = por %p161, %p162
      %p164 = scmp.ne.s32.totalorder %s155, %s156
      %p165 = scmp.eq.s32.totalorder %s25, 0
      %p166 = por %p164, %p165
      %p167 = scmp.ne.s32.totalorder %s155, %s156
      %p168 = scmp.eq.s32.totalorder %s26, 1
      %p169 = por %p167, %p168
      %p171 = scmp.ne.s32.totalorder %s156, %s170
      %p172 = scmp.eq.s32.totalorder %s26, 0
      %p173 = por %p171, %p172
      %s174 = ssub.s32 %s20, %s27
      %p175 = scmp.eq.s32.totalorder %s174, 0
      %s177 = sadd.s32 %s176, 1
      %s178 = scalar_select %p175, %s176, %s177
      %p181 = pneg %p175
      %p182 = scmp.eq.s32.totalorder %s20, 1
      %p183 = por %p181, %p182
      %p184 = scmp.ne.s32.totalorder %s176, %s179
      %p185 = scmp.eq.s32.totalorder %s20, 0
      %p186 = por %p184, %p185
      %p187 = scmp.ne.s32.totalorder %s176, %s179
      %p188 = scmp.eq.s32.totalorder %s25, 1
      %p189 = por %p187, %p188
      %p190 = scmp.ne.s32.totalorder %s179, %s180
      %p191 = scmp.eq.s32.totalorder %s25, 0
      %p192 = por %p190, %p191
      %p193 = scmp.ne.s32.totalorder %s179, %s180
      %p194 = scmp.eq.s32.totalorder %s26, 1
      %p195 = por %p193, %p194
      %p197 = scmp.ne.s32.totalorder %s180, %s196
      %p198 = scmp.eq.s32.totalorder %s26, 0
      %p199 = por %p197, %p198
      %s200 = ssub.s32 %s20, %s27
      %p201 = scmp.eq.s32.totalorder %s200, 0
      %s203 = sadd.s32 %s202, 1
      %s204 = scalar_select %p201, %s202, %s203
      %p207 = pneg %p201
      %p208 = scmp.eq.s32.totalorder %s20, 1
      %p209 = por %p207, %p208
      %p210 = scmp.ne.s32.totalorder %s202, %s205
      %p211 = scmp.eq.s32.totalorder %s20, 0
      %p212 = por %p210, %p211
      %p213 = scmp.ne.s32.totalorder %s202, %s205
      %p214 = scmp.eq.s32.totalorder %s25, 1
      %p215 = por %p213, %p214
      %p216 = scmp.ne.s32.totalorder %s205, %s206
      %p217 = scmp.eq.s32.totalorder %s25, 0
      %p218 = por %p216, %p217
      %p219 = scmp.ne.s32.totalorder %s205, %s206
      %p220 = scmp.eq.s32.totalorder %s26, 1
      %p221 = por %p219, %p220
      %p223 = scmp.ne.s32.totalorder %s206, %s222
      %p224 = scmp.eq.s32.totalorder %s26, 0
      %p225 = por %p223, %p224
      %p226 = scmp.le.s32.totalorder 1, %s20
      %p227 = scmp.lt.s32.totalorder %s20, 3
      %p228 = pnand %p226, %p227
      %p229 = pneg %p228
      // Predicated region
      $region9: #{tpu_custom_call.1} parent=5 // pred_check
        _
      $region10: #{tpu_custom_call.1} parent=5 // pred_check_branch
        %231 = sbr.rel (%p228) target = $region12
      $region11: #{tpu_custom_call.1} parent=5 // pred_region
        %s232 = ssub.s32 %s20, 1
        // Predicated region
        $region13: #{tpu_custom_call.1} parent=11 // pred_check
          %p233 = pneg %p145
        $region14: #{tpu_custom_call.1} parent=11 // pred_check_branch
          %235 = sbr.rel (%p233) target = $region16
        $region15: #{tpu_custom_call.1} parent=11 // pred_region
          _
        $region16: #{tpu_custom_call.1} parent=11 // pred_fallthru
          _
        // Predicated region
        $region17: #{tpu_custom_call.1} parent=11 // pred_check
          %p236 = pneg %p166
        $region18: #{tpu_custom_call.1} parent=11 // pred_check_branch
          %238 = sbr.rel (%p236) target = $region20
        $region19: #{tpu_custom_call.1} parent=11 // pred_region
          _
        $region20: #{tpu_custom_call.1} parent=11 // pred_fallthru
          _
      $region12: #{tpu_custom_call.1} parent=5 // pred_fallthru
        _
      %p239 = scmp.lt.s32.totalorder %s20, 2
      // Predicated region
      $region21: #{tpu_custom_call.1} parent=5 // pred_check
        %p240 = pneg %p239
      $region22: #{tpu_custom_call.1} parent=5 // pred_check_branch
        %242 = sbr.rel (%p240) target = $region24
      $region23: #{tpu_custom_call.1} parent=5 // pred_region
        // Predicated region
        $region25: #{tpu_custom_call.1} parent=23 // pred_check
          %p243 = pneg %p40
        $region26: #{tpu_custom_call.1} parent=23 // pred_check_branch
          %245 = sbr.rel (%p243) target = $region28
        $region27: #{tpu_custom_call.1} parent=23 // pred_region
          %p246 = scmp.lt.s32.totalorder %s20, 1
          %s247 = scalar_select %p246, %s20, 1
          %s248 = smul.addr %s247, 4
          %s249 = smul.addr %s248, 8
          %s250 = scalar_lea.vmem %s0, %s249
        $region28: #{tpu_custom_call.1} parent=23 // pred_fallthru
          _
        // Predicated region
        $region29: #{tpu_custom_call.1} parent=23 // pred_check
          %p251 = pneg %p66
        $region30: #{tpu_custom_call.1} parent=23 // pred_check_branch
          %253 = sbr.rel (%p251) target = $region32
        $region31: #{tpu_custom_call.1} parent=23 // pred_region
          %p254 = scmp.lt.s32.totalorder %s20, 1
          %s255 = scalar_select %p254, %s20, 1
          %s256 = smul.addr %s255, 4
          %s257 = smul.addr %s256, 4
          %s258 = scalar_lea.vmem %s1, %s257
        $region32: #{tpu_custom_call.1} parent=23 // pred_fallthru
          _
        // Predicated region
        $region33: #{tpu_custom_call.1} parent=23 // pred_check
          %p259 = pneg %p92
        $region34: #{tpu_custom_call.1} parent=23 // pred_check_branch
          %261 = sbr.rel (%p259) target = $region36
        $region35: #{tpu_custom_call.1} parent=23 // pred_region
          %p262 = scmp.lt.s32.totalorder %s20, 1
          %s263 = scalar_select %p262, %s20, 1
          %s264 = smul.addr %s263, 8
          %s265 = smul.addr %s264, 2
          %s266 = scalar_lea.vmem %s2, %s265
        $region36: #{tpu_custom_call.1} parent=23 // pred_fallthru
          _
        // Predicated region
        $region37: #{tpu_custom_call.1} parent=23 // pred_check
          %p267 = pneg %p118
        $region38: #{tpu_custom_call.1} parent=23 // pred_check_branch
          %269 = sbr.rel (%p267) target = $region40
        $region39: #{tpu_custom_call.1} parent=23 // pred_region
          %p270 = scmp.lt.s32.totalorder %s20, 1
          %s271 = scalar_select %p270, %s20, 1
          %s272 = smul.addr %s271, 8
          %s273 = smul.addr %s272, 4
          %s274 = scalar_lea.vmem %s3, %s273
        $region40: #{tpu_custom_call.1} parent=23 // pred_fallthru
          _
      $region24: #{tpu_custom_call.1} parent=5 // pred_fallthru
        _
      %p275 = scmp.le.s32.totalorder 1, %s20
      %p276 = scmp.lt.s32.totalorder %s20, 3
      %p277 = pnand %p275, %p276
      %p278 = pneg %p277
      // Predicated region
      $region41: #{tpu_custom_call.1} parent=5 // pred_check
        _
      $region42: #{tpu_custom_call.1} parent=5 // pred_check_branch
        %280 = sbr.rel (%p277) target = $region44
      $region43: #{tpu_custom_call.1} parent=5 // pred_region
        %s281 = ssub.s32 %s20, 1
        %p282 = scmp.lt.s32.totalorder %s25, 1
        %s283 = scalar_select %p282, %s25, 1
        %s284 = smul.addr %s283, 4
        %s285 = smul.addr %s284, 8
        %s286 = scalar_lea.vmem %s0, %s285
        %p287 = pneg %p46
        %p288 = pneg %p43
        %p289 = scmp.lt.s32.totalorder %s25, 1
        %s290 = scalar_select %p289, %s25, 1
        %s291 = smul.addr %s290, 4
        %s292 = smul.addr %s291, 4
        %s293 = scalar_lea.vmem %s1, %s292
        %p294 = pneg %p72
        %p295 = pneg %p69
        %p296 = scmp.lt.s32.totalorder %s25, 1
        %s297 = scalar_select %p296, %s25, 1
        %s298 = smul.addr %s297, 8
        %s299 = smul.addr %s298, 2
        %s300 = scalar_lea.vmem %s2, %s299
        %p301 = pneg %p98
        %p302 = pneg %p95
        %p303 = scmp.lt.s32.totalorder %s25, 1
        %s304 = scalar_select %p303, %s25, 1
        %s305 = smul.addr %s304, 8
        %s306 = smul.addr %s305, 4
        %s307 = scalar_lea.vmem %s3, %s306
        %p308 = pneg %p124
        %p309 = pneg %p121
        %p310 = pneg %p145
        %p311 = pneg %p142
        %p312 = pneg %p166
        %p313 = pneg %p163
        %p314 = pneg %p192
        %p315 = pneg %p189
        %s316 = sand.u32 %s179, 1
        %s317 = scalar_lea.sflag [#allocation3], %s316
        %s318 = sand.u32 %s179, 1
        %s319 = smul.addr %s318, 128
        %s320 = scalar_lea.vmem [#allocation2], %s319
        %p321 = pneg %p218
        %p322 = pneg %p215
        %s323 = sand.u32 %s205, 1
        %s324 = scalar_lea.sflag [#allocation5], %s323
        %s325 = sand.u32 %s205, 1
        %s326 = smul.addr %s325, 128
        %s327 = scalar_lea.vmem [#allocation4], %s326
        %p328 = scmp.lt.s32.totalorder %s25, 1
        %s329 = scalar_select %p328, %s25, 1
        %s330 = smul.addr %s329, 4
        %s331 = smul.addr %s330, 8
        %s332 = scalar_lea.vmem %s0, %s331
        %p333 = scmp.lt.s32.totalorder %s25, 1
        %s334 = scalar_select %p333, %s25, 1
        %s335 = smul.addr %s334, 4
        %s336 = smul.addr %s335, 4
        %s337 = scalar_lea.vmem %s1, %s336
        %p338 = scmp.lt.s32.totalorder %s25, 1
        %s339 = scalar_select %p338, %s25, 1
        %s340 = smul.addr %s339, 8
        %s341 = smul.addr %s340, 2
        %s342 = scalar_lea.vmem %s2, %s341
        %p343 = scmp.lt.s32.totalorder %s25, 1
        %s344 = scalar_select %p343, %s25, 1
        %s345 = smul.addr %s344, 8
        %s346 = smul.addr %s345, 4
        %s347 = scalar_lea.vmem %s3, %s346
        %v349 = vld [vmem:[%s332] sm:$0x3f]
        %v350 = vld [vmem:[%s332 + $0x8] sm:$0x3f]
        %v351 = vld [vmem:[%s332 + $0x10] sm:$0x3f]
        %v352 = vld [vmem:[%s332 + $0x18] sm:$0x3f]
        %v353 = vlaneseq
        %v354 = vshrl.u32 %v353, 7
        %v355 = vadd.s32 %v354, 8
        %v356 = vcombine.low %v349, %v350
        %v357 = vcombine.high %v349, %v350
        %v358 = vcombine.low %v351, %v352
        %v359 = vcombine.high %v351, %v352
        %v361 = vunpack.c.l.s4 1966171168
        %v362 = vunpack.c.0.s8 %v361
        %v363 = vlaneseq
        %v364 = vshrl.u32 %v363, 7
        %v365 = vsub.s32 %v362, %v364
        %v366 = vrot.slane %v356, %v365
        %v368 = vunpack.c.l.s4 1966171168
        %v369 = vunpack.c.0.s8 %v368
        %v370 = vlaneseq
        %v371 = vshrl.u32 %v370, 7
        %v372 = vsub.s32 %v369, %v371
        %v373 = vrot.slane %v357, %v372
        %v375 = vunpack.c.l.s4 1966171168
        %v376 = vunpack.c.0.s8 %v375
        %v377 = vlaneseq
        %v378 = vshrl.u32 %v377, 7
        %v379 = vsub.s32 %v376, %v378
        %v380 = vrot.slane %v358, %v379
        %v382 = vunpack.c.l.s4 1966171168
        %v383 = vunpack.c.0.s8 %v382
        %v384 = vlaneseq
        %v385 = vshrl.u32 %v384, 7
        %v386 = vsub.s32 %v383, %v385
        %v387 = vrot.slane %v359, %v386
        %v388 = vcombine.low %v366, %v380
        %v389 = vcombine.high %v366, %v380
        %v390 = vcombine.low %v373, %v387
        %v391 = vcombine.high %v373, %v387
        %v393 = vunpack.c.l.s4 1966171168
        %v394 = vunpack.c.0.s8 %v393
        %v395 = vlaneseq
        %v396 = vshrl.u32 %v395, 7
        %v397 = vsub.s32 %v394, %v396
        %v398 = vrot.slane %v388, %v397
        %v400 = vunpack.c.l.s4 1966171168
        %v401 = vunpack.c.0.s8 %v400
        %v402 = vlaneseq
        %v403 = vshrl.u32 %v402, 7
        %v404 = vsub.s32 %v401, %v403
        %v405 = vrot.slane %v390, %v404
        %v407 = vunpack.c.l.s4 1966171168
        %v408 = vunpack.c.0.s8 %v407
        %v409 = vlaneseq
        %v410 = vshrl.u32 %v409, 7
        %v411 = vsub.s32 %v408, %v410
        %v412 = vrot.slane %v389, %v411
        %v414 = vunpack.c.l.s4 1966171168
        %v415 = vunpack.c.0.s8 %v414
        %v416 = vlaneseq
        %v417 = vshrl.u32 %v416, 7
        %v418 = vsub.s32 %v415, %v417
        %v419 = vrot.slane %v391, %v418
        %v420 = vcombine.high %v398, %v398
        %v421 = vcombine.high %v412, %v412
        %v422 = vlaneseq
        %v423 = vshrl.u32 %v422, 7
        %v424 = vsub.s32 0, %v423
        %v425 = vrot.slane %v398, %v424
        %v426 = vlaneseq
        %v427 = vshrl.u32 %v426, 7
        %v428 = vsub.s32 1, %v427
        %v429 = vrot.slane %v398, %v428
        %v430 = vlaneseq
        %v431 = vshrl.u32 %v430, 7
        %v432 = vsub.s32 2, %v431
        %v433 = vrot.slane %v398, %v432
        %v434 = vlaneseq
        %v435 = vshrl.u32 %v434, 7
        %v436 = vsub.s32 3, %v435
        %v437 = vrot.slane %v398, %v436
        %v438 = vlaneseq
        %v439 = vshrl.u32 %v438, 7
        %v440 = vsub.s32 0, %v439
        %v441 = vrot.slane %v412, %v440
        %v442 = vlaneseq
        %v443 = vshrl.u32 %v442, 7
        %v444 = vsub.s32 1, %v443
        %v445 = vrot.slane %v412, %v444
        %v446 = vlaneseq
        %v447 = vshrl.u32 %v446, 7
        %v448 = vsub.s32 2, %v447
        %v449 = vrot.slane %v412, %v448
        %v450 = vlaneseq
        %v451 = vshrl.u32 %v450, 7
        %v452 = vsub.s32 3, %v451
        %v453 = vrot.slane %v412, %v452
        %v454 = vlaneseq
        %v455 = vshrl.u32 %v454, 7
        %v456 = vsub.s32 0, %v455
        %v457 = vrot.slane %v420, %v456
        %v458 = vlaneseq
        %v459 = vshrl.u32 %v458, 7
        %v460 = vsub.s32 1, %v459
        %v461 = vrot.slane %v420, %v460
        %v462 = vlaneseq
        %v463 = vshrl.u32 %v462, 7
        %v464 = vsub.s32 2, %v463
        %v465 = vrot.slane %v420, %v464
        %v466 = vlaneseq
        %v467 = vshrl.u32 %v466, 7
        %v468 = vsub.s32 3, %v467
        %v469 = vrot.slane %v420, %v468
        %v470 = vlaneseq
        %v471 = vshrl.u32 %v470, 7
        %v472 = vsub.s32 0, %v471
        %v473 = vrot.slane %v421, %v472
        %v474 = vlaneseq
        %v475 = vshrl.u32 %v474, 7
        %v476 = vsub.s32 1, %v475
        %v477 = vrot.slane %v421, %v476
        %v478 = vlaneseq
        %v479 = vshrl.u32 %v478, 7
        %v480 = vsub.s32 2, %v479
        %v481 = vrot.slane %v421, %v480
        %v482 = vlaneseq
        %v483 = vshrl.u32 %v482, 7
        %v484 = vsub.s32 3, %v483
        %v485 = vrot.slane %v421, %v484
        %v486 = vlaneseq
        %v487 = vshrl.u32 %v486, 7
        %v488 = vsub.s32 0, %v487
        %v489 = vrot.slane %v405, %v488
        %v490 = vlaneseq
        %v491 = vshrl.u32 %v490, 7
        %v492 = vsub.s32 1, %v491
        %v493 = vrot.slane %v405, %v492
        %v494 = vlaneseq
        %v495 = vshrl.u32 %v494, 7
        %v496 = vsub.s32 2, %v495
        %v497 = vrot.slane %v405, %v496
        %v498 = vlaneseq
        %v499 = vshrl.u32 %v498, 7
        %v500 = vsub.s32 3, %v499
        %v501 = vrot.slane %v405, %v500
        %v502 = vlaneseq
        %v503 = vshrl.u32 %v502, 7
        %v504 = vsub.s32 0, %v503
        %v505 = vrot.slane %v419, %v504
        %v506 = vlaneseq
        %v507 = vshrl.u32 %v506, 7
        %v508 = vsub.s32 1, %v507
        %v509 = vrot.slane %v419, %v508
        %v510 = vlaneseq
        %v511 = vshrl.u32 %v510, 7
        %v512 = vsub.s32 2, %v511
        %v513 = vrot.slane %v419, %v512
        %v514 = vlaneseq
        %v515 = vshrl.u32 %v514, 7
        %v516 = vsub.s32 3, %v515
        %v517 = vrot.slane %v419, %v516
        %vm518 = vcmp.eq.s32.totalorder %v354, %v425
        %vm519 = vcmp.eq.s32.totalorder %v354, %v429
        %vm520 = vcmp.eq.s32.totalorder %v354, %v433
        %vm521 = vcmp.eq.s32.totalorder %v354, %v437
        %vm522 = vcmp.eq.s32.totalorder %v355, %v425
        %vm523 = vcmp.eq.s32.totalorder %v355, %v429
        %vm524 = vcmp.eq.s32.totalorder %v355, %v433
        %vm525 = vcmp.eq.s32.totalorder %v355, %v437
        %vm526 = vcmp.eq.s32.totalorder %v354, %v441
        %vm527 = vcmp.eq.s32.totalorder %v354, %v445
        %vm528 = vcmp.eq.s32.totalorder %v354, %v449
        %vm529 = vcmp.eq.s32.totalorder %v354, %v453
        %vm530 = vcmp.eq.s32.totalorder %v355, %v441
        %vm531 = vcmp.eq.s32.totalorder %v355, %v445
        %vm532 = vcmp.eq.s32.totalorder %v355, %v449
        %vm533 = vcmp.eq.s32.totalorder %v355, %v453
        %vm534 = vcmp.eq.s32.totalorder %v354, %v457
        %vm535 = vcmp.eq.s32.totalorder %v354, %v461
        %vm536 = vcmp.eq.s32.totalorder %v354, %v465
        %vm537 = vcmp.eq.s32.totalorder %v354, %v469
        %vm538 = vcmp.eq.s32.totalorder %v355, %v457
        %vm539 = vcmp.eq.s32.totalorder %v355, %v461
        %vm540 = vcmp.eq.s32.totalorder %v355, %v465
        %vm541 = vcmp.eq.s32.totalorder %v355, %v469
        %vm542 = vcmp.eq.s32.totalorder %v354, %v473
        %vm543 = vcmp.eq.s32.totalorder %v354, %v477
        %vm544 = vcmp.eq.s32.totalorder %v354, %v481
        %vm545 = vcmp.eq.s32.totalorder %v354, %v485
        %vm546 = vcmp.eq.s32.totalorder %v355, %v473
        %vm547 = vcmp.eq.s32.totalorder %v355, %v477
        %vm548 = vcmp.eq.s32.totalorder %v355, %v481
        %vm549 = vcmp.eq.s32.totalorder %v355, %v485
        %vm550 = vcmp.eq.s32.totalorder %v354, %v489
        %vm551 = vcmp.eq.s32.totalorder %v354, %v493
        %vm552 = vcmp.eq.s32.totalorder %v354, %v497
        %vm553 = vcmp.eq.s32.totalorder %v354, %v501
        %vm554 = vcmp.eq.s32.totalorder %v355, %v489
        %vm555 = vcmp.eq.s32.totalorder %v355, %v493
        %vm556 = vcmp.eq.s32.totalorder %v355, %v497
        %vm557 = vcmp.eq.s32.totalorder %v355, %v501
        %vm558 = vcmp.eq.s32.totalorder %v354, %v505
        %vm559 = vcmp.eq.s32.totalorder %v354, %v509
        %vm560 = vcmp.eq.s32.totalorder %v354, %v513
        %vm561 = vcmp.eq.s32.totalorder %v354, %v517
        %vm562 = vcmp.eq.s32.totalorder %v355, %v505
        %vm563 = vcmp.eq.s32.totalorder %v355, %v509
        %vm564 = vcmp.eq.s32.totalorder %v355, %v513
        %vm565 = vcmp.eq.s32.totalorder %v355, %v517
        %v566 = vsel %vm518, 1, 0
        %v567 = vsel %vm519, 1, 0
        %v568 = vsel %vm520, 1, 0
        %v569 = vsel %vm521, 1, 0
        %v570 = vsel %vm522, 1, 0
        %v571 = vsel %vm523, 1, 0
        %v572 = vsel %vm524, 1, 0
        %v573 = vsel %vm525, 1, 0
        %v574 = vsel %vm526, 1, 0
        %v575 = vsel %vm527, 1, 0
        %v576 = vsel %vm528, 1, 0
        %v577 = vsel %vm529, 1, 0
        %v578 = vsel %vm530, 1, 0
        %v579 = vsel %vm531, 1, 0
        %v580 = vsel %vm532, 1, 0
        %v581 = vsel %vm533, 1, 0
        %v582 = vsel %vm534, 1, 0
        %v583 = vsel %vm535, 1, 0
        %v584 = vsel %vm536, 1, 0
        %v585 = vsel %vm537, 1, 0
        %v586 = vsel %vm538, 1, 0
        %v587 = vsel %vm539, 1, 0
        %v588 = vsel %vm540, 1, 0
        %v589 = vsel %vm541, 1, 0
        %v590 = vsel %vm542, 1, 0
        %v591 = vsel %vm543, 1, 0
        %v592 = vsel %vm544, 1, 0
        %v593 = vsel %vm545, 1, 0
        %v594 = vsel %vm546, 1, 0
        %v595 = vsel %vm547, 1, 0
        %v596 = vsel %vm548, 1, 0
        %v597 = vsel %vm549, 1, 0
        %v598 = vsel %vm550, 1, 0
        %v599 = vsel %vm551, 1, 0
        %v600 = vsel %vm552, 1, 0
        %v601 = vsel %vm553, 1, 0
        %v602 = vsel %vm554, 1, 0
        %v603 = vsel %vm555, 1, 0
        %v604 = vsel %vm556, 1, 0
        %v605 = vsel %vm557, 1, 0
        %v606 = vsel %vm558, 1, 0
        %v607 = vsel %vm559, 1, 0
        %v608 = vsel %vm560, 1, 0
        %v609 = vsel %vm561, 1, 0
        %v610 = vsel %vm562, 1, 0
        %v611 = vsel %vm563, 1, 0
        %v612 = vsel %vm564, 1, 0
        %v613 = vsel %vm565, 1, 0
        %v614 = vcvt.s32.f32 %v566
        %v615 = vcvt.s32.f32 %v567
        %v616 = vcvt.s32.f32 %v568
        %v617 = vcvt.s32.f32 %v569
        %v618 = vcvt.s32.f32 %v570
        %v619 = vcvt.s32.f32 %v571
        %v620 = vcvt.s32.f32 %v572
        %v621 = vcvt.s32.f32 %v573
        %v622 = vcvt.s32.f32 %v574
        %v623 = vcvt.s32.f32 %v575
        %v624 = vcvt.s32.f32 %v576
        %v625 = vcvt.s32.f32 %v577
        %v626 = vcvt.s32.f32 %v578
        %v627 = vcvt.s32.f32 %v579
        %v628 = vcvt.s32.f32 %v580
        %v629 = vcvt.s32.f32 %v581
        %v630 = vcvt.s32.f32 %v582
        %v631 = vcvt.s32.f32 %v583
        %v632 = vcvt.s32.f32 %v584
        %v633 = vcvt.s32.f32 %v585
        %v634 = vcvt.s32.f32 %v586
        %v635 = vcvt.s32.f32 %v587
        %v636 = vcvt.s32.f32 %v588
        %v637 = vcvt.s32.f32 %v589
        %v638 = vcvt.s32.f32 %v590
        %v639 = vcvt.s32.f32 %v591
        %v640 = vcvt.s32.f32 %v592
        %v641 = vcvt.s32.f32 %v593
        %v642 = vcvt.s32.f32 %v594
        %v643 = vcvt.s32.f32 %v595
        %v644 = vcvt.s32.f32 %v596
        %v645 = vcvt.s32.f32 %v597
        %v646 = vcvt.s32.f32 %v598
        %v647 = vcvt.s32.f32 %v599
        %v648 = vcvt.s32.f32 %v600
        %v649 = vcvt.s32.f32 %v601
        %v650 = vcvt.s32.f32 %v602
        %v651 = vcvt.s32.f32 %v603
        %v652 = vcvt.s32.f32 %v604
        %v653 = vcvt.s32.f32 %v605
        %v654 = vcvt.s32.f32 %v606
        %v655 = vcvt.s32.f32 %v607
        %v656 = vcvt.s32.f32 %v608
        %v657 = vcvt.s32.f32 %v609
        %v658 = vcvt.s32.f32 %v610
        %v659 = vcvt.s32.f32 %v611
        %v660 = vcvt.s32.f32 %v612
        %v661 = vcvt.s32.f32 %v613
        %v662 = vpack.c.bf16 %v618, %v614
        %v663 = vpack.c.bf16 %v619, %v615
        %v664 = vpack.c.bf16 %v620, %v616
        %v665 = vpack.c.bf16 %v621, %v617
        %v666 = vpack.c.bf16 %v626, %v622
        %v667 = vpack.c.bf16 %v627, %v623
        %v668 = vpack.c.bf16 %v628, %v624
        %v669 = vpack.c.bf16 %v629, %v625
        %v670 = vpack.c.bf16 %v634, %v630
        %v671 = vpack.c.bf16 %v635, %v631
        %v672 = vpack.c.bf16 %v636, %v632
        %v673 = vpack.c.bf16 %v637, %v633
        %v674 = vpack.c.bf16 %v642, %v638
        %v675 = vpack.c.bf16 %v643, %v639
        %v676 = vpack.c.bf16 %v644, %v640
        %v677 = vpack.c.bf16 %v645, %v641
        %v678 = vpack.c.bf16 %v650, %v646
        %v679 = vpack.c.bf16 %v651, %v647
        %v680 = vpack.c.bf16 %v652, %v648
        %v681 = vpack.c.bf16 %v653, %v649
        %v682 = vpack.c.bf16 %v658, %v654
        %v683 = vpack.c.bf16 %v659, %v655
        %v684 = vpack.c.bf16 %v660, %v656
        %v685 = vpack.c.bf16 %v661, %v657
        %v686 = vld [vmem:[%s4] sm:$0xf]
        %v687 = vld [vmem:[%s4 + $0x4] sm:$0xf]
        %v688 = vld [vmem:[%s4 + $0x8] sm:$0xf]
        %v689 = vld [vmem:[%s4 + $0xc] sm:$0xf]
        %v694 = vunpack.c.l.b16 %v686
        %v695 = vunpack.c.l.b16 %v687
        %v696 = vunpack.c.l.b16 %v688
        %v697 = vunpack.c.l.b16 %v689
        %v698 = vpack.c.b16 %v695, %v694
        %v699 = vpack.c.b16 %v697, %v696
        %vm700 = vcmask 785408
        %v702 = vsel %vm700, %v698, 0
        %v705 = vsel %vm700, %v699, 0
        %707 = vmatprep.subr.bf16.mxu0 %v663
        %708 = vmatpush1.bf16.msra.mxu0 %v662
        %709 = vmatprep.subr.bf16.mxu0 %v667
        %710 = vmatpush1.bf16.msra.mxu0 %v666
        %711 = vmatprep.subr.bf16.mxu0 %v671
        %712 = vmatpush1.bf16.msra.mxu0 %v670
        %713 = vmatprep.subr.bf16.mxu0 %v675
        %714 = vmatpush1.bf16.msra.mxu0 %v674
        %715 = vmatprep.subr.bf16.mxu0 %v679
        %716 = vmatpush1.bf16.msra.mxu0 %v678
        %717 = vmatprep.subr.bf16.mxu0 %v683
        %718 = vmatpush1.bf16.msra.mxu0 %v682
        %719 = vmatprep.subr.bf16.mxu0 0
        %720 = vmatpush1.bf16.msra.mxu0 0
        %721 = vmatprep.subr.bf16.mxu0 0
        %722 = vmatpush1.bf16.msra.mxu0 0
        %723 = vmatprep.subr.bf16.mxu0 0
        %724 = vmatpush1.bf16.msra.mxu0 0
        %725 = vmatprep.subr.bf16.mxu0 0
        %726 = vmatpush1.bf16.msra.mxu0 0
        %727 = vmatprep.subr.bf16.mxu0 0
        %728 = vmatpush1.bf16.msra.mxu0 0
        %729 = vmatprep.subr.bf16.mxu0 0
        %730 = vmatpush1.bf16.msra.mxu0 0
        %731 = vmatprep.subr.bf16.mxu0 0
        %732 = vmatpush1.bf16.msra.mxu0 0
        %733 = vmatprep.subr.bf16.mxu0 0
        %734 = vmatpush1.bf16.msra.mxu0 0
        %735 = vmatprep.subr.bf16.mxu0 0
        %736 = vmatpush1.bf16.msra.mxu0 0
        %737 = vmatprep.subr.bf16.mxu0 0
        %738 = vmatpush1.bf16.msra.mxu0 0
        %739 = vmatprep.mubr.bf16.mxu0 0
        %740 = vmatmul.mubr.bf16.gmra.mrb[0].mxu0 %v702
        %v741 = vpop.f32.mrb[0].mxu0
        %v742 = vadd.f32 0.0, %v741
        %v743 = vpop.f32.mrb[0].mxu0
        %v744 = vadd.f32 0.0, %v743
        %v745 = vpop.f32.mrb[0].mxu0
        %v746 = vadd.f32 0.0, %v745
        %v747 = vpop.f32.mrb[0].mxu0
        %v748 = vadd.f32 0.0, %v747
        %749 = vmatprep.mubr.bf16.mxu0 0
        %750 = vmatmul.mubr.bf16.gmra.mrb[0].mxu0 %v705
        %v751 = vpop.f32.mrb[0].mxu0
        %v752 = vadd.f32 0.0, %v751
        %v753 = vpop.f32.mrb[0].mxu0
        %v754 = vadd.f32 0.0, %v753
        %v755 = vpop.f32.mrb[0].mxu0
        %v756 = vadd.f32 0.0, %v755
        %v757 = vpop.f32.mrb[0].mxu0
        %v758 = vadd.f32 0.0, %v757
        %759 = vdwg.mxu0
        %760 = vmatprep.subr.bf16.mxu0 %v665
        %761 = vmatpush1.bf16.msra.mxu0 %v664
        %762 = vmatprep.subr.bf16.mxu0 %v669
        %763 = vmatpush1.bf16.msra.mxu0 %v668
        %764 = vmatprep.subr.bf16.mxu0 %v673
        %765 = vmatpush1.bf16.msra.mxu0 %v672
        %766 = vmatprep.subr.bf16.mxu0 %v677
        %767 = vmatpush1.bf16.msra.mxu0 %v676
        %768 = vmatprep.subr.bf16.mxu0 %v681
        %769 = vmatpush1.bf16.msra.mxu0 %v680
        %770 = vmatprep.subr.bf16.mxu0 %v685
        %771 = vmatpush1.bf16.msra.mxu0 %v684
        %772 = vmatprep.subr.bf16.mxu0 0
        %773 = vmatpush1.bf16.msra.mxu0 0
        %774 = vmatprep.subr.bf16.mxu0 0
        %775 = vmatpush1.bf16.msra.mxu0 0
        %776 = vmatprep.subr.bf16.mxu0 0
        %777 = vmatpush1.bf16.msra.mxu0 0
        %778 = vmatprep.subr.bf16.mxu0 0
        %779 = vmatpush1.bf16.msra.mxu0 0
        %780 = vmatprep.subr.bf16.mxu0 0
        %781 = vmatpush1.bf16.msra.mxu0 0
        %782 = vmatprep.subr.bf16.mxu0 0
        %783 = vmatpush1.bf16.msra.mxu0 0
        %784 = vmatprep.subr.bf16.mxu0 0
        %785 = vmatpush1.bf16.msra.mxu0 0
        %786 = vmatprep.subr.bf16.mxu0 0
        %787 = vmatpush1.bf16.msra.mxu0 0
        %788 = vmatprep.subr.bf16.mxu0 0
        %789 = vmatpush1.bf16.msra.mxu0 0
        %790 = vmatprep.subr.bf16.mxu0 0
        %791 = vmatpush1.bf16.msra.mxu0 0
        %792 = vmatprep.mubr.bf16.mxu0 0
        %793 = vmatmul.mubr.bf16.gmra.mrb[0].mxu0 %v702
        %v794 = vpop.f32.mrb[0].mxu0
        %v795 = vadd.f32 0.0, %v794
        %v796 = vpop.f32.mrb[0].mxu0
        %v797 = vadd.f32 0.0, %v796
        %v798 = vpop.f32.mrb[0].mxu0
        %v799 = vadd.f32 0.0, %v798
        %v800 = vpop.f32.mrb[0].mxu0
        %v801 = vadd.f32 0.0, %v800
        %802 = vmatprep.mubr.bf16.mxu0 0
        %803 = vmatmul.mubr.bf16.gmra.mrb[0].mxu0 %v705
        %v804 = vpop.f32.mrb[0].mxu0
        %v805 = vadd.f32 0.0, %v804
        %v806 = vpop.f32.mrb[0].mxu0
        %v807 = vadd.f32 0.0, %v806
        %v808 = vpop.f32.mrb[0].mxu0
        %v809 = vadd.f32 0.0, %v808
        %v810 = vpop.f32.mrb[0].mxu0
        %v811 = vadd.f32 0.0, %v810
        %812 = vdwg.mxu0
        %813 = vst [vmem:[%s320] sm:$0xff] %v742
        %814 = vst [vmem:[%s320 + $0x8] sm:$0xff] %v744
        %815 = vst [vmem:[%s320 + $0x10] sm:$0xff] %v795
        %816 = vst [vmem:[%s320 + $0x18] sm:$0xff] %v797
        %817 = vst [vmem:[%s320 + $0x20] sm:$0xff] %v746
        %818 = vst [vmem:[%s320 + $0x28] sm:$0xff] %v748
        %819 = vst [vmem:[%s320 + $0x30] sm:$0xff] %v799
        %820 = vst [vmem:[%s320 + $0x38] sm:$0xff] %v801
        %821 = vst [vmem:[%s320 + $0x40] sm:$0xff] %v752
        %822 = vst [vmem:[%s320 + $0x48] sm:$0xff] %v754
        %823 = vst [vmem:[%s320 + $0x50] sm:$0xff] %v805
        %824 = vst [vmem:[%s320 + $0x58] sm:$0xff] %v807
        %825 = vst [vmem:[%s320 + $0x60] sm:$0xff] %v756
        %826 = vst [vmem:[%s320 + $0x68] sm:$0xff] %v758
        %827 = vst [vmem:[%s320 + $0x70] sm:$0xff] %v809
        %828 = vst [vmem:[%s320 + $0x78] sm:$0xff] %v811
        %v829 = vld [vmem:[%s337] sm:$0x77]
        %v830 = vld [vmem:[%s337 + $0x8] sm:$0x77]
        %v831 = vcvt.s32.f32 %v354
        %v832 = vcvt.s32.f32 %v355
        %v833 = vmul.f32 %v831, 0.33333334
        %v834 = vmul.f32 %v832, 0.33333334
        loop: start=0, step=1, limit=2
        $region45: #{tpu_custom_call.1} parent=43 // loop_pre_header
          _
        $region46: #{tpu_custom_call.1} parent=43 // loop_header
          %s836 = sphi 0, %s840
          %p837 = scmp.ge.s32.totalorder %s836, 2
        $region47: #{tpu_custom_call.1} parent=43 // loop_header_branch
          %839 = sbr.rel (%p837) target = $region51
        $region48: #{tpu_custom_call.1} parent=43 // loop_body
          %s841 = smul.u32 %s836, 4
          %s842 = smul.addr %s841, 4
          %s843 = scalar_lea.vmem %s347, %s842
          %v844 = vld [vmem:[%s843] sm:$0xff]
          %v845 = vld [vmem:[%s843 + $0x8] sm:$0xff]
          %v847 = vunpack.c.l.s4 1966171168
          %v848 = vunpack.c.0.s8 %v847
          %v849 = vlaneseq
          %v850 = vshrl.u32 %v849, 7
          %v851 = vsub.s32 %v848, %v850
          %v852 = vrot.slane %v844, %v851
          %v854 = vunpack.c.l.s4 1966171168
          %v855 = vunpack.c.0.s8 %v854
          %v856 = vlaneseq
          %v857 = vshrl.u32 %v856, 7
          %v858 = vsub.s32 %v855, %v857
          %v859 = vrot.slane %v845, %v858
          %v860 = vcombine.low %v852, %v859
          %v861 = vcombine.high %v852, %v859
          %v863 = vunpack.c.l.s4 1966171168
          %v864 = vunpack.c.0.s8 %v863
          %v865 = vlaneseq
          %v866 = vshrl.u32 %v865, 7
          %v867 = vsub.s32 %v864, %v866
          %v868 = vrot.slane %v860, %v867
          %v870 = vunpack.c.l.s4 1966171168
          %v871 = vunpack.c.0.s8 %v870
          %v872 = vlaneseq
          %v873 = vshrl.u32 %v872, 7
          %v874 = vsub.s32 %v871, %v873
          %v875 = vrot.slane %v861, %v874
          %v876 = vcombine.high %v868, %v868
          %v877 = vcombine.high %v875, %v875
          %v878 = vlaneseq
          %v879 = vshrl.u32 %v878, 7
          %v880 = vsub.s32 0, %v879
          %v881 = vrot.slane %v868, %v880
          %v882 = vlaneseq
          %v883 = vshrl.u32 %v882, 7
          %v884 = vsub.s32 1, %v883
          %v885 = vrot.slane %v868, %v884
          %v886 = vlaneseq
          %v887 = vshrl.u32 %v886, 7
          %v888 = vsub.s32 2, %v887
          %v889 = vrot.slane %v868, %v888
          %v890 = vlaneseq
          %v891 = vshrl.u32 %v890, 7
          %v892 = vsub.s32 3, %v891
          %v893 = vrot.slane %v868, %v892
          %v894 = vlaneseq
          %v895 = vshrl.u32 %v894, 7
          %v896 = vsub.s32 0, %v895
          %v897 = vrot.slane %v875, %v896
          %v898 = vlaneseq
          %v899 = vshrl.u32 %v898, 7
          %v900 = vsub.s32 1, %v899
          %v901 = vrot.slane %v875, %v900
          %v902 = vlaneseq
          %v903 = vshrl.u32 %v902, 7
          %v904 = vsub.s32 2, %v903
          %v905 = vrot.slane %v875, %v904
          %v906 = vlaneseq
          %v907 = vshrl.u32 %v906, 7
          %v908 = vsub.s32 3, %v907
          %v909 = vrot.slane %v875, %v908
          %v910 = vlaneseq
          %v911 = vshrl.u32 %v910, 7
          %v912 = vsub.s32 0, %v911
          %v913 = vrot.slane %v876, %v912
          %v914 = vlaneseq
          %v915 = vshrl.u32 %v914, 7
          %v916 = vsub.s32 1, %v915
          %v917 = vrot.slane %v876, %v916
          %v918 = vlaneseq
          %v919 = vshrl.u32 %v918, 7
          %v920 = vsub.s32 2, %v919
          %v921 = vrot.slane %v876, %v920
          %v922 = vlaneseq
          %v923 = vshrl.u32 %v922, 7
          %v924 = vsub.s32 3, %v923
          %v925 = vrot.slane %v876, %v924
          %v926 = vlaneseq
          %v927 = vshrl.u32 %v926, 7
          %v928 = vsub.s32 0, %v927
          %v929 = vrot.slane %v877, %v928
          %v930 = vlaneseq
          %v931 = vshrl.u32 %v930, 7
          %v932 = vsub.s32 1, %v931
          %v933 = vrot.slane %v877, %v932
          %v934 = vlaneseq
          %v935 = vshrl.u32 %v934, 7
          %v936 = vsub.s32 2, %v935
          %v937 = vrot.slane %v877, %v936
          %v938 = vlaneseq
          %v939 = vshrl.u32 %v938, 7
          %v940 = vsub.s32 3, %v939
          %v941 = vrot.slane %v877, %v940
          %vm942 = vcmp.eq.s32.totalorder %v354, %v881
          %vm943 = vcmp.eq.s32.totalorder %v354, %v885
          %vm944 = vcmp.eq.s32.totalorder %v354, %v889
          %vm945 = vcmp.eq.s32.totalorder %v354, %v893
          %vm946 = vcmp.eq.s32.totalorder %v355, %v881
          %vm947 = vcmp.eq.s32.totalorder %v355, %v885
          %vm948 = vcmp.eq.s32.totalorder %v355, %v889
          %vm949 = vcmp.eq.s32.totalorder %v355, %v893
          %vm950 = vcmp.eq.s32.totalorder %v354, %v897
          %vm951 = vcmp.eq.s32.totalorder %v354, %v901
          %vm952 = vcmp.eq.s32.totalorder %v354, %v905
          %vm953 = vcmp.eq.s32.totalorder %v354, %v909
          %vm954 = vcmp.eq.s32.totalorder %v355, %v897
          %vm955 = vcmp.eq.s32.totalorder %v355, %v901
          %vm956 = vcmp.eq.s32.totalorder %v355, %v905
          %vm957 = vcmp.eq.s32.totalorder %v355, %v909
          %vm958 = vcmp.eq.s32.totalorder %v354, %v913
          %vm959 = vcmp.eq.s32.totalorder %v354, %v917
          %vm960 = vcmp.eq.s32.totalorder %v354, %v921
          %vm961 = vcmp.eq.s32.totalorder %v354, %v925
          %vm962 = vcmp.eq.s32.totalorder %v355, %v913
          %vm963 = vcmp.eq.s32.totalorder %v355, %v917
          %vm964 = vcmp.eq.s32.totalorder %v355, %v921
          %vm965 = vcmp.eq.s32.totalorder %v355, %v925
          %vm966 = vcmp.eq.s32.totalorder %v354, %v929
          %vm967 = vcmp.eq.s32.totalorder %v354, %v933
          %vm968 = vcmp.eq.s32.totalorder %v354, %v937
          %vm969 = vcmp.eq.s32.totalorder %v354, %v941
          %vm970 = vcmp.eq.s32.totalorder %v355, %v929
          %vm971 = vcmp.eq.s32.totalorder %v355, %v933
          %vm972 = vcmp.eq.s32.totalorder %v355, %v937
          %vm973 = vcmp.eq.s32.totalorder %v355, %v941
          %v974 = vsel %vm942, 1, 0
          %v975 = vsel %vm943, 1, 0
          %v976 = vsel %vm944, 1, 0
          %v977 = vsel %vm945, 1, 0
          %v978 = vsel %vm946, 1, 0
          %v979 = vsel %vm947, 1, 0
          %v980 = vsel %vm948, 1, 0
          %v981 = vsel %vm949, 1, 0
          %v982 = vsel %vm950, 1, 0
          %v983 = vsel %vm951, 1, 0
          %v984 = vsel %vm952, 1, 0
          %v985 = vsel %vm953, 1, 0
          %v986 = vsel %vm954, 1, 0
          %v987 = vsel %vm955, 1, 0
          %v988 = vsel %vm956, 1, 0
          %v989 = vsel %vm957, 1, 0
          %v990 = vsel %vm958, 1, 0
          %v991 = vsel %vm959, 1, 0
          %v992 = vsel %vm960, 1, 0
          %v993 = vsel %vm961, 1, 0
          %v994 = vsel %vm962, 1, 0
          %v995 = vsel %vm963, 1, 0
          %v996 = vsel %vm964, 1, 0
          %v997 = vsel %vm965, 1, 0
          %v998 = vsel %vm966, 1, 0
          %v999 = vsel %vm967, 1, 0
          %v1000 = vsel %vm968, 1, 0
          %v1001 = vsel %vm969, 1, 0
          %v1002 = vsel %vm970, 1, 0
          %v1003 = vsel %vm971, 1, 0
          %v1004 = vsel %vm972, 1, 0
          %v1005 = vsel %vm973, 1, 0
          %v1006 = vcvt.s32.f32 %v974
          %v1007 = vcvt.s32.f32 %v975
          %v1008 = vcvt.s32.f32 %v976
          %v1009 = vcvt.s32.f32 %v977
          %v1010 = vcvt.s32.f32 %v978
          %v1011 = vcvt.s32.f32 %v979
          %v1012 = vcvt.s32.f32 %v980
          %v1013 = vcvt.s32.f32 %v981
          %v1014 = vcvt.s32.f32 %v982
          %v1015 = vcvt.s32.f32 %v983
          %v1016 = vcvt.s32.f32 %v984
          %v1017 = vcvt.s32.f32 %v985
          %v1018 = vcvt.s32.f32 %v986
          %v1019 = vcvt.s32.f32 %v987
          %v1020 = vcvt.s32.f32 %v988
          %v1021 = vcvt.s32.f32 %v989
          %v1022 = vcvt.s32.f32 %v990
          %v1023 = vcvt.s32.f32 %v991
          %v1024 = vcvt.s32.f32 %v992
          %v1025 = vcvt.s32.f32 %v993
          %v1026 = vcvt.s32.f32 %v994
          %v1027 = vcvt.s32.f32 %v995
          %v1028 = vcvt.s32.f32 %v996
          %v1029 = vcvt.s32.f32 %v997
          %v1030 = vcvt.s32.f32 %v998
          %v1031 = vcvt.s32.f32 %v999
          %v1032 = vcvt.s32.f32 %v1000
          %v1033 = vcvt.s32.f32 %v1001
          %v1034 = vcvt.s32.f32 %v1002
          %v1035 = vcvt.s32.f32 %v1003
          %v1036 = vcvt.s32.f32 %v1004
          %v1037 = vcvt.s32.f32 %v1005
          %v1038 = vpack.c.bf16 %v1010, %v1006
          %v1039 = vpack.c.bf16 %v1011, %v1007
          %v1040 = vpack.c.bf16 %v1012, %v1008
          %v1041 = vpack.c.bf16 %v1013, %v1009
          %v1042 = vpack.c.bf16 %v1018, %v1014
          %v1043 = vpack.c.bf16 %v1019, %v1015
          %v1044 = vpack.c.bf16 %v1020, %v1016
          %v1045 = vpack.c.bf16 %v1021, %v1017
          %v1046 = vpack.c.bf16 %v1026, %v1022
          %v1047 = vpack.c.bf16 %v1027, %v1023
          %v1048 = vpack.c.bf16 %v1028, %v1024
          %v1049 = vpack.c.bf16 %v1029, %v1025
          %v1050 = vpack.c.bf16 %v1034, %v1030
          %v1051 = vpack.c.bf16 %v1035, %v1031
          %v1052 = vpack.c.bf16 %v1036, %v1032
          %v1053 = vpack.c.bf16 %v1037, %v1033
          %v1054 = vld [vmem:[%s5] sm:$0xf]
          %v1055 = vld [vmem:[%s5 + $0x4] sm:$0xf]
          %v1058 = vunpack.c.l.b16 %v1054
          %v1059 = vunpack.c.l.b16 %v1055
          %v1060 = vpack.c.b16 %v1059, %v1058
          %vm1061 = vcmask 523264
          %v1063 = vsel %vm1061, %v1060, 0
          %1065 = vmatprep.subr.bf16.mxu0 %v1039
          %1066 = vmatpush1.bf16.msra.mxu0 %v1038
          %1067 = vmatprep.subr.bf16.mxu0 %v1043
          %1068 = vmatpush1.bf16.msra.mxu0 %v1042
          %1069 = vmatprep.subr.bf16.mxu0 %v1047
          %1070 = vmatpush1.bf16.msra.mxu0 %v1046
          %1071 = vmatprep.subr.bf16.mxu0 %v1051
          %1072 = vmatpush1.bf16.msra.mxu0 %v1050
          %1073 = vmatprep.subr.bf16.mxu0 0
          %1074 = vmatpush1.bf16.msra.mxu0 0
          %1075 = vmatprep.subr.bf16.mxu0 0
          %1076 = vmatpush1.bf16.msra.mxu0 0
          %1077 = vmatprep.subr.bf16.mxu0 0
          %1078 = vmatpush1.bf16.msra.mxu0 0
          %1079 = vmatprep.subr.bf16.mxu0 0
          %1080 = vmatpush1.bf16.msra.mxu0 0
          %1081 = vmatprep.subr.bf16.mxu0 0
          %1082 = vmatpush1.bf16.msra.mxu0 0
          %1083 = vmatprep.subr.bf16.mxu0 0
          %1084 = vmatpush1.bf16.msra.mxu0 0
          %1085 = vmatprep.subr.bf16.mxu0 0
          %1086 = vmatpush1.bf16.msra.mxu0 0
          %1087 = vmatprep.subr.bf16.mxu0 0
          %1088 = vmatpush1.bf16.msra.mxu0 0
          %1089 = vmatprep.subr.bf16.mxu0 0
          %1090 = vmatpush1.bf16.msra.mxu0 0
          %1091 = vmatprep.subr.bf16.mxu0 0
          %1092 = vmatpush1.bf16.msra.mxu0 0
          %1093 = vmatprep.subr.bf16.mxu0 0
          %1094 = vmatpush1.bf16.msra.mxu0 0
          %1095 = vmatprep.subr.bf16.mxu0 0
          %1096 = vmatpush1.bf16.msra.mxu0 0
          %1097 = vmatprep.mubr.bf16.mxu0 0
          %1098 = vmatmul.mubr.bf16.gmra.mrb[0].mxu0 %v1063
          %v1099 = vpop.f32.mrb[0].mxu0
          %v1100 = vadd.f32 0.0, %v1099
          %v1101 = vpop.f32.mrb[0].mxu0
          %v1102 = vadd.f32 0.0, %v1101
          %v1103 = vpop.f32.mrb[0].mxu0
          %v1104 = vadd.f32 0.0, %v1103
          %v1105 = vpop.f32.mrb[0].mxu0
          %v1106 = vadd.f32 0.0, %v1105
          %1107 = vdwg.mxu0
          %1108 = vmatprep.subr.bf16.mxu0 %v1041
          %1109 = vmatpush1.bf16.msra.mxu0 %v1040
          %1110 = vmatprep.subr.bf16.mxu0 %v1045
          %1111 = vmatpush1.bf16.msra.mxu0 %v1044
          %1112 = vmatprep.subr.bf16.mxu0 %v1049
          %1113 = vmatpush1.bf16.msra.mxu0 %v1048
          %1114 = vmatprep.subr.bf16.mxu0 %v1053
          %1115 = vmatpush1.bf16.msra.mxu0 %v1052
          %1116 = vmatprep.subr.bf16.mxu0 0
          %1117 = vmatpush1.bf16.msra.mxu0 0
          %1118 = vmatprep.subr.bf16.mxu0 0
          %1119 = vmatpush1.bf16.msra.mxu0 0
          %1120 = vmatprep.subr.bf16.mxu0 0
          %1121 = vmatpush1.bf16.msra.mxu0 0
          %1122 = vmatprep.subr.bf16.mxu0 0
          %1123 = vmatpush1.bf16.msra.mxu0 0
          %1124 = vmatprep.subr.bf16.mxu0 0
          %1125 = vmatpush1.bf16.msra.mxu0 0
          %1126 = vmatprep.subr.bf16.mxu0 0
          %1127 = vmatpush1.bf16.msra.mxu0 0
          %1128 = vmatprep.subr.bf16.mxu0 0
          %1129 = vmatpush1.bf16.msra.mxu0 0
          %1130 = vmatprep.subr.bf16.mxu0 0
          %1131 = vmatpush1.bf16.msra.mxu0 0
          %1132 = vmatprep.subr.bf16.mxu0 0
          %1133 = vmatpush1.bf16.msra.mxu0 0
          %1134 = vmatprep.subr.bf16.mxu0 0
          %1135 = vmatpush1.bf16.msra.mxu0 0
          %1136 = vmatprep.subr.bf16.mxu0 0
          %1137 = vmatpush1.bf16.msra.mxu0 0
          %1138 = vmatprep.subr.bf16.mxu0 0
          %1139 = vmatpush1.bf16.msra.mxu0 0
          %1140 = vmatprep.mubr.bf16.mxu0 0
          %1141 = vmatmul.mubr.bf16.gmra.mrb[0].mxu0 %v1063
          %v1142 = vpop.f32.mrb[0].mxu0
          %v1143 = vadd.f32 0.0, %v1142
          %v1144 = vpop.f32.mrb[0].mxu0
          %v1145 = vadd.f32 0.0, %v1144
          %v1146 = vpop.f32.mrb[0].mxu0
          %v1147 = vadd.f32 0.0, %v1146
          %v1148 = vpop.f32.mrb[0].mxu0
          %v1149 = vadd.f32 0.0, %v1148
          %1150 = vdwg.mxu0
          %s1151 = smul.addr %s841, 2
          %s1152 = scalar_lea.vmem %s342, %s1151
          %v1153 = vld [vmem:[%s1152] sm:$0xff]
          %v1154 = vadd.s32 %v354, 16
          %v1155 = vadd.s32 %v354, 24
          %v1156 = vadd.s32 %v354, 32
          %v1157 = vadd.s32 %v354, 40
          %v1158 = vadd.s32 %v354, 48
          %v1159 = vadd.s32 %v354, 56
          %v1160 = vadd.s32 %v354, 64
          %v1161 = vadd.s32 %v354, 72
          %v1162 = vadd.s32 %v354, 80
          %v1163 = vadd.s32 %v354, 88
          %v1164 = vadd.s32 %v354, 96
          %v1165 = vadd.s32 %v354, 104
          %v1166 = vadd.s32 %v354, 112
          %v1167 = vadd.s32 %v354, 120
          %v1168 = vadd.s32 %v354, 128
          %v1169 = vadd.s32 %v354, 136
          %v1170 = vadd.s32 %v354, 144
          %v1171 = vadd.s32 %v354, 152
          %v1172 = vadd.s32 %v354, 160
          %v1173 = vadd.s32 %v354, 168
          %v1174 = vadd.s32 %v354, 176
          %v1175 = vadd.s32 %v354, 184
          %v1176 = vadd.s32 %v354, 192
          %v1177 = vadd.s32 %v354, 200
          %v1178 = vadd.s32 %v354, 208
          %v1179 = vadd.s32 %v354, 216
          %v1180 = vadd.s32 %v354, 224
          %v1181 = vadd.s32 %v354, 232
          %v1182 = vadd.s32 %v354, 240
          %v1183 = vadd.s32 %v354, 248
          %v1184 = vadd.s32 %v354, 256
          %v1185 = vadd.s32 %v354, 264
          %v1186 = vadd.s32 %v354, 272
          %v1187 = vadd.s32 %v354, 280
          %v1188 = vadd.s32 %v354, 288
          %v1189 = vadd.s32 %v354, 296
          %v1190 = vadd.s32 %v354, 304
          %v1191 = vadd.s32 %v354, 312
          %v1192 = vadd.s32 %v354, 320
          %v1193 = vadd.s32 %v354, 328
          %v1194 = vadd.s32 %v354, 336
          %v1195 = vadd.s32 %v354, 344
          %v1196 = vadd.s32 %v354, 352
          %v1197 = vadd.s32 %v354, 360
          %v1198 = vadd.s32 %v354, 368
          %v1199 = vadd.s32 %v354, 376
          %v1200 = vadd.s32 %v354, 384
          %v1201 = vadd.s32 %v354, 392
          %v1202 = vadd.s32 %v354, 400
          %v1203 = vadd.s32 %v354, 408
          %v1204 = vadd.s32 %v354, 416
          %v1205 = vadd.s32 %v354, 424
          %v1206 = vadd.s32 %v354, 432
          %v1207 = vadd.s32 %v354, 440
          %v1208 = vadd.s32 %v354, 448
          %v1209 = vadd.s32 %v354, 456
          %v1210 = vadd.s32 %v354, 464
          %v1211 = vadd.s32 %v354, 472
          %v1212 = vadd.s32 %v354, 480
          %v1213 = vadd.s32 %v354, 488
          %v1214 = vadd.s32 %v354, 496
          %v1215 = vadd.s32 %v354, 504
          %v1216 = vlaneseq
          %v1217 = vshrl.u32 %v1216, 7
          %v1218 = vsub.s32 0, %v1217
          %v1219 = vrot.slane %v1153, %v1218
          %v1220 = vlaneseq
          %v1221 = vshrl.u32 %v1220, 7
          %v1222 = vsub.s32 2, %v1221
          %v1223 = vrot.slane %v1153, %v1222
          %v1224 = vlaneseq
          %v1225 = vshrl.u32 %v1224, 7
          %v1226 = vsub.s32 4, %v1225
          %v1227 = vrot.slane %v1153, %v1226
          %v1228 = vlaneseq
          %v1229 = vshrl.u32 %v1228, 7
          %v1230 = vsub.s32 6, %v1229
          %v1231 = vrot.slane %v1153, %v1230
          %v1232 = vlaneseq
          %v1233 = vshrl.u32 %v1232, 7
          %v1234 = vsub.s32 0, %v1233
          %v1235 = vrot.slane %v1219, %v1234
          %v1236 = vlaneseq
          %v1237 = vshrl.u32 %v1236, 7
          %v1238 = vsub.s32 0, %v1237
          %v1239 = vrot.slane %v1223, %v1238
          %v1240 = vlaneseq
          %v1241 = vshrl.u32 %v1240, 7
          %v1242 = vsub.s32 0, %v1241
          %v1243 = vrot.slane %v1227, %v1242
          %v1244 = vlaneseq
          %v1245 = vshrl.u32 %v1244, 7
          %v1246 = vsub.s32 0, %v1245
          %v1247 = vrot.slane %v1231, %v1246
          %vm1248 = vcmp.eq.s32.totalorder %v354, %v1235
          %vm1249 = vcmp.eq.s32.totalorder %v354, %v1239
          %vm1250 = vcmp.eq.s32.totalorder %v354, %v1243
          %vm1251 = vcmp.eq.s32.totalorder %v354, %v1247
          %vm1252 = vcmp.eq.s32.totalorder %v355, %v1235
          %vm1253 = vcmp.eq.s32.totalorder %v355, %v1239
          %vm1254 = vcmp.eq.s32.totalorder %v355, %v1243
          %vm1255 = vcmp.eq.s32.totalorder %v355, %v1247
          %vm1256 = vcmp.eq.s32.totalorder %v1154, %v1235
          %vm1257 = vcmp.eq.s32.totalorder %v1154, %v1239
          %vm1258 = vcmp.eq.s32.totalorder %v1154, %v1243
          %vm1259 = vcmp.eq.s32.totalorder %v1154, %v1247
          %vm1260 = vcmp.eq.s32.totalorder %v1155, %v1235
          %vm1261 = vcmp.eq.s32.totalorder %v1155, %v1239
          %vm1262 = vcmp.eq.s32.totalorder %v1155, %v1243
          %vm1263 = vcmp.eq.s32.totalorder %v1155, %v1247
          %vm1264 = vcmp.eq.s32.totalorder %v1156, %v1235
          %vm1265 = vcmp.eq.s32.totalorder %v1156, %v1239
          %vm1266 = vcmp.eq.s32.totalorder %v1156, %v1243
          %vm1267 = vcmp.eq.s32.totalorder %v1156, %v1247
          %vm1268 = vcmp.eq.s32.totalorder %v1157, %v1235
          %vm1269 = vcmp.eq.s32.totalorder %v1157, %v1239
          %vm1270 = vcmp.eq.s32.totalorder %v1157, %v1243
          %vm1271 = vcmp.eq.s32.totalorder %v1157, %v1247
          %vm1272 = vcmp.eq.s32.totalorder %v1158, %v1235
          %vm1273 = vcmp.eq.s32.totalorder %v1158, %v1239
          %vm1274 = vcmp.eq.s32.totalorder %v1158, %v1243
          %vm1275 = vcmp.eq.s32.totalorder %v1158, %v1247
          %vm1276 = vcmp.eq.s32.totalorder %v1159, %v1235
          %vm1277 = vcmp.eq.s32.totalorder %v1159, %v1239
          %vm1278 = vcmp.eq.s32.totalorder %v1159, %v1243
          %vm1279 = vcmp.eq.s32.totalorder %v1159, %v1247
          %vm1280 = vcmp.eq.s32.totalorder %v1160, %v1235
          %vm1281 = vcmp.eq.s32.totalorder %v1160, %v1239
          %vm1282 = vcmp.eq.s32.totalorder %v1160, %v1243
          %vm1283 = vcmp.eq.s32.totalorder %v1160, %v1247
          %vm1284 = vcmp.eq.s32.totalorder %v1161, %v1235
          %vm1285 = vcmp.eq.s32.totalorder %v1161, %v1239
          %vm1286 = vcmp.eq.s32.totalorder %v1161, %v1243
          %vm1287 = vcmp.eq.s32.totalorder %v1161, %v1247
          %vm1288 = vcmp.eq.s32.totalorder %v1162, %v1235
          %vm1289 = vcmp.eq.s32.totalorder %v1162, %v1239
          %vm1290 = vcmp.eq.s32.totalorder %v1162, %v1243
          %vm1291 = vcmp.eq.s32.totalorder %v1162, %v1247
          %vm1292 = vcmp.eq.s32.totalorder %v1163, %v1235
          %vm1293 = vcmp.eq.s32.totalorder %v1163, %v1239
          %vm1294 = vcmp.eq.s32.totalorder %v1163, %v1243
          %vm1295 = vcmp.eq.s32.totalorder %v1163, %v1247
          %vm1296 = vcmp.eq.s32.totalorder %v1164, %v1235
          %vm1297 = vcmp.eq.s32.totalorder %v1164, %v1239
          %vm1298 = vcmp.eq.s32.totalorder %v1164, %v1243
          %vm1299 = vcmp.eq.s32.totalorder %v1164, %v1247
          %vm1300 = vcmp.eq.s32.totalorder %v1165, %v1235
          %vm1301 = vcmp.eq.s32.totalorder %v1165, %v1239
          %vm1302 = vcmp.eq.s32.totalorder %v1165, %v1243
          %vm1303 = vcmp.eq.s32.totalorder %v1165, %v1247
          %vm1304 = vcmp.eq.s32.totalorder %v1166, %v1235
          %vm1305 = vcmp.eq.s32.totalorder %v1166, %v1239
          %vm1306 = vcmp.eq.s32.totalorder %v1166, %v1243
          %vm1307 = vcmp.eq.s32.totalorder %v1166, %v1247
          %vm1308 = vcmp.eq.s32.totalorder %v1167, %v1235
          %vm1309 = vcmp.eq.s32.totalorder %v1167, %v1239
          %vm1310 = vcmp.eq.s32.totalorder %v1167, %v1243
          %vm1311 = vcmp.eq.s32.totalorder %v1167, %v1247
          %vm1312 = vcmp.eq.s32.totalorder %v1168, %v1235
          %vm1313 = vcmp.eq.s32.totalorder %v1168, %v1239
          %vm1314 = vcmp.eq.s32.totalorder %v1168, %v1243
          %vm1315 = vcmp.eq.s32.totalorder %v1168, %v1247
          %vm1316 = vcmp.eq.s32.totalorder %v1169, %v1235
          %vm1317 = vcmp.eq.s32.totalorder %v1169, %v1239
          %vm1318 = vcmp.eq.s32.totalorder %v1169, %v1243
          %vm1319 = vcmp.eq.s32.totalorder %v1169, %v1247
          %vm1320 = vcmp.eq.s32.totalorder %v1170, %v1235
          %vm1321 = vcmp.eq.s32.totalorder %v1170, %v1239
          %vm1322 = vcmp.eq.s32.totalorder %v1170, %v1243
          %vm1323 = vcmp.eq.s32.totalorder %v1170, %v1247
          %vm1324 = vcmp.eq.s32.totalorder %v1171, %v1235
          %vm1325 = vcmp.eq.s32.totalorder %v1171, %v1239
          %vm1326 = vcmp.eq.s32.totalorder %v1171, %v1243
          %vm1327 = vcmp.eq.s32.totalorder %v1171, %v1247
          %vm1328 = vcmp.eq.s32.totalorder %v1172, %v1235
          %vm1329 = vcmp.eq.s32.totalorder %v1172, %v1239
          %vm1330 = vcmp.eq.s32.totalorder %v1172, %v1243
          %vm1331 = vcmp.eq.s32.totalorder %v1172, %v1247
          %vm1332 = vcmp.eq.s32.totalorder %v1173, %v1235
          %vm1333 = vcmp.eq.s32.totalorder %v1173, %v1239
          %vm1334 = vcmp.eq.s32.totalorder %v1173, %v1243
          %vm1335 = vcmp.eq.s32.totalorder %v1173, %v1247
          %vm1336 = vcmp.eq.s32.totalorder %v1174, %v1235
          %vm1337 = vcmp.eq.s32.totalorder %v1174, %v1239
          %vm1338 = vcmp.eq.s32.totalorder %v1174, %v1243
          %vm1339 = vcmp.eq.s32.totalorder %v1174, %v1247
          %vm1340 = vcmp.eq.s32.totalorder %v1175, %v1235
          %vm1341 = vcmp.eq.s32.totalorder %v1175, %v1239
          %vm1342 = vcmp.eq.s32.totalorder %v1175, %v1243
          %vm1343 = vcmp.eq.s32.totalorder %v1175, %v1247
          %vm1344 = vcmp.eq.s32.totalorder %v1176, %v1235
          %vm1345 = vcmp.eq.s32.totalorder %v1176, %v1239
          %vm1346 = vcmp.eq.s32.totalorder %v1176, %v1243
          %vm1347 = vcmp.eq.s32.totalorder %v1176, %v1247
          %vm1348 = vcmp.eq.s32.totalorder %v1177, %v1235
          %vm1349 = vcmp.eq.s32.totalorder %v1177, %v1239
          %vm1350 = vcmp.eq.s32.totalorder %v1177, %v1243
          %vm1351 = vcmp.eq.s32.totalorder %v1177, %v1247
          %vm1352 = vcmp.eq.s32.totalorder %v1178, %v1235
          %vm1353 = vcmp.eq.s32.totalorder %v1178, %v1239
          %vm1354 = vcmp.eq.s32.totalorder %v1178, %v1243
          %vm1355 = vcmp.eq.s32.totalorder %v1178, %v1247
          %vm1356 = vcmp.eq.s32.totalorder %v1179, %v1235
          %vm1357 = vcmp.eq.s32.totalorder %v1179, %v1239
          %vm1358 = vcmp.eq.s32.totalorder %v1179, %v1243
          %vm1359 = vcmp.eq.s32.totalorder %v1179, %v1247
          %vm1360 = vcmp.eq.s32.totalorder %v1180, %v1235
          %vm1361 = vcmp.eq.s32.totalorder %v1180, %v1239
          %vm1362 = vcmp.eq.s32.totalorder %v1180, %v1243
          %vm1363 = vcmp.eq.s32.totalorder %v1180, %v1247
          %vm1364 = vcmp.eq.s32.totalorder %v1181, %v1235
          %vm1365 = vcmp.eq.s32.totalorder %v1181, %v1239
          %vm1366 = vcmp.eq.s32.totalorder %v1181, %v1243
          %vm1367 = vcmp.eq.s32.totalorder %v1181, %v1247
          %vm1368 = vcmp.eq.s32.totalorder %v1182, %v1235
          %vm1369 = vcmp.eq.s32.totalorder %v1182, %v1239
          %vm1370 = vcmp.eq.s32.totalorder %v1182, %v1243
          %vm1371 = vcmp.eq.s32.totalorder %v1182, %v1247
          %vm1372 = vcmp.eq.s32.totalorder %v1183, %v1235
          %vm1373 = vcmp.eq.s32.totalorder %v1183, %v1239
          %vm1374 = vcmp.eq.s32.totalorder %v1183, %v1243
          %vm1375 = vcmp.eq.s32.totalorder %v1183, %v1247
          %vm1376 = vcmp.eq.s32.totalorder %v1184, %v1235
          %vm1377 = vcmp.eq.s32.totalorder %v1184, %v1239
          %vm1378 = vcmp.eq.s32.totalorder %v1184, %v1243
          %vm1379 = vcmp.eq.s32.totalorder %v1184, %v1247
          %vm1380 = vcmp.eq.s32.totalorder %v1185, %v1235
          %vm1381 = vcmp.eq.s32.totalorder %v1185, %v1239
          %vm1382 = vcmp.eq.s32.totalorder %v1185, %v1243
          %vm1383 = vcmp.eq.s32.totalorder %v1185, %v1247
          %vm1384 = vcmp.eq.s32.totalorder %v1186, %v1235
          %vm1385 = vcmp.eq.s32.totalorder %v1186, %v1239
          %vm1386 = vcmp.eq.s32.totalorder %v1186, %v1243
          %vm1387 = vcmp.eq.s32.totalorder %v1186, %v1247
          %vm1388 = vcmp.eq.s32.totalorder %v1187, %v1235
          %vm1389 = vcmp.eq.s32.totalorder %v1187, %v1239
          %vm1390 = vcmp.eq.s32.totalorder %v1187, %v1243
          %vm1391 = vcmp.eq.s32.totalorder %v1187, %v1247
          %vm1392 = vcmp.eq.s32.totalorder %v1188, %v1235
          %vm1393 = vcmp.eq.s32.totalorder %v1188, %v1239
          %vm1394 = vcmp.eq.s32.totalorder %v1188, %v1243
          %vm1395 = vcmp.eq.s32.totalorder %v1188, %v1247
          %vm1396 = vcmp.eq.s32.totalorder %v1189, %v1235
          %vm1397 = vcmp.eq.s32.totalorder %v1189, %v1239
          %vm1398 = vcmp.eq.s32.totalorder %v1189, %v1243
          %vm1399 = vcmp.eq.s32.totalorder %v1189, %v1247
          %vm1400 = vcmp.eq.s32.totalorder %v1190, %v1235
          %vm1401 = vcmp.eq.s32.totalorder %v1190, %v1239
          %vm1402 = vcmp.eq.s32.totalorder %v1190, %v1243
          %vm1403 = vcmp.eq.s32.totalorder %v1190, %v1247
          %vm1404 = vcmp.eq.s32.totalorder %v1191, %v1235
          %vm1405 = vcmp.eq.s32.totalorder %v1191, %v1239
          %vm1406 = vcmp.eq.s32.totalorder %v1191, %v1243
          %vm1407 = vcmp.eq.s32.totalorder %v1191, %v1247
          %vm1408 = vcmp.eq.s32.totalorder %v1192, %v1235
          %vm1409 = vcmp.eq.s32.totalorder %v1192, %v1239
          %vm1410 = vcmp.eq.s32.totalorder %v1192, %v1243
          %vm1411 = vcmp.eq.s32.totalorder %v1192, %v1247
          %vm1412 = vcmp.eq.s32.totalorder %v1193, %v1235
          %vm1413 = vcmp.eq.s32.totalorder %v1193, %v1239
          %vm1414 = vcmp.eq.s32.totalorder %v1193, %v1243
          %vm1415 = vcmp.eq.s32.totalorder %v1193, %v1247
          %vm1416 = vcmp.eq.s32.totalorder %v1194, %v1235
          %vm1417 = vcmp.eq.s32.totalorder %v1194, %v1239
          %vm1418 = vcmp.eq.s32.totalorder %v1194, %v1243
          %vm1419 = vcmp.eq.s32.totalorder %v1194, %v1247
          %vm1420 = vcmp.eq.s32.totalorder %v1195, %v1235
          %vm1421 = vcmp.eq.s32.totalorder %v1195, %v1239
          %vm1422 = vcmp.eq.s32.totalorder %v1195, %v1243
          %vm1423 = vcmp.eq.s32.totalorder %v1195, %v1247
          %vm1424 = vcmp.eq.s32.totalorder %v1196, %v1235
          %vm1425 = vcmp.eq.s32.totalorder %v1196, %v1239
          %vm1426 = vcmp.eq.s32.totalorder %v1196, %v1243
          %vm1427 = vcmp.eq.s32.totalorder %v1196, %v1247
          %vm1428 = vcmp.eq.s32.totalorder %v1197, %v1235
          %vm1429 = vcmp.eq.s32.totalorder %v1197, %v1239
          %vm1430 = vcmp.eq.s32.totalorder %v1197, %v1243
          %vm1431 = vcmp.eq.s32.totalorder %v1197, %v1247
          %vm1432 = vcmp.eq.s32.totalorder %v1198, %v1235
          %vm1433 = vcmp.eq.s32.totalorder %v1198, %v1239
          %vm1434 = vcmp.eq.s32.totalorder %v1198, %v1243
          %vm1435 = vcmp.eq.s32.totalorder %v1198, %v1247
          %vm1436 = vcmp.eq.s32.totalorder %v1199, %v1235
          %vm1437 = vcmp.eq.s32.totalorder %v1199, %v1239
          %vm1438 = vcmp.eq.s32.totalorder %v1199, %v1243
          %vm1439 = vcmp.eq.s32.totalorder %v1199, %v1247
          %vm1440 = vcmp.eq.s32.totalorder %v1200, %v1235
          %vm1441 = vcmp.eq.s32.totalorder %v1200, %v1239
          %vm1442 = vcmp.eq.s32.totalorder %v1200, %v1243
          %vm1443 = vcmp.eq.s32.totalorder %v1200, %v1247
          %vm1444 = vcmp.eq.s32.totalorder %v1201, %v1235
          %vm1445 = vcmp.eq.s32.totalorder %v1201, %v1239
          %vm1446 = vcmp.eq.s32.totalorder %v1201, %v1243
          %vm1447 = vcmp.eq.s32.totalorder %v1201, %v1247
          %vm1448 = vcmp.eq.s32.totalorder %v1202, %v1235
          %vm1449 = vcmp.eq.s32.totalorder %v1202, %v1239
          %vm1450 = vcmp.eq.s32.totalorder %v1202, %v1243
          %vm1451 = vcmp.eq.s32.totalorder %v1202, %v1247
          %vm1452 = vcmp.eq.s32.totalorder %v1203, %v1235
          %vm1453 = vcmp.eq.s32.totalorder %v1203, %v1239
          %vm1454 = vcmp.eq.s32.totalorder %v1203, %v1243
          %vm1455 = vcmp.eq.s32.totalorder %v1203, %v1247
          %vm1456 = vcmp.eq.s32.totalorder %v1204, %v1235
          %vm1457 = vcmp.eq.s32.totalorder %v1204, %v1239
          %vm1458 = vcmp.eq.s32.totalorder %v1204, %v1243
          %vm1459 = vcmp.eq.s32.totalorder %v1204, %v1247
          %vm1460 = vcmp.eq.s32.totalorder %v1205, %v1235
          %vm1461 = vcmp.eq.s32.totalorder %v1205, %v1239
          %vm1462 = vcmp.eq.s32.totalorder %v1205, %v1243
          %vm1463 = vcmp.eq.s32.totalorder %v1205, %v1247
          %vm1464 = vcmp.eq.s32.totalorder %v1206, %v1235
          %vm1465 = vcmp.eq.s32.totalorder %v1206, %v1239
          %vm1466 = vcmp.eq.s32.totalorder %v1206, %v1243
          %vm1467 = vcmp.eq.s32.totalorder %v1206, %v1247
          %vm1468 = vcmp.eq.s32.totalorder %v1207, %v1235
          %vm1469 = vcmp.eq.s32.totalorder %v1207, %v1239
          %vm1470 = vcmp.eq.s32.totalorder %v1207, %v1243
          %vm1471 = vcmp.eq.s32.totalorder %v1207, %v1247
          %vm1472 = vcmp.eq.s32.totalorder %v1208, %v1235
          %vm1473 = vcmp.eq.s32.totalorder %v1208, %v1239
          %vm1474 = vcmp.eq.s32.totalorder %v1208, %v1243
          %vm1475 = vcmp.eq.s32.totalorder %v1208, %v1247
          %vm1476 = vcmp.eq.s32.totalorder %v1209, %v1235
          %vm1477 = vcmp.eq.s32.totalorder %v1209, %v1239
          %vm1478 = vcmp.eq.s32.totalorder %v1209, %v1243
          %vm1479 = vcmp.eq.s32.totalorder %v1209, %v1247
          %vm1480 = vcmp.eq.s32.totalorder %v1210, %v1235
          %vm1481 = vcmp.eq.s32.totalorder %v1210, %v1239
          %vm1482 = vcmp.eq.s32.totalorder %v1210, %v1243
          %vm1483 = vcmp.eq.s32.totalorder %v1210, %v1247
          %vm1484 = vcmp.eq.s32.totalorder %v1211, %v1235
          %vm1485 = vcmp.eq.s32.totalorder %v1211, %v1239
          %vm1486 = vcmp.eq.s32.totalorder %v1211, %v1243
          %vm1487 = vcmp.eq.s32.totalorder %v1211, %v1247
          %vm1488 = vcmp.eq.s32.totalorder %v1212, %v1235
          %vm1489 = vcmp.eq.s32.totalorder %v1212, %v1239
          %vm1490 = vcmp.eq.s32.totalorder %v1212, %v1243
          %vm1491 = vcmp.eq.s32.totalorder %v1212, %v1247
          %vm1492 = vcmp.eq.s32.totalorder %v1213, %v1235
          %vm1493 = vcmp.eq.s32.totalorder %v1213, %v1239
          %vm1494 = vcmp.eq.s32.totalorder %v1213, %v1243
          %vm1495 = vcmp.eq.s32.totalorder %v1213, %v1247
          %vm1496 = vcmp.eq.s32.totalorder %v1214, %v1235
          %vm1497 = vcmp.eq.s32.totalorder %v1214, %v1239
          %vm1498 = vcmp.eq.s32.totalorder %v1214, %v1243
          %vm1499 = vcmp.eq.s32.totalorder %v1214, %v1247
          %vm1500 = vcmp.eq.s32.totalorder %v1215, %v1235
          %vm1501 = vcmp.eq.s32.totalorder %v1215, %v1239
          %vm1502 = vcmp.eq.s32.totalorder %v1215, %v1243
          %vm1503 = vcmp.eq.s32.totalorder %v1215, %v1247
          %v1504 = vsel %vm1248, 1, 0
          %v1505 = vsel %vm1249, 1, 0
          %v1506 = vsel %vm1250, 1, 0
          %v1507 = vsel %vm1251, 1, 0
          %v1508 = vsel %vm1252, 1, 0
          %v1509 = vsel %vm1253, 1, 0
          %v1510 = vsel %vm1254, 1, 0
          %v1511 = vsel %vm1255, 1, 0
          %v1512 = vsel %vm1256, 1, 0
          %v1513 = vsel %vm1257, 1, 0
          %v1514 = vsel %vm1258, 1, 0
          %v1515 = vsel %vm1259, 1, 0
          %v1516 = vsel %vm1260, 1, 0
          %v1517 = vsel %vm1261, 1, 0
          %v1518 = vsel %vm1262, 1, 0
          %v1519 = vsel %vm1263, 1, 0
          %v1520 = vsel %vm1264, 1, 0
          %v1521 = vsel %vm1265, 1, 0
          %v1522 = vsel %vm1266, 1, 0
          %v1523 = vsel %vm1267, 1, 0
          %v1524 = vsel %vm1268, 1, 0
          %v1525 = vsel %vm1269, 1, 0
          %v1526 = vsel %vm1270, 1, 0
          %v1527 = vsel %vm1271, 1, 0
          %v1528 = vsel %vm1272, 1, 0
          %v1529 = vsel %vm1273, 1, 0
          %v1530 = vsel %vm1274, 1, 0
          %v1531 = vsel %vm1275, 1, 0
          %v1532 = vsel %vm1276, 1, 0
          %v1533 = vsel %vm1277, 1, 0
          %v1534 = vsel %vm1278, 1, 0
          %v1535 = vsel %vm1279, 1, 0
          %v1536 = vsel %vm1280, 1, 0
          %v1537 = vsel %vm1281, 1, 0
          %v1538 = vsel %vm1282, 1, 0
          %v1539 = vsel %vm1283, 1, 0
          %v1540 = vsel %vm1284, 1, 0
          %v1541 = vsel %vm1285, 1, 0
          %v1542 = vsel %vm1286, 1, 0
          %v1543 = vsel %vm1287, 1, 0
          %v1544 = vsel %vm1288, 1, 0
          %v1545 = vsel %vm1289, 1, 0
          %v1546 = vsel %vm1290, 1, 0
          %v1547 = vsel %vm1291, 1, 0
          %v1548 = vsel %vm1292, 1, 0
          %v1549 = vsel %vm1293, 1, 0
          %v1550 = vsel %vm1294, 1, 0
          %v1551 = vsel %vm1295, 1, 0
          %v1552 = vsel %vm1296, 1, 0
          %v1553 = vsel %vm1297, 1, 0
          %v1554 = vsel %vm1298, 1, 0
          %v1555 = vsel %vm1299, 1, 0
          %v1556 = vsel %vm1300, 1, 0
          %v1557 = vsel %vm1301, 1, 0
          %v1558 = vsel %vm1302, 1, 0
          %v1559 = vsel %vm1303, 1, 0
          %v1560 = vsel %vm1304, 1, 0
          %v1561 = vsel %vm1305, 1, 0
          %v1562 = vsel %vm1306, 1, 0
          %v1563 = vsel %vm1307, 1, 0
          %v1564 = vsel %vm1308, 1, 0
          %v1565 = vsel %vm1309, 1, 0
          %v1566 = vsel %vm1310, 1, 0
          %v1567 = vsel %vm1311, 1, 0
          %v1568 = vsel %vm1312, 1, 0
          %v1569 = vsel %vm1313, 1, 0
          %v1570 = vsel %vm1314, 1, 0
          %v1571 = vsel %vm1315, 1, 0
          %v1572 = vsel %vm1316, 1, 0
          %v1573 = vsel %vm1317, 1, 0
          %v1574 = vsel %vm1318, 1, 0
          %v1575 = vsel %vm1319, 1, 0
          %v1576 = vsel %vm1320, 1, 0
          %v1577 = vsel %vm1321, 1, 0
          %v1578 = vsel %vm1322, 1, 0
          %v1579 = vsel %vm1323, 1, 0
          %v1580 = vsel %vm1324, 1, 0
          %v1581 = vsel %vm1325, 1, 0
          %v1582 = vsel %vm1326, 1, 0
          %v1583 = vsel %vm1327, 1, 0
          %v1584 = vsel %vm1328, 1, 0
          %v1585 = vsel %vm1329, 1, 0
          %v1586 = vsel %vm1330, 1, 0
          %v1587 = vsel %vm1331, 1, 0
          %v1588 = vsel %vm1332, 1, 0
          %v1589 = vsel %vm1333, 1, 0
          %v1590 = vsel %vm1334, 1, 0
          %v1591 = vsel %vm1335, 1, 0
          %v1592 = vsel %vm1336, 1, 0
          %v1593 = vsel %vm1337, 1, 0
          %v1594 = vsel %vm1338, 1, 0
          %v1595 = vsel %vm1339, 1, 0
          %v1596 = vsel %vm1340, 1, 0
          %v1597 = vsel %vm1341, 1, 0
          %v1598 = vsel %vm1342, 1, 0
          %v1599 = vsel %vm1343, 1, 0
          %v1600 = vsel %vm1344, 1, 0
          %v1601 = vsel %vm1345, 1, 0
          %v1602 = vsel %vm1346, 1, 0
          %v1603 = vsel %vm1347, 1, 0
          %v1604 = vsel %vm1348, 1, 0
          %v1605 = vsel %vm1349, 1, 0
          %v1606 = vsel %vm1350, 1, 0
          %v1607 = vsel %vm1351, 1, 0
          %v1608 = vsel %vm1352, 1, 0
          %v1609 = vsel %vm1353, 1, 0
          %v1610 = vsel %vm1354, 1, 0
          %v1611 = vsel %vm1355, 1, 0
          %v1612 = vsel %vm1356, 1, 0
          %v1613 = vsel %vm1357, 1, 0
          %v1614 = vsel %vm1358, 1, 0
          %v1615 = vsel %vm1359, 1, 0
          %v1616 = vsel %vm1360, 1, 0
          %v1617 = vsel %vm1361, 1, 0
          %v1618 = vsel %vm1362, 1, 0
          %v1619 = vsel %vm1363, 1, 0
          %v1620 = vsel %vm1364, 1, 0
          %v1621 = vsel %vm1365, 1, 0
          %v1622 = vsel %vm1366, 1, 0
          %v1623 = vsel %vm1367, 1, 0
          %v1624 = vsel %vm1368, 1, 0
          %v1625 = vsel %vm1369, 1, 0
          %v1626 = vsel %vm1370, 1, 0
          %v1627 = vsel %vm1371, 1, 0
          %v1628 = vsel %vm1372, 1, 0
          %v1629 = vsel %vm1373, 1, 0
          %v1630 = vsel %vm1374, 1, 0
          %v1631 = vsel %vm1375, 1, 0
          %v1632 = vsel %vm1376, 1, 0
          %v1633 = vsel %vm1377, 1, 0
          %v1634 = vsel %vm1378, 1, 0
          %v1635 = vsel %vm1379, 1, 0
          %v1636 = vsel %vm1380, 1, 0
          %v1637 = vsel %vm1381, 1, 0
          %v1638 = vsel %vm1382, 1, 0
          %v1639 = vsel %vm1383, 1, 0
          %v1640 = vsel %vm1384, 1, 0
          %v1641 = vsel %vm1385, 1, 0
          %v1642 = vsel %vm1386, 1, 0
          %v1643 = vsel %vm1387, 1, 0
          %v1644 = vsel %vm1388, 1, 0
          %v1645 = vsel %vm1389, 1, 0
          %v1646 = vsel %vm1390, 1, 0
          %v1647 = vsel %vm1391, 1, 0
          %v1648 = vsel %vm1392, 1, 0
          %v1649 = vsel %vm1393, 1, 0
          %v1650 = vsel %vm1394, 1, 0
          %v1651 = vsel %vm1395, 1, 0
          %v1652 = vsel %vm1396, 1, 0
          %v1653 = vsel %vm1397, 1, 0
          %v1654 = vsel %vm1398, 1, 0
          %v1655 = vsel %vm1399, 1, 0
          %v1656 = vsel %vm1400, 1, 0
          %v1657 = vsel %vm1401, 1, 0
          %v1658 = vsel %vm1402, 1, 0
          %v1659 = vsel %vm1403, 1, 0
          %v1660 = vsel %vm1404, 1, 0
          %v1661 = vsel %vm1405, 1, 0
          %v1662 = vsel %vm1406, 1, 0
          %v1663 = vsel %vm1407, 1, 0
          %v1664 = vsel %vm1408, 1, 0
          %v1665 = vsel %vm1409, 1, 0
          %v1666 = vsel %vm1410, 1, 0
          %v1667 = vsel %vm1411, 1, 0
          %v1668 = vsel %vm1412, 1, 0
          %v1669 = vsel %vm1413, 1, 0
          %v1670 = vsel %vm1414, 1, 0
          %v1671 = vsel %vm1415, 1, 0
          %v1672 = vsel %vm1416, 1, 0
          %v1673 = vsel %vm1417, 1, 0
          %v1674 = vsel %vm1418, 1, 0
          %v1675 = vsel %vm1419, 1, 0
          %v1676 = vsel %vm1420, 1, 0
          %v1677 = vsel %vm1421, 1, 0
          %v1678 = vsel %vm1422, 1, 0
          %v1679 = vsel %vm1423, 1, 0
          %v1680 = vsel %vm1424, 1, 0
          %v1681 = vsel %vm1425, 1, 0
          %v1682 = vsel %vm1426, 1, 0
          %v1683 = vsel %vm1427, 1, 0
          %v1684 = vsel %vm1428, 1, 0
          %v1685 = vsel %vm1429, 1, 0
          %v1686 = vsel %vm1430, 1, 0
          %v1687 = vsel %vm1431, 1, 0
          %v1688 = vsel %vm1432, 1, 0
          %v1689 = vsel %vm1433, 1, 0
          %v1690 = vsel %vm1434, 1, 0
          %v1691 = vsel %vm1435, 1, 0
          %v1692 = vsel %vm1436, 1, 0
          %v1693 = vsel %vm1437, 1, 0
          %v1694 = vsel %vm1438, 1, 0
          %v1695 = vsel %vm1439, 1, 0
          %v1696 = vsel %vm1440, 1, 0
          %v1697 = vsel %vm1441, 1, 0
          %v1698 = vsel %vm1442, 1, 0
          %v1699 = vsel %vm1443, 1, 0
          %v1700 = vsel %vm1444, 1, 0
          %v1701 = vsel %vm1445, 1, 0
          %v1702 = vsel %vm1446, 1, 0
          %v1703 = vsel %vm1447, 1, 0
          %v1704 = vsel %vm1448, 1, 0
          %v1705 = vsel %vm1449, 1, 0
          %v1706 = vsel %vm1450, 1, 0
          %v1707 = vsel %vm1451, 1, 0
          %v1708 = vsel %vm1452, 1, 0
          %v1709 = vsel %vm1453, 1, 0
          %v1710 = vsel %vm1454, 1, 0
          %v1711 = vsel %vm1455, 1, 0
          %v1712 = vsel %vm1456, 1, 0
          %v1713 = vsel %vm1457, 1, 0
          %v1714 = vsel %vm1458, 1, 0
          %v1715 = vsel %vm1459, 1, 0
          %v1716 = vsel %vm1460, 1, 0
          %v1717 = vsel %vm1461, 1, 0
          %v1718 = vsel %vm1462, 1, 0
          %v1719 = vsel %vm1463, 1, 0
          %v1720 = vsel %vm1464, 1, 0
          %v1721 = vsel %vm1465, 1, 0
          %v1722 = vsel %vm1466, 1, 0
          %v1723 = vsel %vm1467, 1, 0
          %v1724 = vsel %vm1468, 1, 0
          %v1725 = vsel %vm1469, 1, 0
          %v1726 = vsel %vm1470, 1, 0
          %v1727 = vsel %vm1471, 1, 0
          %v1728 = vsel %vm1472, 1, 0
          %v1729 = vsel %vm1473, 1, 0
          %v1730 = vsel %vm1474, 1, 0
          %v1731 = vsel %vm1475, 1, 0
          %v1732 = vsel %vm1476, 1, 0
          %v1733 = vsel %vm1477, 1, 0
          %v1734 = vsel %vm1478, 1, 0
          %v1735 = vsel %vm1479, 1, 0
          %v1736 = vsel %vm1480, 1, 0
          %v1737 = vsel %vm1481, 1, 0
          %v1738 = vsel %vm1482, 1, 0
          %v1739 = vsel %vm1483, 1, 0
          %v1740 = vsel %vm1484, 1, 0
          %v1741 = vsel %vm1485, 1, 0
          %v1742 = vsel %vm1486, 1, 0
          %v1743 = vsel %vm1487, 1, 0
          %v1744 = vsel %vm1488, 1, 0
          %v1745 = vsel %vm1489, 1, 0
          %v1746 = vsel %vm1490, 1, 0
          %v1747 = vsel %vm1491, 1, 0
          %v1748 = vsel %vm1492, 1, 0
          %v1749 = vsel %vm1493, 1, 0
          %v1750 = vsel %vm1494, 1, 0
          %v1751 = vsel %vm1495, 1, 0
          %v1752 = vsel %vm1496, 1, 0
          %v1753 = vsel %vm1497, 1, 0
          %v1754 = vsel %vm1498, 1, 0
          %v1755 = vsel %vm1499, 1, 0
          %v1756 = vsel %vm1500, 1, 0
          %v1757 = vsel %vm1501, 1, 0
          %v1758 = vsel %vm1502, 1, 0
          %v1759 = vsel %vm1503, 1, 0
          %v1760 = vcvt.s32.f32 %v1504
          %v1761 = vcvt.s32.f32 %v1505
          %v1762 = vcvt.s32.f32 %v1506
          %v1763 = vcvt.s32.f32 %v1507
          %v1764 = vcvt.s32.f32 %v1508
          %v1765 = vcvt.s32.f32 %v1509
          %v1766 = vcvt.s32.f32 %v1510
          %v1767 = vcvt.s32.f32 %v1511
          %v1768 = vcvt.s32.f32 %v1512
          %v1769 = vcvt.s32.f32 %v1513
          %v1770 = vcvt.s32.f32 %v1514
          %v1771 = vcvt.s32.f32 %v1515
          %v1772 = vcvt.s32.f32 %v1516
          %v1773 = vcvt.s32.f32 %v1517
          %v1774 = vcvt.s32.f32 %v1518
          %v1775 = vcvt.s32.f32 %v1519
          %v1776 = vcvt.s32.f32 %v1520
          %v1777 = vcvt.s32.f32 %v1521
          %v1778 = vcvt.s32.f32 %v1522
          %v1779 = vcvt.s32.f32 %v1523
          %v1780 = vcvt.s32.f32 %v1524
          %v1781 = vcvt.s32.f32 %v1525
          %v1782 = vcvt.s32.f32 %v1526
          %v1783 = vcvt.s32.f32 %v1527
          %v1784 = vcvt.s32.f32 %v1528
          %v1785 = vcvt.s32.f32 %v1529
          %v1786 = vcvt.s32.f32 %v1530
          %v1787 = vcvt.s32.f32 %v1531
          %v1788 = vcvt.s32.f32 %v1532
          %v1789 = vcvt.s32.f32 %v1533
          %v1790 = vcvt.s32.f32 %v1534
          %v1791 = vcvt.s32.f32 %v1535
          %v1792 = vcvt.s32.f32 %v1536
          %v1793 = vcvt.s32.f32 %v1537
          %v1794 = vcvt.s32.f32 %v1538
          %v1795 = vcvt.s32.f32 %v1539
          %v1796 = vcvt.s32.f32 %v1540
          %v1797 = vcvt.s32.f32 %v1541
          %v1798 = vcvt.s32.f32 %v1542
          %v1799 = vcvt.s32.f32 %v1543
          %v1800 = vcvt.s32.f32 %v1544
          %v1801 = vcvt.s32.f32 %v1545
          %v1802 = vcvt.s32.f32 %v1546
          %v1803 = vcvt.s32.f32 %v1547
          %v1804 = vcvt.s32.f32 %v1548
          %v1805 = vcvt.s32.f32 %v1549
          %v1806 = vcvt.s32.f32 %v1550
          %v1807 = vcvt.s32.f32 %v1551
          %v1808 = vcvt.s32.f32 %v1552
          %v1809 = vcvt.s32.f32 %v1553
          %v1810 = vcvt.s32.f32 %v1554
          %v1811 = vcvt.s32.f32 %v1555
          %v1812 = vcvt.s32.f32 %v1556
          %v1813 = vcvt.s32.f32 %v1557
          %v1814 = vcvt.s32.f32 %v1558
          %v1815 = vcvt.s32.f32 %v1559
          %v1816 = vcvt.s32.f32 %v1560
          %v1817 = vcvt.s32.f32 %v1561
          %v1818 = vcvt.s32.f32 %v1562
          %v1819 = vcvt.s32.f32 %v1563
          %v1820 = vcvt.s32.f32 %v1564
          %v1821 = vcvt.s32.f32 %v1565
          %v1822 = vcvt.s32.f32 %v1566
          %v1823 = vcvt.s32.f32 %v1567
          %v1824 = vcvt.s32.f32 %v1568
          %v1825 = vcvt.s32.f32 %v1569
          %v1826 = vcvt.s32.f32 %v1570
          %v1827 = vcvt.s32.f32 %v1571
          %v1828 = vcvt.s32.f32 %v1572
          %v1829 = vcvt.s32.f32 %v1573
          %v1830 = vcvt.s32.f32 %v1574
          %v1831 = vcvt.s32.f32 %v1575
          %v1832 = vcvt.s32.f32 %v1576
          %v1833 = vcvt.s32.f32 %v1577
          %v1834 = vcvt.s32.f32 %v1578
          %v1835 = vcvt.s32.f32 %v1579
          %v1836 = vcvt.s32.f32 %v1580
          %v1837 = vcvt.s32.f32 %v1581
          %v1838 = vcvt.s32.f32 %v1582
          %v1839 = vcvt.s32.f32 %v1583
          %v1840 = vcvt.s32.f32 %v1584
          %v1841 = vcvt.s32.f32 %v1585
          %v1842 = vcvt.s32.f32 %v1586
          %v1843 = vcvt.s32.f32 %v1587
          %v1844 = vcvt.s32.f32 %v1588
          %v1845 = vcvt.s32.f32 %v1589
          %v1846 = vcvt.s32.f32 %v1590
          %v1847 = vcvt.s32.f32 %v1591
          %v1848 = vcvt.s32.f32 %v1592
          %v1849 = vcvt.s32.f32 %v1593
          %v1850 = vcvt.s32.f32 %v1594
          %v1851 = vcvt.s32.f32 %v1595
          %v1852 = vcvt.s32.f32 %v1596
          %v1853 = vcvt.s32.f32 %v1597
          %v1854 = vcvt.s32.f32 %v1598
          %v1855 = vcvt.s32.f32 %v1599
          %v1856 = vcvt.s32.f32 %v1600
          %v1857 = vcvt.s32.f32 %v1601
          %v1858 = vcvt.s32.f32 %v1602
          %v1859 = vcvt.s32.f32 %v1603
          %v1860 = vcvt.s32.f32 %v1604
          %v1861 = vcvt.s32.f32 %v1605
          %v1862 = vcvt.s32.f32 %v1606
          %v1863 = vcvt.s32.f32 %v1607
          %v1864 = vcvt.s32.f32 %v1608
          %v1865 = vcvt.s32.f32 %v1609
          %v1866 = vcvt.s32.f32 %v1610
          %v1867 = vcvt.s32.f32 %v1611
          %v1868 = vcvt.s32.f32 %v1612
          %v1869 = vcvt.s32.f32 %v1613
          %v1870 = vcvt.s32.f32 %v1614
          %v1871 = vcvt.s32.f32 %v1615
          %v1872 = vcvt.s32.f32 %v1616
          %v1873 = vcvt.s32.f32 %v1617
          %v1874 = vcvt.s32.f32 %v1618
          %v1875 = vcvt.s32.f32 %v1619
          %v1876 = vcvt.s32.f32 %v1620
          %v1877 = vcvt.s32.f32 %v1621
          %v1878 = vcvt.s32.f32 %v1622
          %v1879 = vcvt.s32.f32 %v1623
          %v1880 = vcvt.s32.f32 %v1624
          %v1881 = vcvt.s32.f32 %v1625
          %v1882 = vcvt.s32.f32 %v1626
          %v1883 = vcvt.s32.f32 %v1627
          %v1884 = vcvt.s32.f32 %v1628
          %v1885 = vcvt.s32.f32 %v1629
          %v1886 = vcvt.s32.f32 %v1630
          %v1887 = vcvt.s32.f32 %v1631
          %v1888 = vcvt.s32.f32 %v1632
          %v1889 = vcvt.s32.f32 %v1633
          %v1890 = vcvt.s32.f32 %v1634
          %v1891 = vcvt.s32.f32 %v1635
          %v1892 = vcvt.s32.f32 %v1636
          %v1893 = vcvt.s32.f32 %v1637
          %v1894 = vcvt.s32.f32 %v1638
          %v1895 = vcvt.s32.f32 %v1639
          %v1896 = vcvt.s32.f32 %v1640
          %v1897 = vcvt.s32.f32 %v1641
          %v1898 = vcvt.s32.f32 %v1642
          %v1899 = vcvt.s32.f32 %v1643
          %v1900 = vcvt.s32.f32 %v1644
          %v1901 = vcvt.s32.f32 %v1645
          %v1902 = vcvt.s32.f32 %v1646
          %v1903 = vcvt.s32.f32 %v1647
          %v1904 = vcvt.s32.f32 %v1648
          %v1905 = vcvt.s32.f32 %v1649
          %v1906 = vcvt.s32.f32 %v1650
          %v1907 = vcvt.s32.f32 %v1651
          %v1908 = vcvt.s32.f32 %v1652
          %v1909 = vcvt.s32.f32 %v1653
          %v1910 = vcvt.s32.f32 %v1654
          %v1911 = vcvt.s32.f32 %v1655
          %v1912 = vcvt.s32.f32 %v1656
          %v1913 = vcvt.s32.f32 %v1657
          %v1914 = vcvt.s32.f32 %v1658
          %v1915 = vcvt.s32.f32 %v1659
          %v1916 = vcvt.s32.f32 %v1660
          %v1917 = vcvt.s32.f32 %v1661
          %v1918 = vcvt.s32.f32 %v1662
          %v1919 = vcvt.s32.f32 %v1663
          %v1920 = vcvt.s32.f32 %v1664
          %v1921 = vcvt.s32.f32 %v1665
          %v1922 = vcvt.s32.f32 %v1666
          %v1923 = vcvt.s32.f32 %v1667
          %v1924 = vcvt.s32.f32 %v1668
          %v1925 = vcvt.s32.f32 %v1669
          %v1926 = vcvt.s32.f32 %v1670
          %v1927 = vcvt.s32.f32 %v1671
          %v1928 = vcvt.s32.f32 %v1672
          %v1929 = vcvt.s32.f32 %v1673
          %v1930 = vcvt.s32.f32 %v1674
          %v1931 = vcvt.s32.f32 %v1675
          %v1932 = vcvt.s32.f32 %v1676
          %v1933 = vcvt.s32.f32 %v1677
          %v1934 = vcvt.s32.f32 %v1678
          %v1935 = vcvt.s32.f32 %v1679
          %v1936 = vcvt.s32.f32 %v1680
          %v1937 = vcvt.s32.f32 %v1681
          %v1938 = vcvt.s32.f32 %v1682
          %v1939 = vcvt.s32.f32 %v1683
          %v1940 = vcvt.s32.f32 %v1684
          %v1941 = vcvt.s32.f32 %v1685
          %v1942 = vcvt.s32.f32 %v1686
          %v1943 = vcvt.s32.f32 %v1687
          %v1944 = vcvt.s32.f32 %v1688
          %v1945 = vcvt.s32.f32 %v1689
          %v1946 = vcvt.s32.f32 %v1690
          %v1947 = vcvt.s32.f32 %v1691
          %v1948 = vcvt.s32.f32 %v1692
          %v1949 = vcvt.s32.f32 %v1693
          %v1950 = vcvt.s32.f32 %v1694
          %v1951 = vcvt.s32.f32 %v1695
          %v1952 = vcvt.s32.f32 %v1696
          %v1953 = vcvt.s32.f32 %v1697
          %v1954 = vcvt.s32.f32 %v1698
          %v1955 = vcvt.s32.f32 %v1699
          %v1956 = vcvt.s32.f32 %v1700
          %v1957 = vcvt.s32.f32 %v1701
          %v1958 = vcvt.s32.f32 %v1702
          %v1959 = vcvt.s32.f32 %v1703
          %v1960 = vcvt.s32.f32 %v1704
          %v1961 = vcvt.s32.f32 %v1705
          %v1962 = vcvt.s32.f32 %v1706
          %v1963 = vcvt.s32.f32 %v1707
          %v1964 = vcvt.s32.f32 %v1708
          %v1965 = vcvt.s32.f32 %v1709
          %v1966 = vcvt.s32.f32 %v1710
          %v1967 = vcvt.s32.f32 %v1711
          %v1968 = vcvt.s32.f32 %v1712
          %v1969 = vcvt.s32.f32 %v1713
          %v1970 = vcvt.s32.f32 %v1714
          %v1971 = vcvt.s32.f32 %v1715
          %v1972 = vcvt.s32.f32 %v1716
          %v1973 = vcvt.s32.f32 %v1717
          %v1974 = vcvt.s32.f32 %v1718
          %v1975 = vcvt.s32.f32 %v1719
          %v1976 = vcvt.s32.f32 %v1720
          %v1977 = vcvt.s32.f32 %v1721
          %v1978 = vcvt.s32.f32 %v1722
          %v1979 = vcvt.s32.f32 %v1723
          %v1980 = vcvt.s32.f32 %v1724
          %v1981 = vcvt.s32.f32 %v1725
          %v1982 = vcvt.s32.f32 %v1726
          %v1983 = vcvt.s32.f32 %v1727
          %v1984 = vcvt.s32.f32 %v1728
          %v1985 = vcvt.s32.f32 %v1729
          %v1986 = vcvt.s32.f32 %v1730
          %v1987 = vcvt.s32.f32 %v1731
          %v1988 = vcvt.s32.f32 %v1732
          %v1989 = vcvt.s32.f32 %v1733
          %v1990 = vcvt.s32.f32 %v1734
          %v1991 = vcvt.s32.f32 %v1735
          %v1992 = vcvt.s32.f32 %v1736
          %v1993 = vcvt.s32.f32 %v1737
          %v1994 = vcvt.s32.f32 %v1738
          %v1995 = vcvt.s32.f32 %v1739
          %v1996 = vcvt.s32.f32 %v1740
          %v1997 = vcvt.s32.f32 %v1741
          %v1998 = vcvt.s32.f32 %v1742
          %v1999 = vcvt.s32.f32 %v1743
          %v2000 = vcvt.s32.f32 %v1744
          %v2001 = vcvt.s32.f32 %v1745
          %v2002 = vcvt.s32.f32 %v1746
          %v2003 = vcvt.s32.f32 %v1747
          %v2004 = vcvt.s32.f32 %v1748
          %v2005 = vcvt.s32.f32 %v1749
          %v2006 = vcvt.s32.f32 %v1750
          %v2007 = vcvt.s32.f32 %v1751
          %v2008 = vcvt.s32.f32 %v1752
          %v2009 = vcvt.s32.f32 %v1753
          %v2010 = vcvt.s32.f32 %v1754
          %v2011 = vcvt.s32.f32 %v1755
          %v2012 = vcvt.s32.f32 %v1756
          %v2013 = vcvt.s32.f32 %v1757
          %v2014 = vcvt.s32.f32 %v1758
          %v2015 = vcvt.s32.f32 %v1759
          %v2016 = vlaneseq
          %v2017 = vshrl.u32 %v2016, 7
          %v2018 = vsub.s32 1, %v2017
          %v2019 = vrot.slane %v1153, %v2018
          %v2020 = vlaneseq
          %v2021 = vshrl.u32 %v2020, 7
          %v2022 = vsub.s32 3, %v2021
          %v2023 = vrot.slane %v1153, %v2022
          %v2024 = vlaneseq
          %v2025 = vshrl.u32 %v2024, 7
          %v2026 = vsub.s32 5, %v2025
          %v2027 = vrot.slane %v1153, %v2026
          %v2028 = vlaneseq
          %v2029 = vshrl.u32 %v2028, 7
          %v2030 = vsub.s32 7, %v2029
          %v2031 = vrot.slane %v1153, %v2030
          %v2032 = vlaneseq
          %v2033 = vshrl.u32 %v2032, 7
          %v2034 = vsub.s32 1, %v2033
          %v2035 = vrot.slane %v2019, %v2034
          %v2036 = vlaneseq
          %v2037 = vshrl.u32 %v2036, 7
          %v2038 = vsub.s32 1, %v2037
          %v2039 = vrot.slane %v2023, %v2038
          %v2040 = vlaneseq
          %v2041 = vshrl.u32 %v2040, 7
          %v2042 = vsub.s32 1, %v2041
          %v2043 = vrot.slane %v2027, %v2042
          %v2044 = vlaneseq
          %v2045 = vshrl.u32 %v2044, 7
          %v2046 = vsub.s32 1, %v2045
          %v2047 = vrot.slane %v2031, %v2046
          %vm2048 = vcmp.eq.s32.totalorder %v354, %v2035
          %vm2049 = vcmp.eq.s32.totalorder %v354, %v2039
          %vm2050 = vcmp.eq.s32.totalorder %v354, %v2043
          %vm2051 = vcmp.eq.s32.totalorder %v354, %v2047
          %vm2052 = vcmp.eq.s32.totalorder %v355, %v2035
          %vm2053 = vcmp.eq.s32.totalorder %v355, %v2039
          %vm2054 = vcmp.eq.s32.totalorder %v355, %v2043
          %vm2055 = vcmp.eq.s32.totalorder %v355, %v2047
          %vm2056 = vcmp.eq.s32.totalorder %v1154, %v2035
          %vm2057 = vcmp.eq.s32.totalorder %v1154, %v2039
          %vm2058 = vcmp.eq.s32.totalorder %v1154, %v2043
          %vm2059 = vcmp.eq.s32.totalorder %v1154, %v2047
          %vm2060 = vcmp.eq.s32.totalorder %v1155, %v2035
          %vm2061 = vcmp.eq.s32.totalorder %v1155, %v2039
          %vm2062 = vcmp.eq.s32.totalorder %v1155, %v2043
          %vm2063 = vcmp.eq.s32.totalorder %v1155, %v2047
          %vm2064 = vcmp.eq.s32.totalorder %v1156, %v2035
          %vm2065 = vcmp.eq.s32.totalorder %v1156, %v2039
          %vm2066 = vcmp.eq.s32.totalorder %v1156, %v2043
          %vm2067 = vcmp.eq.s32.totalorder %v1156, %v2047
          %vm2068 = vcmp.eq.s32.totalorder %v1157, %v2035
          %vm2069 = vcmp.eq.s32.totalorder %v1157, %v2039
          %vm2070 = vcmp.eq.s32.totalorder %v1157, %v2043
          %vm2071 = vcmp.eq.s32.totalorder %v1157, %v2047
          %vm2072 = vcmp.eq.s32.totalorder %v1158, %v2035
          %vm2073 = vcmp.eq.s32.totalorder %v1158, %v2039
          %vm2074 = vcmp.eq.s32.totalorder %v1158, %v2043
          %vm2075 = vcmp.eq.s32.totalorder %v1158, %v2047
          %vm2076 = vcmp.eq.s32.totalorder %v1159, %v2035
          %vm2077 = vcmp.eq.s32.totalorder %v1159, %v2039
          %vm2078 = vcmp.eq.s32.totalorder %v1159, %v2043
          %vm2079 = vcmp.eq.s32.totalorder %v1159, %v2047
          %vm2080 = vcmp.eq.s32.totalorder %v1160, %v2035
          %vm2081 = vcmp.eq.s32.totalorder %v1160, %v2039
          %vm2082 = vcmp.eq.s32.totalorder %v1160, %v2043
          %vm2083 = vcmp.eq.s32.totalorder %v1160, %v2047
          %vm2084 = vcmp.eq.s32.totalorder %v1161, %v2035
          %vm2085 = vcmp.eq.s32.totalorder %v1161, %v2039
          %vm2086 = vcmp.eq.s32.totalorder %v1161, %v2043
          %vm2087 = vcmp.eq.s32.totalorder %v1161, %v2047
          %vm2088 = vcmp.eq.s32.totalorder %v1162, %v2035
          %vm2089 = vcmp.eq.s32.totalorder %v1162, %v2039
          %vm2090 = vcmp.eq.s32.totalorder %v1162, %v2043
          %vm2091 = vcmp.eq.s32.totalorder %v1162, %v2047
          %vm2092 = vcmp.eq.s32.totalorder %v1163, %v2035
          %vm2093 = vcmp.eq.s32.totalorder %v1163, %v2039
          %vm2094 = vcmp.eq.s32.totalorder %v1163, %v2043
          %vm2095 = vcmp.eq.s32.totalorder %v1163, %v2047
          %vm2096 = vcmp.eq.s32.totalorder %v1164, %v2035
          %vm2097 = vcmp.eq.s32.totalorder %v1164, %v2039
          %vm2098 = vcmp.eq.s32.totalorder %v1164, %v2043
          %vm2099 = vcmp.eq.s32.totalorder %v1164, %v2047
          %vm2100 = vcmp.eq.s32.totalorder %v1165, %v2035
          %vm2101 = vcmp.eq.s32.totalorder %v1165, %v2039
          %vm2102 = vcmp.eq.s32.totalorder %v1165, %v2043
          %vm2103 = vcmp.eq.s32.totalorder %v1165, %v2047
          %vm2104 = vcmp.eq.s32.totalorder %v1166, %v2035
          %vm2105 = vcmp.eq.s32.totalorder %v1166, %v2039
          %vm2106 = vcmp.eq.s32.totalorder %v1166, %v2043
          %vm2107 = vcmp.eq.s32.totalorder %v1166, %v2047
          %vm2108 = vcmp.eq.s32.totalorder %v1167, %v2035
          %vm2109 = vcmp.eq.s32.totalorder %v1167, %v2039
          %vm2110 = vcmp.eq.s32.totalorder %v1167, %v2043
          %vm2111 = vcmp.eq.s32.totalorder %v1167, %v2047
          %vm2112 = vcmp.eq.s32.totalorder %v1168, %v2035
          %vm2113 = vcmp.eq.s32.totalorder %v1168, %v2039
          %vm2114 = vcmp.eq.s32.totalorder %v1168, %v2043
          %vm2115 = vcmp.eq.s32.totalorder %v1168, %v2047
          %vm2116 = vcmp.eq.s32.totalorder %v1169, %v2035
          %vm2117 = vcmp.eq.s32.totalorder %v1169, %v2039
          %vm2118 = vcmp.eq.s32.totalorder %v1169, %v2043
          %vm2119 = vcmp.eq.s32.totalorder %v1169, %v2047
          %vm2120 = vcmp.eq.s32.totalorder %v1170, %v2035
          %vm2121 = vcmp.eq.s32.totalorder %v1170, %v2039
          %vm2122 = vcmp.eq.s32.totalorder %v1170, %v2043
          %vm2123 = vcmp.eq.s32.totalorder %v1170, %v2047
          %vm2124 = vcmp.eq.s32.totalorder %v1171, %v2035
          %vm2125 = vcmp.eq.s32.totalorder %v1171, %v2039
          %vm2126 = vcmp.eq.s32.totalorder %v1171, %v2043
          %vm2127 = vcmp.eq.s32.totalorder %v1171, %v2047
          %vm2128 = vcmp.eq.s32.totalorder %v1172, %v2035
          %vm2129 = vcmp.eq.s32.totalorder %v1172, %v2039
          %vm2130 = vcmp.eq.s32.totalorder %v1172, %v2043
          %vm2131 = vcmp.eq.s32.totalorder %v1172, %v2047
          %vm2132 = vcmp.eq.s32.totalorder %v1173, %v2035
          %vm2133 = vcmp.eq.s32.totalorder %v1173, %v2039
          %vm2134 = vcmp.eq.s32.totalorder %v1173, %v2043
          %vm2135 = vcmp.eq.s32.totalorder %v1173, %v2047
          %vm2136 = vcmp.eq.s32.totalorder %v1174, %v2035
          %vm2137 = vcmp.eq.s32.totalorder %v1174, %v2039
          %vm2138 = vcmp.eq.s32.totalorder %v1174, %v2043
          %vm2139 = vcmp.eq.s32.totalorder %v1174, %v2047
          %vm2140 = vcmp.eq.s32.totalorder %v1175, %v2035
          %vm2141 = vcmp.eq.s32.totalorder %v1175, %v2039
          %vm2142 = vcmp.eq.s32.totalorder %v1175, %v2043
          %vm2143 = vcmp.eq.s32.totalorder %v1175, %v2047
          %vm2144 = vcmp.eq.s32.totalorder %v1176, %v2035
          %vm2145 = vcmp.eq.s32.totalorder %v1176, %v2039
          %vm2146 = vcmp.eq.s32.totalorder %v1176, %v2043
          %vm2147 = vcmp.eq.s32.totalorder %v1176, %v2047
          %vm2148 = vcmp.eq.s32.totalorder %v1177, %v2035
          %vm2149 = vcmp.eq.s32.totalorder %v1177, %v2039
          %vm2150 = vcmp.eq.s32.totalorder %v1177, %v2043
          %vm2151 = vcmp.eq.s32.totalorder %v1177, %v2047
          %vm2152 = vcmp.eq.s32.totalorder %v1178, %v2035
          %vm2153 = vcmp.eq.s32.totalorder %v1178, %v2039
          %vm2154 = vcmp.eq.s32.totalorder %v1178, %v2043
          %vm2155 = vcmp.eq.s32.totalorder %v1178, %v2047
          %vm2156 = vcmp.eq.s32.totalorder %v1179, %v2035
          %vm2157 = vcmp.eq.s32.totalorder %v1179, %v2039
          %vm2158 = vcmp.eq.s32.totalorder %v1179, %v2043
          %vm2159 = vcmp.eq.s32.totalorder %v1179, %v2047
          %vm2160 = vcmp.eq.s32.totalorder %v1180, %v2035
          %vm2161 = vcmp.eq.s32.totalorder %v1180, %v2039
          %vm2162 = vcmp.eq.s32.totalorder %v1180, %v2043
          %vm2163 = vcmp.eq.s32.totalorder %v1180, %v2047
          %vm2164 = vcmp.eq.s32.totalorder %v1181, %v2035
          %vm2165 = vcmp.eq.s32.totalorder %v1181, %v2039
          %vm2166 = vcmp.eq.s32.totalorder %v1181, %v2043
          %vm2167 = vcmp.eq.s32.totalorder %v1181, %v2047
          %vm2168 = vcmp.eq.s32.totalorder %v1182, %v2035
          %vm2169 = vcmp.eq.s32.totalorder %v1182, %v2039
          %vm2170 = vcmp.eq.s32.totalorder %v1182, %v2043
          %vm2171 = vcmp.eq.s32.totalorder %v1182, %v2047
          %vm2172 = vcmp.eq.s32.totalorder %v1183, %v2035
          %vm2173 = vcmp.eq.s32.totalorder %v1183, %v2039
          %vm2174 = vcmp.eq.s32.totalorder %v1183, %v2043
          %vm2175 = vcmp.eq.s32.totalorder %v1183, %v2047
          %vm2176 = vcmp.eq.s32.totalorder %v1184, %v2035
          %vm2177 = vcmp.eq.s32.totalorder %v1184, %v2039
          %vm2178 = vcmp.eq.s32.totalorder %v1184, %v2043
          %vm2179 = vcmp.eq.s32.totalorder %v1184, %v2047
          %vm2180 = vcmp.eq.s32.totalorder %v1185, %v2035
          %vm2181 = vcmp.eq.s32.totalorder %v1185, %v2039
          %vm2182 = vcmp.eq.s32.totalorder %v1185, %v2043
          %vm2183 = vcmp.eq.s32.totalorder %v1185, %v2047
          %vm2184 = vcmp.eq.s32.totalorder %v1186, %v2035
          %vm2185 = vcmp.eq.s32.totalorder %v1186, %v2039
          %vm2186 = vcmp.eq.s32.totalorder %v1186, %v2043
          %vm2187 = vcmp.eq.s32.totalorder %v1186, %v2047
          %vm2188 = vcmp.eq.s32.totalorder %v1187, %v2035
          %vm2189 = vcmp.eq.s32.totalorder %v1187, %v2039
          %vm2190 = vcmp.eq.s32.totalorder %v1187, %v2043
          %vm2191 = vcmp.eq.s32.totalorder %v1187, %v2047
          %vm2192 = vcmp.eq.s32.totalorder %v1188, %v2035
          %vm2193 = vcmp.eq.s32.totalorder %v1188, %v2039
          %vm2194 = vcmp.eq.s32.totalorder %v1188, %v2043
          %vm2195 = vcmp.eq.s32.totalorder %v1188, %v2047
          %vm2196 = vcmp.eq.s32.totalorder %v1189, %v2035
          %vm2197 = vcmp.eq.s32.totalorder %v1189, %v2039
          %vm2198 = vcmp.eq.s32.totalorder %v1189, %v2043
          %vm2199 = vcmp.eq.s32.totalorder %v1189, %v2047
          %vm2200 = vcmp.eq.s32.totalorder %v1190, %v2035
          %vm2201 = vcmp.eq.s32.totalorder %v1190, %v2039
          %vm2202 = vcmp.eq.s32.totalorder %v1190, %v2043
          %vm2203 = vcmp.eq.s32.totalorder %v1190, %v2047
          %vm2204 = vcmp.eq.s32.totalorder %v1191, %v2035
          %vm2205 = vcmp.eq.s32.totalorder %v1191, %v2039
          %vm2206 = vcmp.eq.s32.totalorder %v1191, %v2043
          %vm2207 = vcmp.eq.s32.totalorder %v1191, %v2047
          %vm2208 = vcmp.eq.s32.totalorder %v1192, %v2035
          %vm2209 = vcmp.eq.s32.totalorder %v1192, %v2039
          %vm2210 = vcmp.eq.s32.totalorder %v1192, %v2043
          %vm2211 = vcmp.eq.s32.totalorder %v1192, %v2047
          %vm2212 = vcmp.eq.s32.totalorder %v1193, %v2035
          %vm2213 = vcmp.eq.s32.totalorder %v1193, %v2039
          %vm2214 = vcmp.eq.s32.totalorder %v1193, %v2043
          %vm2215 = vcmp.eq.s32.totalorder %v1193, %v2047
          %vm2216 = vcmp.eq.s32.totalorder %v1194, %v2035
          %vm2217 = vcmp.eq.s32.totalorder %v1194, %v2039
          %vm2218 = vcmp.eq.s32.totalorder %v1194, %v2043
          %vm2219 = vcmp.eq.s32.totalorder %v1194, %v2047
          %vm2220 = vcmp.eq.s32.totalorder %v1195, %v2035
          %vm2221 = vcmp.eq.s32.totalorder %v1195, %v2039
          %vm2222 = vcmp.eq.s32.totalorder %v1195, %v2043
          %vm2223 = vcmp.eq.s32.totalorder %v1195, %v2047
          %vm2224 = vcmp.eq.s32.totalorder %v1196, %v2035
          %vm2225 = vcmp.eq.s32.totalorder %v1196, %v2039
          %vm2226 = vcmp.eq.s32.totalorder %v1196, %v2043
          %vm2227 = vcmp.eq.s32.totalorder %v1196, %v2047
          %vm2228 = vcmp.eq.s32.totalorder %v1197, %v2035
          %vm2229 = vcmp.eq.s32.totalorder %v1197, %v2039
          %vm2230 = vcmp.eq.s32.totalorder %v1197, %v2043
          %vm2231 = vcmp.eq.s32.totalorder %v1197, %v2047
          %vm2232 = vcmp.eq.s32.totalorder %v1198, %v2035
          %vm2233 = vcmp.eq.s32.totalorder %v1198, %v2039
          %vm2234 = vcmp.eq.s32.totalorder %v1198, %v2043
          %vm2235 = vcmp.eq.s32.totalorder %v1198, %v2047
          %vm2236 = vcmp.eq.s32.totalorder %v1199, %v2035
          %vm2237 = vcmp.eq.s32.totalorder %v1199, %v2039
          %vm2238 = vcmp.eq.s32.totalorder %v1199, %v2043
          %vm2239 = vcmp.eq.s32.totalorder %v1199, %v2047
          %vm2240 = vcmp.eq.s32.totalorder %v1200, %v2035
          %vm2241 = vcmp.eq.s32.totalorder %v1200, %v2039
          %vm2242 = vcmp.eq.s32.totalorder %v1200, %v2043
          %vm2243 = vcmp.eq.s32.totalorder %v1200, %v2047
          %vm2244 = vcmp.eq.s32.totalorder %v1201, %v2035
          %vm2245 = vcmp.eq.s32.totalorder %v1201, %v2039
          %vm2246 = vcmp.eq.s32.totalorder %v1201, %v2043
          %vm2247 = vcmp.eq.s32.totalorder %v1201, %v2047
          %vm2248 = vcmp.eq.s32.totalorder %v1202, %v2035
          %vm2249 = vcmp.eq.s32.totalorder %v1202, %v2039
          %vm2250 = vcmp.eq.s32.totalorder %v1202, %v2043
          %vm2251 = vcmp.eq.s32.totalorder %v1202, %v2047
          %vm2252 = vcmp.eq.s32.totalorder %v1203, %v2035
          %vm2253 = vcmp.eq.s32.totalorder %v1203, %v2039
          %vm2254 = vcmp.eq.s32.totalorder %v1203, %v2043
          %vm2255 = vcmp.eq.s32.totalorder %v1203, %v2047
          %vm2256 = vcmp.eq.s32.totalorder %v1204, %v2035
          %vm2257 = vcmp.eq.s32.totalorder %v1204, %v2039
          %vm2258 = vcmp.eq.s32.totalorder %v1204, %v2043
          %vm2259 = vcmp.eq.s32.totalorder %v1204, %v2047
          %vm2260 = vcmp.eq.s32.totalorder %v1205, %v2035
          %vm2261 = vcmp.eq.s32.totalorder %v1205, %v2039
          %vm2262 = vcmp.eq.s32.totalorder %v1205, %v2043
          %vm2263 = vcmp.eq.s32.totalorder %v1205, %v2047
          %vm2264 = vcmp.eq.s32.totalorder %v1206, %v2035
          %vm2265 = vcmp.eq.s32.totalorder %v1206, %v2039
          %vm2266 = vcmp.eq.s32.totalorder %v1206, %v2043
          %vm2267 = vcmp.eq.s32.totalorder %v1206, %v2047
          %vm2268 = vcmp.eq.s32.totalorder %v1207, %v2035
          %vm2269 = vcmp.eq.s32.totalorder %v1207, %v2039
          %vm2270 = vcmp.eq.s32.totalorder %v1207, %v2043
          %vm2271 = vcmp.eq.s32.totalorder %v1207, %v2047
          %vm2272 = vcmp.eq.s32.totalorder %v1208, %v2035
          %vm2273 = vcmp.eq.s32.totalorder %v1208, %v2039
          %vm2274 = vcmp.eq.s32.totalorder %v1208, %v2043
          %vm2275 = vcmp.eq.s32.totalorder %v1208, %v2047
          %vm2276 = vcmp.eq.s32.totalorder %v1209, %v2035
          %vm2277 = vcmp.eq.s32.totalorder %v1209, %v2039
          %vm2278 = vcmp.eq.s32.totalorder %v1209, %v2043
          %vm2279 = vcmp.eq.s32.totalorder %v1209, %v2047
          %vm2280 = vcmp.eq.s32.totalorder %v1210, %v2035
          %vm2281 = vcmp.eq.s32.totalorder %v1210, %v2039
          %vm2282 = vcmp.eq.s32.totalorder %v1210, %v2043
          %vm2283 = vcmp.eq.s32.totalorder %v1210, %v2047
          %vm2284 = vcmp.eq.s32.totalorder %v1211, %v2035
          %vm2285 = vcmp.eq.s32.totalorder %v1211, %v2039
          %vm2286 = vcmp.eq.s32.totalorder %v1211, %v2043
          %vm2287 = vcmp.eq.s32.totalorder %v1211, %v2047
          %vm2288 = vcmp.eq.s32.totalorder %v1212, %v2035
          %vm2289 = vcmp.eq.s32.totalorder %v1212, %v2039
          %vm2290 = vcmp.eq.s32.totalorder %v1212, %v2043
          %vm2291 = vcmp.eq.s32.totalorder %v1212, %v2047
          %vm2292 = vcmp.eq.s32.totalorder %v1213, %v2035
          %vm2293 = vcmp.eq.s32.totalorder %v1213, %v2039
          %vm2294 = vcmp.eq.s32.totalorder %v1213, %v2043
          %vm2295 = vcmp.eq.s32.totalorder %v1213, %v2047
          %vm2296 = vcmp.eq.s32.totalorder %v1214, %v2035
          %vm2297 = vcmp.eq.s32.totalorder %v1214, %v2039
          %vm2298 = vcmp.eq.s32.totalorder %v1214, %v2043
          %vm2299 = vcmp.eq.s32.totalorder %v1214, %v2047
          %vm2300 = vcmp.eq.s32.totalorder %v1215, %v2035
          %vm2301 = vcmp.eq.s32.totalorder %v1215, %v2039
          %vm2302 = vcmp.eq.s32.totalorder %v1215, %v2043
          %vm2303 = vcmp.eq.s32.totalorder %v1215, %v2047
          %v2304 = vsel %vm2048, 1, 0
          %v2305 = vsel %vm2049, 1, 0
          %v2306 = vsel %vm2050, 1, 0
          %v2307 = vsel %vm2051, 1, 0
          %v2308 = vsel %vm2052, 1, 0
          %v2309 = vsel %vm2053, 1, 0
          %v2310 = vsel %vm2054, 1, 0
          %v2311 = vsel %vm2055, 1, 0
          %v2312 = vsel %vm2056, 1, 0
          %v2313 = vsel %vm2057, 1, 0
          %v2314 = vsel %vm2058, 1, 0
          %v2315 = vsel %vm2059, 1, 0
          %v2316 = vsel %vm2060, 1, 0
          %v2317 = vsel %vm2061, 1, 0
          %v2318 = vsel %vm2062, 1, 0
          %v2319 = vsel %vm2063, 1, 0
          %v2320 = vsel %vm2064, 1, 0
          %v2321 = vsel %vm2065, 1, 0
          %v2322 = vsel %vm2066, 1, 0
          %v2323 = vsel %vm2067, 1, 0
          %v2324 = vsel %vm2068, 1, 0
          %v2325 = vsel %vm2069, 1, 0
          %v2326 = vsel %vm2070, 1, 0
          %v2327 = vsel %vm2071, 1, 0
          %v2328 = vsel %vm2072, 1, 0
          %v2329 = vsel %vm2073, 1, 0
          %v2330 = vsel %vm2074, 1, 0
          %v2331 = vsel %vm2075, 1, 0
          %v2332 = vsel %vm2076, 1, 0
          %v2333 = vsel %vm2077, 1, 0
          %v2334 = vsel %vm2078, 1, 0
          %v2335 = vsel %vm2079, 1, 0
          %v2336 = vsel %vm2080, 1, 0
          %v2337 = vsel %vm2081, 1, 0
          %v2338 = vsel %vm2082, 1, 0
          %v2339 = vsel %vm2083, 1, 0
          %v2340 = vsel %vm2084, 1, 0
          %v2341 = vsel %vm2085, 1, 0
          %v2342 = vsel %vm2086, 1, 0
          %v2343 = vsel %vm2087, 1, 0
          %v2344 = vsel %vm2088, 1, 0
          %v2345 = vsel %vm2089, 1, 0
          %v2346 = vsel %vm2090, 1, 0
          %v2347 = vsel %vm2091, 1, 0
          %v2348 = vsel %vm2092, 1, 0
          %v2349 = vsel %vm2093, 1, 0
          %v2350 = vsel %vm2094, 1, 0
          %v2351 = vsel %vm2095, 1, 0
          %v2352 = vsel %vm2096, 1, 0
          %v2353 = vsel %vm2097, 1, 0
          %v2354 = vsel %vm2098, 1, 0
          %v2355 = vsel %vm2099, 1, 0
          %v2356 = vsel %vm2100, 1, 0
          %v2357 = vsel %vm2101, 1, 0
          %v2358 = vsel %vm2102, 1, 0
          %v2359 = vsel %vm2103, 1, 0
          %v2360 = vsel %vm2104, 1, 0
          %v2361 = vsel %vm2105, 1, 0
          %v2362 = vsel %vm2106, 1, 0
          %v2363 = vsel %vm2107, 1, 0
          %v2364 = vsel %vm2108, 1, 0
          %v2365 = vsel %vm2109, 1, 0
          %v2366 = vsel %vm2110, 1, 0
          %v2367 = vsel %vm2111, 1, 0
          %v2368 = vsel %vm2112, 1, 0
          %v2369 = vsel %vm2113, 1, 0
          %v2370 = vsel %vm2114, 1, 0
          %v2371 = vsel %vm2115, 1, 0
          %v2372 = vsel %vm2116, 1, 0
          %v2373 = vsel %vm2117, 1, 0
          %v2374 = vsel %vm2118, 1, 0
          %v2375 = vsel %vm2119, 1, 0
          %v2376 = vsel %vm2120, 1, 0
          %v2377 = vsel %vm2121, 1, 0
          %v2378 = vsel %vm2122, 1, 0
          %v2379 = vsel %vm2123, 1, 0
          %v2380 = vsel %vm2124, 1, 0
          %v2381 = vsel %vm2125, 1, 0
          %v2382 = vsel %vm2126, 1, 0
          %v2383 = vsel %vm2127, 1, 0
          %v2384 = vsel %vm2128, 1, 0
          %v2385 = vsel %vm2129, 1, 0
          %v2386 = vsel %vm2130, 1, 0
          %v2387 = vsel %vm2131, 1, 0
          %v2388 = vsel %vm2132, 1, 0
          %v2389 = vsel %vm2133, 1, 0
          %v2390 = vsel %vm2134, 1, 0
          %v2391 = vsel %vm2135, 1, 0
          %v2392 = vsel %vm2136, 1, 0
          %v2393 = vsel %vm2137, 1, 0
          %v2394 = vsel %vm2138, 1, 0
          %v2395 = vsel %vm2139, 1, 0
          %v2396 = vsel %vm2140, 1, 0
          %v2397 = vsel %vm2141, 1, 0
          %v2398 = vsel %vm2142, 1, 0
          %v2399 = vsel %vm2143, 1, 0
          %v2400 = vsel %vm2144, 1, 0
          %v2401 = vsel %vm2145, 1, 0
          %v2402 = vsel %vm2146, 1, 0
          %v2403 = vsel %vm2147, 1, 0
          %v2404 = vsel %vm2148, 1, 0
          %v2405 = vsel %vm2149, 1, 0
          %v2406 = vsel %vm2150, 1, 0
          %v2407 = vsel %vm2151, 1, 0
          %v2408 = vsel %vm2152, 1, 0
          %v2409 = vsel %vm2153, 1, 0
          %v2410 = vsel %vm2154, 1, 0
          %v2411 = vsel %vm2155, 1, 0
          %v2412 = vsel %vm2156, 1, 0
          %v2413 = vsel %vm2157, 1, 0
          %v2414 = vsel %vm2158, 1, 0
          %v2415 = vsel %vm2159, 1, 0
          %v2416 = vsel %vm2160, 1, 0
          %v2417 = vsel %vm2161, 1, 0
          %v2418 = vsel %vm2162, 1, 0
          %v2419 = vsel %vm2163, 1, 0
          %v2420 = vsel %vm2164, 1, 0
          %v2421 = vsel %vm2165, 1, 0
          %v2422 = vsel %vm2166, 1, 0
          %v2423 = vsel %vm2167, 1, 0
          %v2424 = vsel %vm2168, 1, 0
          %v2425 = vsel %vm2169, 1, 0
          %v2426 = vsel %vm2170, 1, 0
          %v2427 = vsel %vm2171, 1, 0
          %v2428 = vsel %vm2172, 1, 0
          %v2429 = vsel %vm2173, 1, 0
          %v2430 = vsel %vm2174, 1, 0
          %v2431 = vsel %vm2175, 1, 0
          %v2432 = vsel %vm2176, 1, 0
          %v2433 = vsel %vm2177, 1, 0
          %v2434 = vsel %vm2178, 1, 0
          %v2435 = vsel %vm2179, 1, 0
          %v2436 = vsel %vm2180, 1, 0
          %v2437 = vsel %vm2181, 1, 0
          %v2438 = vsel %vm2182, 1, 0
          %v2439 = vsel %vm2183, 1, 0
          %v2440 = vsel %vm2184, 1, 0
          %v2441 = vsel %vm2185, 1, 0
          %v2442 = vsel %vm2186, 1, 0
          %v2443 = vsel %vm2187, 1, 0
          %v2444 = vsel %vm2188, 1, 0
          %v2445 = vsel %vm2189, 1, 0
          %v2446 = vsel %vm2190, 1, 0
          %v2447 = vsel %vm2191, 1, 0
          %v2448 = vsel %vm2192, 1, 0
          %v2449 = vsel %vm2193, 1, 0
          %v2450 = vsel %vm2194, 1, 0
          %v2451 = vsel %vm2195, 1, 0
          %v2452 = vsel %vm2196, 1, 0
          %v2453 = vsel %vm2197, 1, 0
          %v2454 = vsel %vm2198, 1, 0
          %v2455 = vsel %vm2199, 1, 0
          %v2456 = vsel %vm2200, 1, 0
          %v2457 = vsel %vm2201, 1, 0
          %v2458 = vsel %vm2202, 1, 0
          %v2459 = vsel %vm2203, 1, 0
          %v2460 = vsel %vm2204, 1, 0
          %v2461 = vsel %vm2205, 1, 0
          %v2462 = vsel %vm2206, 1, 0
          %v2463 = vsel %vm2207, 1, 0
          %v2464 = vsel %vm2208, 1, 0
          %v2465 = vsel %vm2209, 1, 0
          %v2466 = vsel %vm2210, 1, 0
          %v2467 = vsel %vm2211, 1, 0
          %v2468 = vsel %vm2212, 1, 0
          %v2469 = vsel %vm2213, 1, 0
          %v2470 = vsel %vm2214, 1, 0
          %v2471 = vsel %vm2215, 1, 0
          %v2472 = vsel %vm2216, 1, 0
          %v2473 = vsel %vm2217, 1, 0
          %v2474 = vsel %vm2218, 1, 0
          %v2475 = vsel %vm2219, 1, 0
          %v2476 = vsel %vm2220, 1, 0
          %v2477 = vsel %vm2221, 1, 0
          %v2478 = vsel %vm2222, 1, 0
          %v2479 = vsel %vm2223, 1, 0
          %v2480 = vsel %vm2224, 1, 0
          %v2481 = vsel %vm2225, 1, 0
          %v2482 = vsel %vm2226, 1, 0
          %v2483 = vsel %vm2227, 1, 0
          %v2484 = vsel %vm2228, 1, 0
          %v2485 = vsel %vm2229, 1, 0
          %v2486 = vsel %vm2230, 1, 0
          %v2487 = vsel %vm2231, 1, 0
          %v2488 = vsel %vm2232, 1, 0
          %v2489 = vsel %vm2233, 1, 0
          %v2490 = vsel %vm2234, 1, 0
          %v2491 = vsel %vm2235, 1, 0
          %v2492 = vsel %vm2236, 1, 0
          %v2493 = vsel %vm2237, 1, 0
          %v2494 = vsel %vm2238, 1, 0
          %v2495 = vsel %vm2239, 1, 0
          %v2496 = vsel %vm2240, 1, 0
          %v2497 = vsel %vm2241, 1, 0
          %v2498 = vsel %vm2242, 1, 0
          %v2499 = vsel %vm2243, 1, 0
          %v2500 = vsel %vm2244, 1, 0
          %v2501 = vsel %vm2245, 1, 0
          %v2502 = vsel %vm2246, 1, 0
          %v2503 = vsel %vm2247, 1, 0
          %v2504 = vsel %vm2248, 1, 0
          %v2505 = vsel %vm2249, 1, 0
          %v2506 = vsel %vm2250, 1, 0
          %v2507 = vsel %vm2251, 1, 0
          %v2508 = vsel %vm2252, 1, 0
          %v2509 = vsel %vm2253, 1, 0
          %v2510 = vsel %vm2254, 1, 0
          %v2511 = vsel %vm2255, 1, 0
          %v2512 = vsel %vm2256, 1, 0
          %v2513 = vsel %vm2257, 1, 0
          %v2514 = vsel %vm2258, 1, 0
          %v2515 = vsel %vm2259, 1, 0
          %v2516 = vsel %vm2260, 1, 0
          %v2517 = vsel %vm2261, 1, 0
          %v2518 = vsel %vm2262, 1, 0
          %v2519 = vsel %vm2263, 1, 0
          %v2520 = vsel %vm2264, 1, 0
          %v2521 = vsel %vm2265, 1, 0
          %v2522 = vsel %vm2266, 1, 0
          %v2523 = vsel %vm2267, 1, 0
          %v2524 = vsel %vm2268, 1, 0
          %v2525 = vsel %vm2269, 1, 0
          %v2526 = vsel %vm2270, 1, 0
          %v2527 = vsel %vm2271, 1, 0
          %v2528 = vsel %vm2272, 1, 0
          %v2529 = vsel %vm2273, 1, 0
          %v2530 = vsel %vm2274, 1, 0
          %v2531 = vsel %vm2275, 1, 0
          %v2532 = vsel %vm2276, 1, 0
          %v2533 = vsel %vm2277, 1, 0
          %v2534 = vsel %vm2278, 1, 0
          %v2535 = vsel %vm2279, 1, 0
          %v2536 = vsel %vm2280, 1, 0
          %v2537 = vsel %vm2281, 1, 0
          %v2538 = vsel %vm2282, 1, 0
          %v2539 = vsel %vm2283, 1, 0
          %v2540 = vsel %vm2284, 1, 0
          %v2541 = vsel %vm2285, 1, 0
          %v2542 = vsel %vm2286, 1, 0
          %v2543 = vsel %vm2287, 1, 0
          %v2544 = vsel %vm2288, 1, 0
          %v2545 = vsel %vm2289, 1, 0
          %v2546 = vsel %vm2290, 1, 0
          %v2547 = vsel %vm2291, 1, 0
          %v2548 = vsel %vm2292, 1, 0
          %v2549 = vsel %vm2293, 1, 0
          %v2550 = vsel %vm2294, 1, 0
          %v2551 = vsel %vm2295, 1, 0
          %v2552 = vsel %vm2296, 1, 0
          %v2553 = vsel %vm2297, 1, 0
          %v2554 = vsel %vm2298, 1, 0
          %v2555 = vsel %vm2299, 1, 0
          %v2556 = vsel %vm2300, 1, 0
          %v2557 = vsel %vm2301, 1, 0
          %v2558 = vsel %vm2302, 1, 0
          %v2559 = vsel %vm2303, 1, 0
          %v2560 = vcvt.s32.f32 %v2304
          %v2561 = vcvt.s32.f32 %v2305
          %v2562 = vcvt.s32.f32 %v2306
          %v2563 = vcvt.s32.f32 %v2307
          %v2564 = vcvt.s32.f32 %v2308
          %v2565 = vcvt.s32.f32 %v2309
          %v2566 = vcvt.s32.f32 %v2310
          %v2567 = vcvt.s32.f32 %v2311
          %v2568 = vcvt.s32.f32 %v2312
          %v2569 = vcvt.s32.f32 %v2313
          %v2570 = vcvt.s32.f32 %v2314
          %v2571 = vcvt.s32.f32 %v2315
          %v2572 = vcvt.s32.f32 %v2316
          %v2573 = vcvt.s32.f32 %v2317
          %v2574 = vcvt.s32.f32 %v2318
          %v2575 = vcvt.s32.f32 %v2319
          %v2576 = vcvt.s32.f32 %v2320
          %v2577 = vcvt.s32.f32 %v2321
          %v2578 = vcvt.s32.f32 %v2322
          %v2579 = vcvt.s32.f32 %v2323
          %v2580 = vcvt.s32.f32 %v2324
          %v2581 = vcvt.s32.f32 %v2325
          %v2582 = vcvt.s32.f32 %v2326
          %v2583 = vcvt.s32.f32 %v2327
          %v2584 = vcvt.s32.f32 %v2328
          %v2585 = vcvt.s32.f32 %v2329
          %v2586 = vcvt.s32.f32 %v2330
          %v2587 = vcvt.s32.f32 %v2331
          %v2588 = vcvt.s32.f32 %v2332
          %v2589 = vcvt.s32.f32 %v2333
          %v2590 = vcvt.s32.f32 %v2334
          %v2591 = vcvt.s32.f32 %v2335
          %v2592 = vcvt.s32.f32 %v2336
          %v2593 = vcvt.s32.f32 %v2337
          %v2594 = vcvt.s32.f32 %v2338
          %v2595 = vcvt.s32.f32 %v2339
          %v2596 = vcvt.s32.f32 %v2340
          %v2597 = vcvt.s32.f32 %v2341
          %v2598 = vcvt.s32.f32 %v2342
          %v2599 = vcvt.s32.f32 %v2343
          %v2600 = vcvt.s32.f32 %v2344
          %v2601 = vcvt.s32.f32 %v2345
          %v2602 = vcvt.s32.f32 %v2346
          %v2603 = vcvt.s32.f32 %v2347
          %v2604 = vcvt.s32.f32 %v2348
          %v2605 = vcvt.s32.f32 %v2349
          %v2606 = vcvt.s32.f32 %v2350
          %v2607 = vcvt.s32.f32 %v2351
          %v2608 = vcvt.s32.f32 %v2352
          %v2609 = vcvt.s32.f32 %v2353
          %v2610 = vcvt.s32.f32 %v2354
          %v2611 = vcvt.s32.f32 %v2355
          %v2612 = vcvt.s32.f32 %v2356
          %v2613 = vcvt.s32.f32 %v2357
          %v2614 = vcvt.s32.f32 %v2358
          %v2615 = vcvt.s32.f32 %v2359
          %v2616 = vcvt.s32.f32 %v2360
          %v2617 = vcvt.s32.f32 %v2361
          %v2618 = vcvt.s32.f32 %v2362
          %v2619 = vcvt.s32.f32 %v2363
          %v2620 = vcvt.s32.f32 %v2364
          %v2621 = vcvt.s32.f32 %v2365
          %v2622 = vcvt.s32.f32 %v2366
          %v2623 = vcvt.s32.f32 %v2367
          %v2624 = vcvt.s32.f32 %v2368
          %v2625 = vcvt.s32.f32 %v2369
          %v2626 = vcvt.s32.f32 %v2370
          %v2627 = vcvt.s32.f32 %v2371
          %v2628 = vcvt.s32.f32 %v2372
          %v2629 = vcvt.s32.f32 %v2373
          %v2630 = vcvt.s32.f32 %v2374
          %v2631 = vcvt.s32.f32 %v2375
          %v2632 = vcvt.s32.f32 %v2376
          %v2633 = vcvt.s32.f32 %v2377
          %v2634 = vcvt.s32.f32 %v2378
          %v2635 = vcvt.s32.f32 %v2379
          %v2636 = vcvt.s32.f32 %v2380
          %v2637 = vcvt.s32.f32 %v2381
          %v2638 = vcvt.s32.f32 %v2382
          %v2639 = vcvt.s32.f32 %v2383
          %v2640 = vcvt.s32.f32 %v2384
          %v2641 = vcvt.s32.f32 %v2385
          %v2642 = vcvt.s32.f32 %v2386
          %v2643 = vcvt.s32.f32 %v2387
          %v2644 = vcvt.s32.f32 %v2388
          %v2645 = vcvt.s32.f32 %v2389
          %v2646 = vcvt.s32.f32 %v2390
          %v2647 = vcvt.s32.f32 %v2391
          %v2648 = vcvt.s32.f32 %v2392
          %v2649 = vcvt.s32.f32 %v2393
          %v2650 = vcvt.s32.f32 %v2394
          %v2651 = vcvt.s32.f32 %v2395
          %v2652 = vcvt.s32.f32 %v2396
          %v2653 = vcvt.s32.f32 %v2397
          %v2654 = vcvt.s32.f32 %v2398
          %v2655 = vcvt.s32.f32 %v2399
          %v2656 = vcvt.s32.f32 %v2400
          %v2657 = vcvt.s32.f32 %v2401
          %v2658 = vcvt.s32.f32 %v2402
          %v2659 = vcvt.s32.f32 %v2403
          %v2660 = vcvt.s32.f32 %v2404
          %v2661 = vcvt.s32.f32 %v2405
          %v2662 = vcvt.s32.f32 %v2406
          %v2663 = vcvt.s32.f32 %v2407
          %v2664 = vcvt.s32.f32 %v2408
          %v2665 = vcvt.s32.f32 %v2409
          %v2666 = vcvt.s32.f32 %v2410
          %v2667 = vcvt.s32.f32 %v2411
          %v2668 = vcvt.s32.f32 %v2412
          %v2669 = vcvt.s32.f32 %v2413
          %v2670 = vcvt.s32.f32 %v2414
          %v2671 = vcvt.s32.f32 %v2415
          %v2672 = vcvt.s32.f32 %v2416
          %v2673 = vcvt.s32.f32 %v2417
          %v2674 = vcvt.s32.f32 %v2418
          %v2675 = vcvt.s32.f32 %v2419
          %v2676 = vcvt.s32.f32 %v2420
          %v2677 = vcvt.s32.f32 %v2421
          %v2678 = vcvt.s32.f32 %v2422
          %v2679 = vcvt.s32.f32 %v2423
          %v2680 = vcvt.s32.f32 %v2424
          %v2681 = vcvt.s32.f32 %v2425
          %v2682 = vcvt.s32.f32 %v2426
          %v2683 = vcvt.s32.f32 %v2427
          %v2684 = vcvt.s32.f32 %v2428
          %v2685 = vcvt.s32.f32 %v2429
          %v2686 = vcvt.s32.f32 %v2430
          %v2687 = vcvt.s32.f32 %v2431
          %v2688 = vcvt.s32.f32 %v2432
          %v2689 = vcvt.s32.f32 %v2433
          %v2690 = vcvt.s32.f32 %v2434
          %v2691 = vcvt.s32.f32 %v2435
          %v2692 = vcvt.s32.f32 %v2436
          %v2693 = vcvt.s32.f32 %v2437
          %v2694 = vcvt.s32.f32 %v2438
          %v2695 = vcvt.s32.f32 %v2439
          %v2696 = vcvt.s32.f32 %v2440
          %v2697 = vcvt.s32.f32 %v2441
          %v2698 = vcvt.s32.f32 %v2442
          %v2699 = vcvt.s32.f32 %v2443
          %v2700 = vcvt.s32.f32 %v2444
          %v2701 = vcvt.s32.f32 %v2445
          %v2702 = vcvt.s32.f32 %v2446
          %v2703 = vcvt.s32.f32 %v2447
          %v2704 = vcvt.s32.f32 %v2448
          %v2705 = vcvt.s32.f32 %v2449
          %v2706 = vcvt.s32.f32 %v2450
          %v2707 = vcvt.s32.f32 %v2451
          %v2708 = vcvt.s32.f32 %v2452
          %v2709 = vcvt.s32.f32 %v2453
          %v2710 = vcvt.s32.f32 %v2454
          %v2711 = vcvt.s32.f32 %v2455
          %v2712 = vcvt.s32.f32 %v2456
          %v2713 = vcvt.s32.f32 %v2457
          %v2714 = vcvt.s32.f32 %v2458
          %v2715 = vcvt.s32.f32 %v2459
          %v2716 = vcvt.s32.f32 %v2460
          %v2717 = vcvt.s32.f32 %v2461
          %v2718 = vcvt.s32.f32 %v2462
          %v2719 = vcvt.s32.f32 %v2463
          %v2720 = vcvt.s32.f32 %v2464
          %v2721 = vcvt.s32.f32 %v2465
          %v2722 = vcvt.s32.f32 %v2466
          %v2723 = vcvt.s32.f32 %v2467
          %v2724 = vcvt.s32.f32 %v2468
          %v2725 = vcvt.s32.f32 %v2469
          %v2726 = vcvt.s32.f32 %v2470
          %v2727 = vcvt.s32.f32 %v2471
          %v2728 = vcvt.s32.f32 %v2472
          %v2729 = vcvt.s32.f32 %v2473
          %v2730 = vcvt.s32.f32 %v2474
          %v2731 = vcvt.s32.f32 %v2475
          %v2732 = vcvt.s32.f32 %v2476
          %v2733 = vcvt.s32.f32 %v2477
          %v2734 = vcvt.s32.f32 %v2478
          %v2735 = vcvt.s32.f32 %v2479
          %v2736 = vcvt.s32.f32 %v2480
          %v2737 = vcvt.s32.f32 %v2481
          %v2738 = vcvt.s32.f32 %v2482
          %v2739 = vcvt.s32.f32 %v2483
          %v2740 = vcvt.s32.f32 %v2484
          %v2741 = vcvt.s32.f32 %v2485
          %v2742 = vcvt.s32.f32 %v2486
          %v2743 = vcvt.s32.f32 %v2487
          %v2744 = vcvt.s32.f32 %v2488
          %v2745 = vcvt.s32.f32 %v2489
          %v2746 = vcvt.s32.f32 %v2490
          %v2747 = vcvt.s32.f32 %v2491
          %v2748 = vcvt.s32.f32 %v2492
          %v2749 = vcvt.s32.f32 %v2493
          %v2750 = vcvt.s32.f32 %v2494
          %v2751 = vcvt.s32.f32 %v2495
          %v2752 = vcvt.s32.f32 %v2496
          %v2753 = vcvt.s32.f32 %v2497
          %v2754 = vcvt.s32.f32 %v2498
          %v2755 = vcvt.s32.f32 %v2499
          %v2756 = vcvt.s32.f32 %v2500
          %v2757 = vcvt.s32.f32 %v2501
          %v2758 = vcvt.s32.f32 %v2502
          %v2759 = vcvt.s32.f32 %v2503
          %v2760 = vcvt.s32.f32 %v2504
          %v2761 = vcvt.s32.f32 %v2505
          %v2762 = vcvt.s32.f32 %v2506
          %v2763 = vcvt.s32.f32 %v2507
          %v2764 = vcvt.s32.f32 %v2508
          %v2765 = vcvt.s32.f32 %v2509
          %v2766 = vcvt.s32.f32 %v2510
          %v2767 = vcvt.s32.f32 %v2511
          %v2768 = vcvt.s32.f32 %v2512
          %v2769 = vcvt.s32.f32 %v2513
          %v2770 = vcvt.s32.f32 %v2514
          %v2771 = vcvt.s32.f32 %v2515
          %v2772 = vcvt.s32.f32 %v2516
          %v2773 = vcvt.s32.f32 %v2517
          %v2774 = vcvt.s32.f32 %v2518
          %v2775 = vcvt.s32.f32 %v2519
          %v2776 = vcvt.s32.f32 %v2520
          %v2777 = vcvt.s32.f32 %v2521
          %v2778 = vcvt.s32.f32 %v2522
          %v2779 = vcvt.s32.f32 %v2523
          %v2780 = vcvt.s32.f32 %v2524
          %v2781 = vcvt.s32.f32 %v2525
          %v2782 = vcvt.s32.f32 %v2526
          %v2783 = vcvt.s32.f32 %v2527
          %v2784 = vcvt.s32.f32 %v2528
          %v2785 = vcvt.s32.f32 %v2529
          %v2786 = vcvt.s32.f32 %v2530
          %v2787 = vcvt.s32.f32 %v2531
          %v2788 = vcvt.s32.f32 %v2532
          %v2789 = vcvt.s32.f32 %v2533
          %v2790 = vcvt.s32.f32 %v2534
          %v2791 = vcvt.s32.f32 %v2535
          %v2792 = vcvt.s32.f32 %v2536
          %v2793 = vcvt.s32.f32 %v2537
          %v2794 = vcvt.s32.f32 %v2538
          %v2795 = vcvt.s32.f32 %v2539
          %v2796 = vcvt.s32.f32 %v2540
          %v2797 = vcvt.s32.f32 %v2541
          %v2798 = vcvt.s32.f32 %v2542
          %v2799 = vcvt.s32.f32 %v2543
          %v2800 = vcvt.s32.f32 %v2544
          %v2801 = vcvt.s32.f32 %v2545
          %v2802 = vcvt.s32.f32 %v2546
          %v2803 = vcvt.s32.f32 %v2547
          %v2804 = vcvt.s32.f32 %v2548
          %v2805 = vcvt.s32.f32 %v2549
          %v2806 = vcvt.s32.f32 %v2550
          %v2807 = vcvt.s32.f32 %v2551
          %v2808 = vcvt.s32.f32 %v2552
          %v2809 = vcvt.s32.f32 %v2553
          %v2810 = vcvt.s32.f32 %v2554
          %v2811 = vcvt.s32.f32 %v2555
          %v2812 = vcvt.s32.f32 %v2556
          %v2813 = vcvt.s32.f32 %v2557
          %v2814 = vcvt.s32.f32 %v2558
          %v2815 = vcvt.s32.f32 %v2559
          %v2816 = vsub.f32 %v1760, %v2560
          %v2817 = vsub.f32 %v1761, %v2561
          %v2818 = vsub.f32 %v1762, %v2562
          %v2819 = vsub.f32 %v1763, %v2563
          %v2820 = vsub.f32 %v1764, %v2564
          %v2821 = vsub.f32 %v1765, %v2565
          %v2822 = vsub.f32 %v1766, %v2566
          %v2823 = vsub.f32 %v1767, %v2567
          %v2824 = vsub.f32 %v1768, %v2568
          %v2825 = vsub.f32 %v1769, %v2569
          %v2826 = vsub.f32 %v1770, %v2570
          %v2827 = vsub.f32 %v1771, %v2571
          %v2828 = vsub.f32 %v1772, %v2572
          %v2829 = vsub.f32 %v1773, %v2573
          %v2830 = vsub.f32 %v1774, %v2574
          %v2831 = vsub.f32 %v1775, %v2575
          %v2832 = vsub.f32 %v1776, %v2576
          %v2833 = vsub.f32 %v1777, %v2577
          %v2834 = vsub.f32 %v1778, %v2578
          %v2835 = vsub.f32 %v1779, %v2579
          %v2836 = vsub.f32 %v1780, %v2580
          %v2837 = vsub.f32 %v1781, %v2581
          %v2838 = vsub.f32 %v1782, %v2582
          %v2839 = vsub.f32 %v1783, %v2583
          %v2840 = vsub.f32 %v1784, %v2584
          %v2841 = vsub.f32 %v1785, %v2585
          %v2842 = vsub.f32 %v1786, %v2586
          %v2843 = vsub.f32 %v1787, %v2587
          %v2844 = vsub.f32 %v1788, %v2588
          %v2845 = vsub.f32 %v1789, %v2589
          %v2846 = vsub.f32 %v1790, %v2590
          %v2847 = vsub.f32 %v1791, %v2591
          %v2848 = vsub.f32 %v1792, %v2592
          %v2849 = vsub.f32 %v1793, %v2593
          %v2850 = vsub.f32 %v1794, %v2594
          %v2851 = vsub.f32 %v1795, %v2595
          %v2852 = vsub.f32 %v1796, %v2596
          %v2853 = vsub.f32 %v1797, %v2597
          %v2854 = vsub.f32 %v1798, %v2598
          %v2855 = vsub.f32 %v1799, %v2599
          %v2856 = vsub.f32 %v1800, %v2600
          %v2857 = vsub.f32 %v1801, %v2601
          %v2858 = vsub.f32 %v1802, %v2602
          %v2859 = vsub.f32 %v1803, %v2603
          %v2860 = vsub.f32 %v1804, %v2604
          %v2861 = vsub.f32 %v1805, %v2605
          %v2862 = vsub.f32 %v1806, %v2606
          %v2863 = vsub.f32 %v1807, %v2607
          %v2864 = vsub.f32 %v1808, %v2608
          %v2865 = vsub.f32 %v1809, %v2609
          %v2866 = vsub.f32 %v1810, %v2610
          %v2867 = vsub.f32 %v1811, %v2611
          %v2868 = vsub.f32 %v1812, %v2612
          %v2869 = vsub.f32 %v1813, %v2613
          %v2870 = vsub.f32 %v1814, %v2614
          %v2871 = vsub.f32 %v1815, %v2615
          %v2872 = vsub.f32 %v1816, %v2616
          %v2873 = vsub.f32 %v1817, %v2617
          %v2874 = vsub.f32 %v1818, %v2618
          %v2875 = vsub.f32 %v1819, %v2619
          %v2876 = vsub.f32 %v1820, %v2620
          %v2877 = vsub.f32 %v1821, %v2621
          %v2878 = vsub.f32 %v1822, %v2622
          %v2879 = vsub.f32 %v1823, %v2623
          %v2880 = vsub.f32 %v1824, %v2624
          %v2881 = vsub.f32 %v1825, %v2625
          %v2882 = vsub.f32 %v1826, %v2626
          %v2883 = vsub.f32 %v1827, %v2627
          %v2884 = vsub.f32 %v1828, %v2628
          %v2885 = vsub.f32 %v1829, %v2629
          %v2886 = vsub.f32 %v1830, %v2630
          %v2887 = vsub.f32 %v1831, %v2631
          %v2888 = vsub.f32 %v1832, %v2632
          %v2889 = vsub.f32 %v1833, %v2633
          %v2890 = vsub.f32 %v1834, %v2634
          %v2891 = vsub.f32 %v1835, %v2635
          %v2892 = vsub.f32 %v1836, %v2636
          %v2893 = vsub.f32 %v1837, %v2637
          %v2894 = vsub.f32 %v1838, %v2638
          %v2895 = vsub.f32 %v1839, %v2639
          %v2896 = vsub.f32 %v1840, %v2640
          %v2897 = vsub.f32 %v1841, %v2641
          %v2898 = vsub.f32 %v1842, %v2642
          %v2899 = vsub.f32 %v1843, %v2643
          %v2900 = vsub.f32 %v1844, %v2644
          %v2901 = vsub.f32 %v1845, %v2645
          %v2902 = vsub.f32 %v1846, %v2646
          %v2903 = vsub.f32 %v1847, %v2647
          %v2904 = vsub.f32 %v1848, %v2648
          %v2905 = vsub.f32 %v1849, %v2649
          %v2906 = vsub.f32 %v1850, %v2650
          %v2907 = vsub.f32 %v1851, %v2651
          %v2908 = vsub.f32 %v1852, %v2652
          %v2909 = vsub.f32 %v1853, %v2653
          %v2910 = vsub.f32 %v1854, %v2654
          %v2911 = vsub.f32 %v1855, %v2655
          %v2912 = vsub.f32 %v1856, %v2656
          %v2913 = vsub.f32 %v1857, %v2657
          %v2914 = vsub.f32 %v1858, %v2658
          %v2915 = vsub.f32 %v1859, %v2659
          %v2916 = vsub.f32 %v1860, %v2660
          %v2917 = vsub.f32 %v1861, %v2661
          %v2918 = vsub.f32 %v1862, %v2662
          %v2919 = vsub.f32 %v1863, %v2663
          %v2920 = vsub.f32 %v1864, %v2664
          %v2921 = vsub.f32 %v1865, %v2665
          %v2922 = vsub.f32 %v1866, %v2666
          %v2923 = vsub.f32 %v1867, %v2667
          %v2924 = vsub.f32 %v1868, %v2668
          %v2925 = vsub.f32 %v1869, %v2669
          %v2926 = vsub.f32 %v1870, %v2670
          %v2927 = vsub.f32 %v1871, %v2671
          %v2928 = vsub.f32 %v1872, %v2672
          %v2929 = vsub.f32 %v1873, %v2673
          %v2930 = vsub.f32 %v1874, %v2674
          %v2931 = vsub.f32 %v1875, %v2675
          %v2932 = vsub.f32 %v1876, %v2676
          %v2933 = vsub.f32 %v1877, %v2677
          %v2934 = vsub.f32 %v1878, %v2678
          %v2935 = vsub.f32 %v1879, %v2679
          %v2936 = vsub.f32 %v1880, %v2680
          %v2937 = vsub.f32 %v1881, %v2681
          %v2938 = vsub.f32 %v1882, %v2682
          %v2939 = vsub.f32 %v1883, %v2683
          %v2940 = vsub.f32 %v1884, %v2684
          %v2941 = vsub.f32 %v1885, %v2685
          %v2942 = vsub.f32 %v1886, %v2686
          %v2943 = vsub.f32 %v1887, %v2687
          %v2944 = vsub.f32 %v1888, %v2688
          %v2945 = vsub.f32 %v1889, %v2689
          %v2946 = vsub.f32 %v1890, %v2690
          %v2947 = vsub.f32 %v1891, %v2691
          %v2948 = vsub.f32 %v1892, %v2692
          %v2949 = vsub.f32 %v1893, %v2693
          %v2950 = vsub.f32 %v1894, %v2694
          %v2951 = vsub.f32 %v1895, %v2695
          %v2952 = vsub.f32 %v1896, %v2696
          %v2953 = vsub.f32 %v1897, %v2697
          %v2954 = vsub.f32 %v1898, %v2698
          %v2955 = vsub.f32 %v1899, %v2699
          %v2956 = vsub.f32 %v1900, %v2700
          %v2957 = vsub.f32 %v1901, %v2701
          %v2958 = vsub.f32 %v1902, %v2702
          %v2959 = vsub.f32 %v1903, %v2703
          %v2960 = vsub.f32 %v1904, %v2704
          %v2961 = vsub.f32 %v1905, %v2705
          %v2962 = vsub.f32 %v1906, %v2706
          %v2963 = vsub.f32 %v1907, %v2707
          %v2964 = vsub.f32 %v1908, %v2708
          %v2965 = vsub.f32 %v1909, %v2709
          %v2966 = vsub.f32 %v1910, %v2710
          %v2967 = vsub.f32 %v1911, %v2711
          %v2968 = vsub.f32 %v1912, %v2712
          %v2969 = vsub.f32 %v1913, %v2713
          %v2970 = vsub.f32 %v1914, %v2714
          %v2971 = vsub.f32 %v1915, %v2715
          %v2972 = vsub.f32 %v1916, %v2716
          %v2973 = vsub.f32 %v1917, %v2717
          %v2974 = vsub.f32 %v1918, %v2718
          %v2975 = vsub.f32 %v1919, %v2719
          %v2976 = vsub.f32 %v1920, %v2720
          %v2977 = vsub.f32 %v1921, %v2721
          %v2978 = vsub.f32 %v1922, %v2722
          %v2979 = vsub.f32 %v1923, %v2723
          %v2980 = vsub.f32 %v1924, %v2724
          %v2981 = vsub.f32 %v1925, %v2725
          %v2982 = vsub.f32 %v1926, %v2726
          %v2983 = vsub.f32 %v1927, %v2727
          %v2984 = vsub.f32 %v1928, %v2728
          %v2985 = vsub.f32 %v1929, %v2729
          %v2986 = vsub.f32 %v1930, %v2730
          %v2987 = vsub.f32 %v1931, %v2731
          %v2988 = vsub.f32 %v1932, %v2732
          %v2989 = vsub.f32 %v1933, %v2733
          %v2990 = vsub.f32 %v1934, %v2734
          %v2991 = vsub.f32 %v1935, %v2735
          %v2992 = vsub.f32 %v1936, %v2736
          %v2993 = vsub.f32 %v1937, %v2737
          %v2994 = vsub.f32 %v1938, %v2738
          %v2995 = vsub.f32 %v1939, %v2739
          %v2996 = vsub.f32 %v1940, %v2740
          %v2997 = vsub.f32 %v1941, %v2741
          %v2998 = vsub.f32 %v1942, %v2742
          %v2999 = vsub.f32 %v1943, %v2743
          %v3000 = vsub.f32 %v1944, %v2744
          %v3001 = vsub.f32 %v1945, %v2745
          %v3002 = vsub.f32 %v1946, %v2746
          %v3003 = vsub.f32 %v1947, %v2747
          %v3004 = vsub.f32 %v1948, %v2748
          %v3005 = vsub.f32 %v1949, %v2749
          %v3006 = vsub.f32 %v1950, %v2750
          %v3007 = vsub.f32 %v1951, %v2751
          %v3008 = vsub.f32 %v1952, %v2752
          %v3009 = vsub.f32 %v1953, %v2753
          %v3010 = vsub.f32 %v1954, %v2754
          %v3011 = vsub.f32 %v1955, %v2755
          %v3012 = vsub.f32 %v1956, %v2756
          %v3013 = vsub.f32 %v1957, %v2757
          %v3014 = vsub.f32 %v1958, %v2758
          %v3015 = vsub.f32 %v1959, %v2759
          %v3016 = vsub.f32 %v1960, %v2760
          %v3017 = vsub.f32 %v1961, %v2761
          %v3018 = vsub.f32 %v1962, %v2762
          %v3019 = vsub.f32 %v1963, %v2763
          %v3020 = vsub.f32 %v1964, %v2764
          %v3021 = vsub.f32 %v1965, %v2765
          %v3022 = vsub.f32 %v1966, %v2766
          %v3023 = vsub.f32 %v1967, %v2767
          %v3024 = vsub.f32 %v1968, %v2768
          %v3025 = vsub.f32 %v1969, %v2769
          %v3026 = vsub.f32 %v1970, %v2770
          %v3027 = vsub.f32 %v1971, %v2771
          %v3028 = vsub.f32 %v1972, %v2772
          %v3029 = vsub.f32 %v1973, %v2773
          %v3030 = vsub.f32 %v1974, %v2774
          %v3031 = vsub.f32 %v1975, %v2775
          %v3032 = vsub.f32 %v1976, %v2776
          %v3033 = vsub.f32 %v1977, %v2777
          %v3034 = vsub.f32 %v1978, %v2778
          %v3035 = vsub.f32 %v1979, %v2779
          %v3036 = vsub.f32 %v1980, %v2780
          %v3037 = vsub.f32 %v1981, %v2781
          %v3038 = vsub.f32 %v1982, %v2782
          %v3039 = vsub.f32 %v1983, %v2783
          %v3040 = vsub.f32 %v1984, %v2784
          %v3041 = vsub.f32 %v1985, %v2785
          %v3042 = vsub.f32 %v1986, %v2786
          %v3043 = vsub.f32 %v1987, %v2787
          %v3044 = vsub.f32 %v1988, %v2788
          %v3045 = vsub.f32 %v1989, %v2789
          %v3046 = vsub.f32 %v1990, %v2790
          %v3047 = vsub.f32 %v1991, %v2791
          %v3048 = vsub.f32 %v1992, %v2792
          %v3049 = vsub.f32 %v1993, %v2793
          %v3050 = vsub.f32 %v1994, %v2794
          %v3051 = vsub.f32 %v1995, %v2795
          %v3052 = vsub.f32 %v1996, %v2796
          %v3053 = vsub.f32 %v1997, %v2797
          %v3054 = vsub.f32 %v1998, %v2798
          %v3055 = vsub.f32 %v1999, %v2799
          %v3056 = vsub.f32 %v2000, %v2800
          %v3057 = vsub.f32 %v2001, %v2801
          %v3058 = vsub.f32 %v2002, %v2802
          %v3059 = vsub.f32 %v2003, %v2803
          %v3060 = vsub.f32 %v2004, %v2804
          %v3061 = vsub.f32 %v2005, %v2805
          %v3062 = vsub.f32 %v2006, %v2806
          %v3063 = vsub.f32 %v2007, %v2807
          %v3064 = vsub.f32 %v2008, %v2808
          %v3065 = vsub.f32 %v2009, %v2809
          %v3066 = vsub.f32 %v2010, %v2810
          %v3067 = vsub.f32 %v2011, %v2811
          %v3068 = vsub.f32 %v2012, %v2812
          %v3069 = vsub.f32 %v2013, %v2813
          %v3070 = vsub.f32 %v2014, %v2814
          %v3071 = vsub.f32 %v2015, %v2815
          %v3074 = vcombine.high %v829, %v829
          %v3075 = vcombine.high %v830, %v830
          %3078 = vmatprep.subr.mxu0 %v2817
          %3079 = vmatpush1.msra.mxu0 %v2816
          %3080 = vmatprep.subr.mxu0 %v2821
          %3081 = vmatpush1.msra.mxu0 %v2820
          %3082 = vmatprep.subr.mxu0 %v2825
          %3083 = vmatpush1.msra.mxu0 %v2824
          %3084 = vmatprep.subr.mxu0 %v2829
          %3085 = vmatpush1.msra.mxu0 %v2828
          %3086 = vmatprep.subr.mxu0 %v2833
          %3087 = vmatpush1.msra.mxu0 %v2832
          %3088 = vmatprep.subr.mxu0 %v2837
          %3089 = vmatpush1.msra.mxu0 %v2836
          %3090 = vmatprep.subr.mxu0 %v2841
          %3091 = vmatpush1.msra.mxu0 %v2840
          %3092 = vmatprep.subr.mxu0 %v2845
          %3093 = vmatpush1.msra.mxu0 %v2844
          %3094 = vmatprep.subr.mxu0 %v2849
          %3095 = vmatpush1.msra.mxu0 %v2848
          %3096 = vmatprep.subr.mxu0 %v2853
          %3097 = vmatpush1.msra.mxu0 %v2852
          %3098 = vmatprep.subr.mxu0 %v2857
          %3099 = vmatpush1.msra.mxu0 %v2856
          %3100 = vmatprep.subr.mxu0 %v2861
          %3101 = vmatpush1.msra.mxu0 %v2860
          %3102 = vmatprep.subr.mxu0 %v2865
          %3103 = vmatpush1.msra.mxu0 %v2864
          %3104 = vmatprep.subr.mxu0 %v2869
          %3105 = vmatpush1.msra.mxu0 %v2868
          %3106 = vmatprep.subr.mxu0 %v2873
          %3107 = vmatpush1.msra.mxu0 %v2872
          %3108 = vmatprep.subr.mxu0 %v2877
          %3109 = vmatpush1.msra.mxu0 %v2876
          %3110 = vmatprep.subr.mxu0 %v2881
          %3111 = vmatpush1.msra.mxu0 %v2880
          %3112 = vmatprep.subr.mxu0 %v2885
          %3113 = vmatpush1.msra.mxu0 %v2884
          %3114 = vmatprep.subr.mxu0 %v2889
          %3115 = vmatpush1.msra.mxu0 %v2888
          %3116 = vmatprep.subr.mxu0 %v2893
          %3117 = vmatpush1.msra.mxu0 %v2892
          %3118 = vmatprep.subr.mxu0 %v2897
          %3119 = vmatpush1.msra.mxu0 %v2896
          %3120 = vmatprep.subr.mxu0 %v2901
          %3121 = vmatpush1.msra.mxu0 %v2900
          %3122 = vmatprep.subr.mxu0 %v2905
          %3123 = vmatpush1.msra.mxu0 %v2904
          %3124 = vmatprep.subr.mxu0 %v2909
          %3125 = vmatpush1.msra.mxu0 %v2908
          %3126 = vmatprep.subr.mxu0 %v2913
          %3127 = vmatpush1.msra.mxu0 %v2912
          %3128 = vmatprep.subr.mxu0 %v2917
          %3129 = vmatpush1.msra.mxu0 %v2916
          %3130 = vmatprep.subr.mxu0 %v2921
          %3131 = vmatpush1.msra.mxu0 %v2920
          %3132 = vmatprep.subr.mxu0 %v2925
          %3133 = vmatpush1.msra.mxu0 %v2924
          %3134 = vmatprep.subr.mxu0 %v2929
          %3135 = vmatpush1.msra.mxu0 %v2928
          %3136 = vmatprep.subr.mxu0 %v2933
          %3137 = vmatpush1.msra.mxu0 %v2932
          %3138 = vmatprep.subr.mxu0 %v2937
          %3139 = vmatpush1.msra.mxu0 %v2936
          %3140 = vmatprep.subr.mxu0 %v2941
          %3141 = vmatpush1.msra.mxu0 %v2940
          %3142 = vmatprep.mubr.f32.mxu0 %v3074
          %3143 = vmatmul.mubr.f32.gmra.mrb[0].mxu0 %v829
          %v3144 = vpop.f32.mrb[0].mxu0
          %v3145 = vadd.f32 0.0, %v3144
          %v3146 = vpop.f32.mrb[0].mxu0
          %v3147 = vadd.f32 0.0, %v3146
          %3148 = vdwg.mxu0
          %3149 = vmatprep.subr.mxu0 %v2945
          %3150 = vmatpush1.msra.mxu0 %v2944
          %3151 = vmatprep.subr.mxu0 %v2949
          %3152 = vmatpush1.msra.mxu0 %v2948
          %3153 = vmatprep.subr.mxu0 %v2953
          %3154 = vmatpush1.msra.mxu0 %v2952
          %3155 = vmatprep.subr.mxu0 %v2957
          %3156 = vmatpush1.msra.mxu0 %v2956
          %3157 = vmatprep.subr.mxu0 %v2961
          %3158 = vmatpush1.msra.mxu0 %v2960
          %3159 = vmatprep.subr.mxu0 %v2965
          %3160 = vmatpush1.msra.mxu0 %v2964
          %3161 = vmatprep.subr.mxu0 %v2969
          %3162 = vmatpush1.msra.mxu0 %v2968
          %3163 = vmatprep.subr.mxu0 %v2973
          %3164 = vmatpush1.msra.mxu0 %v2972
          %3165 = vmatprep.subr.mxu0 %v2977
          %3166 = vmatpush1.msra.mxu0 %v2976
          %3167 = vmatprep.subr.mxu0 %v2981
          %3168 = vmatpush1.msra.mxu0 %v2980
          %3169 = vmatprep.subr.mxu0 %v2985
          %3170 = vmatpush1.msra.mxu0 %v2984
          %3171 = vmatprep.subr.mxu0 %v2989
          %3172 = vmatpush1.msra.mxu0 %v2988
          %3173 = vmatprep.subr.mxu0 %v2993
          %3174 = vmatpush1.msra.mxu0 %v2992
          %3175 = vmatprep.subr.mxu0 %v2997
          %3176 = vmatpush1.msra.mxu0 %v2996
          %3177 = vmatprep.subr.mxu0 %v3001
          %3178 = vmatpush1.msra.mxu0 %v3000
          %3179 = vmatprep.subr.mxu0 %v3005
          %3180 = vmatpush1.msra.mxu0 %v3004
          %3181 = vmatprep.subr.mxu0 %v3009
          %3182 = vmatpush1.msra.mxu0 %v3008
          %3183 = vmatprep.subr.mxu0 %v3013
          %3184 = vmatpush1.msra.mxu0 %v3012
          %3185 = vmatprep.subr.mxu0 %v3017
          %3186 = vmatpush1.msra.mxu0 %v3016
          %3187 = vmatprep.subr.mxu0 %v3021
          %3188 = vmatpush1.msra.mxu0 %v3020
          %3189 = vmatprep.subr.mxu0 %v3025
          %3190 = vmatpush1.msra.mxu0 %v3024
          %3191 = vmatprep.subr.mxu0 %v3029
          %3192 = vmatpush1.msra.mxu0 %v3028
          %3193 = vmatprep.subr.mxu0 %v3033
          %3194 = vmatpush1.msra.mxu0 %v3032
          %3195 = vmatprep.subr.mxu0 %v3037
          %3196 = vmatpush1.msra.mxu0 %v3036
          %3197 = vmatprep.subr.mxu0 %v3041
          %3198 = vmatpush1.msra.mxu0 %v3040
          %3199 = vmatprep.subr.mxu0 %v3045
          %3200 = vmatpush1.msra.mxu0 %v3044
          %3201 = vmatprep.subr.mxu0 %v3049
          %3202 = vmatpush1.msra.mxu0 %v3048
          %3203 = vmatprep.subr.mxu0 %v3053
          %3204 = vmatpush1.msra.mxu0 %v3052
          %3205 = vmatprep.subr.mxu0 %v3057
          %3206 = vmatpush1.msra.mxu0 %v3056
          %3207 = vmatprep.subr.mxu0 %v3061
          %3208 = vmatpush1.msra.mxu0 %v3060
          %3209 = vmatprep.subr.mxu0 %v3065
          %3210 = vmatpush1.msra.mxu0 %v3064
          %3211 = vmatprep.subr.mxu0 %v3069
          %3212 = vmatpush1.msra.mxu0 %v3068
          %3213 = vmatprep.mubr.f32.mxu0 %v3075
          %3214 = vmatmul.mubr.f32.gmra.mrb[0].mxu0 %v830
          %v3215 = vpop.f32.mrb[0].mxu0
          %v3216 = vadd.f32 %v3145, %v3215
          %v3217 = vpop.f32.mrb[0].mxu0
          %v3218 = vadd.f32 %v3147, %v3217
          %3219 = vdwg.mxu0
          %3220 = vmatprep.subr.mxu0 %v2819
          %3221 = vmatpush1.msra.mxu0 %v2818
          %3222 = vmatprep.subr.mxu0 %v2823
          %3223 = vmatpush1.msra.mxu0 %v2822
          %3224 = vmatprep.subr.mxu0 %v2827
          %3225 = vmatpush1.msra.mxu0 %v2826
          %3226 = vmatprep.subr.mxu0 %v2831
          %3227 = vmatpush1.msra.mxu0 %v2830
          %3228 = vmatprep.subr.mxu0 %v2835
          %3229 = vmatpush1.msra.mxu0 %v2834
          %3230 = vmatprep.subr.mxu0 %v2839
          %3231 = vmatpush1.msra.mxu0 %v2838
          %3232 = vmatprep.subr.mxu0 %v2843
          %3233 = vmatpush1.msra.mxu0 %v2842
          %3234 = vmatprep.subr.mxu0 %v2847
          %3235 = vmatpush1.msra.mxu0 %v2846
          %3236 = vmatprep.subr.mxu0 %v2851
          %3237 = vmatpush1.msra.mxu0 %v2850
          %3238 = vmatprep.subr.mxu0 %v2855
          %3239 = vmatpush1.msra.mxu0 %v2854
          %3240 = vmatprep.subr.mxu0 %v2859
          %3241 = vmatpush1.msra.mxu0 %v2858
          %3242 = vmatprep.subr.mxu0 %v2863
          %3243 = vmatpush1.msra.mxu0 %v2862
          %3244 = vmatprep.subr.mxu0 %v2867
          %3245 = vmatpush1.msra.mxu0 %v2866
          %3246 = vmatprep.subr.mxu0 %v2871
          %3247 = vmatpush1.msra.mxu0 %v2870
          %3248 = vmatprep.subr.mxu0 %v2875
          %3249 = vmatpush1.msra.mxu0 %v2874
          %3250 = vmatprep.subr.mxu0 %v2879
          %3251 = vmatpush1.msra.mxu0 %v2878
          %3252 = vmatprep.subr.mxu0 %v2883
          %3253 = vmatpush1.msra.mxu0 %v2882
          %3254 = vmatprep.subr.mxu0 %v2887
          %3255 = vmatpush1.msra.mxu0 %v2886
          %3256 = vmatprep.subr.mxu0 %v2891
          %3257 = vmatpush1.msra.mxu0 %v2890
          %3258 = vmatprep.subr.mxu0 %v2895
          %3259 = vmatpush1.msra.mxu0 %v2894
          %3260 = vmatprep.subr.mxu0 %v2899
          %3261 = vmatpush1.msra.mxu0 %v2898
          %3262 = vmatprep.subr.mxu0 %v2903
          %3263 = vmatpush1.msra.mxu0 %v2902
          %3264 = vmatprep.subr.mxu0 %v2907
          %3265 = vmatpush1.msra.mxu0 %v2906
          %3266 = vmatprep.subr.mxu0 %v2911
          %3267 = vmatpush1.msra.mxu0 %v2910
          %3268 = vmatprep.subr.mxu0 %v2915
          %3269 = vmatpush1.msra.mxu0 %v2914
          %3270 = vmatprep.subr.mxu0 %v2919
          %3271 = vmatpush1.msra.mxu0 %v2918
          %3272 = vmatprep.subr.mxu0 %v2923
          %3273 = vmatpush1.msra.mxu0 %v2922
          %3274 = vmatprep.subr.mxu0 %v2927
          %3275 = vmatpush1.msra.mxu0 %v2926
          %3276 = vmatprep.subr.mxu0 %v2931
          %3277 = vmatpush1.msra.mxu0 %v2930
          %3278 = vmatprep.subr.mxu0 %v2935
          %3279 = vmatpush1.msra.mxu0 %v2934
          %3280 = vmatprep.subr.mxu0 %v2939
          %3281 = vmatpush1.msra.mxu0 %v2938
          %3282 = vmatprep.subr.mxu0 %v2943
          %3283 = vmatpush1.msra.mxu0 %v2942
          %3284 = vmatprep.mubr.f32.mxu0 %v3074
          %3285 = vmatmul.mubr.f32.gmra.mrb[0].mxu0 %v829
          %v3286 = vpop.f32.mrb[0].mxu0
          %v3287 = vadd.f32 0.0, %v3286
          %v3288 = vpop.f32.mrb[0].mxu0
          %v3289 = vadd.f32 0.0, %v3288
          %3290 = vdwg.mxu0
          %3291 = vmatprep.subr.mxu0 %v2947
          %3292 = vmatpush1.msra.mxu0 %v2946
          %3293 = vmatprep.subr.mxu0 %v2951
          %3294 = vmatpush1.msra.mxu0 %v2950
          %3295 = vmatprep.subr.mxu0 %v2955
          %3296 = vmatpush1.msra.mxu0 %v2954
          %3297 = vmatprep.subr.mxu0 %v2959
          %3298 = vmatpush1.msra.mxu0 %v2958
          %3299 = vmatprep.subr.mxu0 %v2963
          %3300 = vmatpush1.msra.mxu0 %v2962
          %3301 = vmatprep.subr.mxu0 %v2967
          %3302 = vmatpush1.msra.mxu0 %v2966
          %3303 = vmatprep.subr.mxu0 %v2971
          %3304 = vmatpush1.msra.mxu0 %v2970
          %3305 = vmatprep.subr.mxu0 %v2975
          %3306 = vmatpush1.msra.mxu0 %v2974
          %3307 = vmatprep.subr.mxu0 %v2979
          %3308 = vmatpush1.msra.mxu0 %v2978
          %3309 = vmatprep.subr.mxu0 %v2983
          %3310 = vmatpush1.msra.mxu0 %v2982
          %3311 = vmatprep.subr.mxu0 %v2987
          %3312 = vmatpush1.msra.mxu0 %v2986
          %3313 = vmatprep.subr.mxu0 %v2991
          %3314 = vmatpush1.msra.mxu0 %v2990
          %3315 = vmatprep.subr.mxu0 %v2995
          %3316 = vmatpush1.msra.mxu0 %v2994
          %3317 = vmatprep.subr.mxu0 %v2999
          %3318 = vmatpush1.msra.mxu0 %v2998
          %3319 = vmatprep.subr.mxu0 %v3003
          %3320 = vmatpush1.msra.mxu0 %v3002
          %3321 = vmatprep.subr.mxu0 %v3007
          %3322 = vmatpush1.msra.mxu0 %v3006
          %3323 = vmatprep.subr.mxu0 %v3011
          %3324 = vmatpush1.msra.mxu0 %v3010
          %3325 = vmatprep.subr.mxu0 %v3015
          %3326 = vmatpush1.msra.mxu0 %v3014
          %3327 = vmatprep.subr.mxu0 %v3019
          %3328 = vmatpush1.msra.mxu0 %v3018
          %3329 = vmatprep.subr.mxu0 %v3023
          %3330 = vmatpush1.msra.mxu0 %v3022
          %3331 = vmatprep.subr.mxu0 %v3027
          %3332 = vmatpush1.msra.mxu0 %v3026
          %3333 = vmatprep.subr.mxu0 %v3031
          %3334 = vmatpush1.msra.mxu0 %v3030
          %3335 = vmatprep.subr.mxu0 %v3035
          %3336 = vmatpush1.msra.mxu0 %v3034
          %3337 = vmatprep.subr.mxu0 %v3039
          %3338 = vmatpush1.msra.mxu0 %v3038
          %3339 = vmatprep.subr.mxu0 %v3043
          %3340 = vmatpush1.msra.mxu0 %v3042
          %3341 = vmatprep.subr.mxu0 %v3047
          %3342 = vmatpush1.msra.mxu0 %v3046
          %3343 = vmatprep.subr.mxu0 %v3051
          %3344 = vmatpush1.msra.mxu0 %v3050
          %3345 = vmatprep.subr.mxu0 %v3055
          %3346 = vmatpush1.msra.mxu0 %v3054
          %3347 = vmatprep.subr.mxu0 %v3059
          %3348 = vmatpush1.msra.mxu0 %v3058
          %3349 = vmatprep.subr.mxu0 %v3063
          %3350 = vmatpush1.msra.mxu0 %v3062
          %3351 = vmatprep.subr.mxu0 %v3067
          %3352 = vmatpush1.msra.mxu0 %v3066
          %3353 = vmatprep.subr.mxu0 %v3071
          %3354 = vmatpush1.msra.mxu0 %v3070
          %3355 = vmatprep.mubr.f32.mxu0 %v3075
          %3356 = vmatmul.mubr.f32.gmra.mrb[0].mxu0 %v830
          %v3357 = vpop.f32.mrb[0].mxu0
          %v3358 = vadd.f32 %v3287, %v3357
          %v3359 = vpop.f32.mrb[0].mxu0
          %v3360 = vadd.f32 %v3289, %v3359
          %3361 = vdwg.mxu0
          %v3362 = vmul.f32 %v3216, %v3216
          %v3363 = vmul.f32 %v3218, %v3218
          %v3364 = vmul.f32 %v3358, %v3358
          %v3365 = vmul.f32 %v3360, %v3360
          %v3370 = vrot.slane %v3362, 1
          %v3371 = vrot.slane %v3363, 1
          %v3372 = vrot.slane %v3364, 1
          %v3373 = vrot.slane %v3365, 1
          %v3378 = vadd.f32 %v3362, %v3370
          %v3379 = vadd.f32 %v3363, %v3371
          %v3380 = vadd.f32 %v3364, %v3372
          %v3381 = vadd.f32 %v3365, %v3373
          %v3382 = vrot.slane %v3362, 2
          %v3383 = vrot.slane %v3363, 2
          %v3384 = vrot.slane %v3364, 2
          %v3385 = vrot.slane %v3365, 2
          %v3390 = vadd.f32 %v3378, %v3382
          %v3391 = vadd.f32 %v3379, %v3383
          %v3392 = vadd.f32 %v3380, %v3384
          %v3393 = vadd.f32 %v3381, %v3385
          %v3394 = vrsqrt.pop %v3390
          %v3395 = vmul.f32 %v3390, %v3394
          %vm3396 = vcmp.eq.f32.partialorder %v3390, inf
          %v3397 = vsel %vm3396, %v3390, %v3395
          %vm3398 = vcmp.eq.f32.partialorder %v3390, 0.0
          %v3399 = vand.u32 %v3390, 2147483648
          %v3400 = vsel %vm3398, %v3399, %v3397
          %v3401 = vrsqrt.pop %v3391
          %v3402 = vmul.f32 %v3391, %v3401
          %vm3403 = vcmp.eq.f32.partialorder %v3391, inf
          %v3404 = vsel %vm3403, %v3391, %v3402
          %vm3405 = vcmp.eq.f32.partialorder %v3391, 0.0
          %v3406 = vand.u32 %v3391, 2147483648
          %v3407 = vsel %vm3405, %v3406, %v3404
          %v3408 = vrsqrt.pop %v3392
          %v3409 = vmul.f32 %v3392, %v3408
          %vm3410 = vcmp.eq.f32.partialorder %v3392, inf
          %v3411 = vsel %vm3410, %v3392, %v3409
          %vm3412 = vcmp.eq.f32.partialorder %v3392, 0.0
          %v3413 = vand.u32 %v3392, 2147483648
          %v3414 = vsel %vm3412, %v3413, %v3411
          %v3415 = vrsqrt.pop %v3393
          %v3416 = vmul.f32 %v3393, %v3415
          %vm3417 = vcmp.eq.f32.partialorder %v3393, inf
          %v3418 = vsel %vm3417, %v3393, %v3416
          %vm3419 = vcmp.eq.f32.partialorder %v3393, 0.0
          %v3420 = vand.u32 %v3393, 2147483648
          %v3421 = vsel %vm3419, %v3420, %v3418
          %v3422 = vlaneseq
          %v3423 = vshrl.u32 %v3422, 7
          %v3424 = vsub.s32 0, %v3423
          %v3425 = vrot.slane %v3400, %v3424
          %v3426 = vlaneseq
          %v3427 = vshrl.u32 %v3426, 7
          %v3428 = vsub.s32 0, %v3427
          %v3429 = vrot.slane %v3407, %v3428
          %v3430 = vlaneseq
          %v3431 = vshrl.u32 %v3430, 7
          %v3432 = vsub.s32 0, %v3431
          %v3433 = vrot.slane %v3414, %v3432
          %v3434 = vlaneseq
          %v3435 = vshrl.u32 %v3434, 7
          %v3436 = vsub.s32 0, %v3435
          %v3437 = vrot.slane %v3421, %v3436
          %v3438 = vsub.f32 %v3425, %v833
          %v3439 = vsub.f32 %v3429, %v833
          %v3440 = vsub.f32 %v3433, %v833
          %v3441 = vsub.f32 %v3437, %v833
          %v3442 = vsub.f32 %v3425, %v834
          %v3443 = vsub.f32 %v3429, %v834
          %v3444 = vsub.f32 %v3433, %v834
          %v3445 = vsub.f32 %v3437, %v834
          %v3446 = vmul.f32 %v3438, -4.5
          %v3447 = vmul.f32 %v3439, -4.5
          %v3448 = vmul.f32 %v3440, -4.5
          %v3449 = vmul.f32 %v3441, -4.5
          %v3450 = vmul.f32 %v3442, -4.5
          %v3451 = vmul.f32 %v3443, -4.5
          %v3452 = vmul.f32 %v3444, -4.5
          %v3453 = vmul.f32 %v3445, -4.5
          %v3454 = vmul.f32 %v3446, %v3438
          %v3455 = vmul.f32 %v3447, %v3439
          %v3456 = vmul.f32 %v3448, %v3440
          %v3457 = vmul.f32 %v3449, %v3441
          %v3458 = vmul.f32 %v3450, %v3442
          %v3459 = vmul.f32 %v3451, %v3443
          %v3460 = vmul.f32 %v3452, %v3444
          %v3461 = vmul.f32 %v3453, %v3445
          %v3462 = vmul.f32 %v3454, 1.442695
          %v3463 = vpow.pop %v3462
          %v3464 = vmul.f32 %v3455, 1.442695
          %v3465 = vpow.pop %v3464
          %v3466 = vmul.f32 %v3456, 1.442695
          %v3467 = vpow.pop %v3466
          %v3468 = vmul.f32 %v3457, 1.442695
          %v3469 = vpow.pop %v3468
          %v3470 = vmul.f32 %v3458, 1.442695
          %v3471 = vpow.pop %v3470
          %v3472 = vmul.f32 %v3459, 1.442695
          %v3473 = vpow.pop %v3472
          %v3474 = vmul.f32 %v3460, 1.442695
          %v3475 = vpow.pop %v3474
          %v3476 = vmul.f32 %v3461, 1.442695
          %v3477 = vpow.pop %v3476
          %v3478 = vadd.f32 %v3463, %v1100
          %v3479 = vadd.f32 %v3465, %v1102
          %v3480 = vadd.f32 %v3467, %v1143
          %v3481 = vadd.f32 %v3469, %v1145
          %v3482 = vadd.f32 %v3471, %v1104
          %v3483 = vadd.f32 %v3473, %v1106
          %v3484 = vadd.f32 %v3475, %v1147
          %v3485 = vadd.f32 %v3477, %v1149
          %s3486 = smul.u32 %s836, 8
          %s3487 = smul.addr %s3486, 8
          %s3488 = scalar_lea.vmem %s327, %s3487 [#allocation4]
          %3489 = vst [vmem:[%s3488] sm:$0xff] %v3478
          %3490 = vst [vmem:[%s3488 + $0x8] sm:$0xff] %v3479
          %3491 = vst [vmem:[%s3488 + $0x10] sm:$0xff] %v3480
          %3492 = vst [vmem:[%s3488 + $0x18] sm:$0xff] %v3481
          %3493 = vst [vmem:[%s3488 + $0x20] sm:$0xff] %v3482
          %3494 = vst [vmem:[%s3488 + $0x28] sm:$0xff] %v3483
          %3495 = vst [vmem:[%s3488 + $0x30] sm:$0xff] %v3484
          %3496 = vst [vmem:[%s3488 + $0x38] sm:$0xff] %v3485
        $region49: #{tpu_custom_call.1} parent=43 // loop_footer
          %s840 = sadd.s32 1, %s836
        $region50: #{tpu_custom_call.1} parent=43 // loop_footer_branch
          %835 = sbr.rel target = $region46
        $region51: #{tpu_custom_call.1} parent=43 // loop_exit
          _
        %s3497 = sand.u32 %s179, 1
        %s3498 = scalar_lea.sflag [#allocation3], %s3497
        %s3499 = sand.u32 %s179, 1
        %s3500 = smul.addr %s3499, 128
        %s3501 = scalar_lea.vmem [#allocation2], %s3500
        %s3502 = sand.u32 %s205, 1
        %s3503 = scalar_lea.sflag [#allocation5], %s3502
        %s3504 = sand.u32 %s205, 1
        %s3505 = smul.addr %s3504, 128
        %s3506 = scalar_lea.vmem [#allocation4], %s3505
        // Predicated region
        $region52: #{tpu_custom_call.1} parent=43 // pred_check
          %p3507 = pneg %p189
        $region53: #{tpu_custom_call.1} parent=43 // pred_check_branch
          %3509 = sbr.rel (%p3507) target = $region55
        $region54: #{tpu_custom_call.1} parent=43 // pred_region
          %s3511 = ssub.s32 2048, 2048
          %3512 = vsyncadd %s3498, %s3511
          %s3513 = smul.addr %s25, 16
          %s3514 = smul.addr %s3513, 128
          %s3515 = scalar_lea.hbm %s6, %s3514
          %s3516 = sshll.u32 %s3501, 4
          %s3517 = int_to_ptr.vmem [resolvable:$true] %s3516
          %3522 = dma.vmem_to_hbm [thread:$0]  %s3517, 2048, %s3515, %s3498, 512, 512, 32
        $region55: #{tpu_custom_call.1} parent=43 // pred_fallthru
          _
        // Predicated region
        $region56: #{tpu_custom_call.1} parent=43 // pred_check
          %p3523 = pneg %p215
        $region57: #{tpu_custom_call.1} parent=43 // pred_check_branch
          %3525 = sbr.rel (%p3523) target = $region59
        $region58: #{tpu_custom_call.1} parent=43 // pred_region
          %s3527 = ssub.s32 2048, 2048
          %3528 = vsyncadd %s3503, %s3527
          %s3529 = smul.addr %s25, 16
          %s3530 = smul.addr %s3529, 128
          %s3531 = scalar_lea.hbm %s7, %s3530
          %s3532 = sshll.u32 %s3506, 4
          %s3533 = int_to_ptr.vmem [resolvable:$true] %s3532
          %3538 = dma.vmem_to_hbm [thread:$0]  %s3533, 2048, %s3531, %s3503, 512, 512, 32
        $region59: #{tpu_custom_call.1} parent=43 // pred_fallthru
          _
      $region44: #{tpu_custom_call.1} parent=5 // pred_fallthru
        _
      %p3539 = scmp.le.s32.totalorder 2, %s20
      // Predicated region
      $region60: #{tpu_custom_call.1} parent=5 // pred_check
        %p3540 = pneg %p3539
      $region61: #{tpu_custom_call.1} parent=5 // pred_check_branch
        %3542 = sbr.rel (%p3540) target = $region63
      $region62: #{tpu_custom_call.1} parent=5 // pred_region
        %s3543 = ssub.s32 %s20, 2
        // Predicated region
        $region64: #{tpu_custom_call.1} parent=62 // pred_check
          %p3544 = pneg %p195
        $region65: #{tpu_custom_call.1} parent=62 // pred_check_branch
          %3546 = sbr.rel (%p3544) target = $region67
        $region66: #{tpu_custom_call.1} parent=62 // pred_region
          %s3547 = sand.u32 %s180, 1
          %s3548 = scalar_lea.sflag [#allocation3], %s3547
          %s3549 = sand.u32 %s180, 1
          %s3550 = smul.addr %s3549, 128
          %s3551 = scalar_lea.vmem [#allocation2], %s3550
          %3552 = dma.done %s3548, 2048
        $region67: #{tpu_custom_call.1} parent=62 // pred_fallthru
          _
        // Predicated region
        $region68: #{tpu_custom_call.1} parent=62 // pred_check
          %p3553 = pneg %p221
        $region69: #{tpu_custom_call.1} parent=62 // pred_check_branch
          %3555 = sbr.rel (%p3553) target = $region71
        $region70: #{tpu_custom_call.1} parent=62 // pred_region
          %s3556 = sand.u32 %s206, 1
          %s3557 = scalar_lea.sflag [#allocation5], %s3556
          %s3558 = sand.u32 %s206, 1
          %s3559 = smul.addr %s3558, 128
          %s3560 = scalar_lea.vmem [#allocation4], %s3559
          %3561 = dma.done %s3557, 2048
        $region71: #{tpu_custom_call.1} parent=62 // pred_fallthru
          _
      $region63: #{tpu_custom_call.1} parent=5 // pred_fallthru
        _
    $region6: #{tpu_custom_call.1} parent=1 // loop_footer
      %s24 = sadd.s32 1, %s20
    $region7: #{tpu_custom_call.1} parent=1 // loop_footer_branch
      %19 = sbr.rel target = $region3
    $region8: #{tpu_custom_call.1} parent=1 // loop_exit
      _
    %3562 = vsyncpa [#allocation3], 1
    %s3563 = scalar_lea.sflag [#allocation3], 1
    %3564 = vsyncpa %s3563, 1
    %3565 = vsyncpa [#allocation5], 1
    %s3566 = scalar_lea.sflag [#allocation5], 1
    %3567 = vsyncpa %s3566, 1

</llo_original>
